<compile_context>
chip_gen: v5e
topology: v5e:2x2
jax: 0.10.0
libtpu: 0.0.40
codegen_flags: <defaults>
</compile_context>

<pallas_src>
import functools

import numpy as np

import jax
import jax.numpy as jnp
from jax.experimental import pallas as pl
from jax.experimental.pallas import tpu as pltpu


# ----------------------------------------------------------------------------
# Pallas kernel: the whole Discr forward (4 matmuls + folded-BN bias + acts).
# ----------------------------------------------------------------------------
def _discr_fused_kernel(x_ref, a1_ref, b1_ref, a2_ref, b2_ref, a3_ref, b3_ref,
                        a4_ref, o_ref, *, neg_slope):
    def leaky(y):                                       # LeakyReLU(0.2), f32 epilogue
        return jnp.where(y >= 0.0, y, neg_slope * y)

    # conv1 + BN1 + LeakyReLU      [bm, 1089] @ [1089, 1024]
    h = jnp.dot(x_ref[...], a1_ref[...], preferred_element_type=jnp.float32)
    h = leaky(h + b1_ref[...])
    # conv2 + BN2 + LeakyReLU      [bm, 1024] @ [1024, 256]
    h = jnp.dot(h, a2_ref[...], preferred_element_type=jnp.float32)
    h = leaky(h + b2_ref[...])
    # conv3 + BN3 + LeakyReLU      [bm, 256] @ [256, 64]
    h = jnp.dot(h, a3_ref[...], preferred_element_type=jnp.float32)
    h = leaky(h + b3_ref[...])
    # conv4 + Sigmoid              [bm, 64] @ [64, 1]
    y = jnp.dot(h, a4_ref[...], preferred_element_type=jnp.float32)
    o_ref[...] = pl.reciprocal(1.0 + jnp.exp(-y), approx=False)   # exact sigmoid


# ----------------------------------------------------------------------------
# One-time parameter folding: Conv2d(bias=False) [+ eval-mode BN] -> dense affine
# ----------------------------------------------------------------------------
def _conv_bn_to_dense(w, scale, shift, in_hw, stride, pad):
    """Return A: [C_in*H*W, C_out*OH*OW] (for `x @ A`), b: [1, C_out*OH*OW], (OH, OW)."""
    w = np.asarray(w, np.float32)
    scale = np.asarray(scale, np.float32)
    shift = np.asarray(shift, np.float32)
    oc, ic, kh, kw = w.shape
    h, wd = in_hw
    oh = (h + 2 * pad - kh) // stride + 1
    ow = (wd + 2 * pad - kw) // stride + 1
    a = np.zeros((oc, oh, ow, ic, h, wd), np.float32)
    for oy in range(oh):
        for ky in range(kh):
            iy = stride * oy + ky - pad
            if iy < 0 or iy >= h:
                continue
            for ox in range(ow):
                for kx in range(kw):
                    ix = stride * ox + kx - pad
                    if ix < 0 or ix >= wd:
                        continue
                    a[:, oy, ox, :, iy, ix] = w[:, :, ky, kx]
    a *= scale[:, None, None, None, None, None]          # fold BN scale into weights
    a = a.reshape(oc * oh * ow, ic * h * wd).T            # [D_in, D_out]
    b = np.ascontiguousarray(
        np.broadcast_to(shift[:, None, None], (oc, oh, ow))).reshape(1, -1)
    return a, b, (oh, ow)


def fold_params(params, dtype=jnp.float32):
    """Fold conv weights + eval-mode BN into dense matmul operands (f32) + f32 biases."""
    a1, b1, hw = _conv_bn_to_dense(params["w1"], params["bn1_scale"],
                                   params["bn1_shift"], (33, 33), 2, 1)
    a2, b2, hw = _conv_bn_to_dense(params["w2"], params["bn2_scale"],
                                   params["bn2_shift"], hw, 2, 1)
    a3, b3, hw = _conv_bn_to_dense(params["w3"], params["bn3_scale"],
                                   params["bn3_shift"], hw, 2, 1)
    a4, _, hw = _conv_bn_to_dense(params["w4"], np.ones((1,), np.float32),
                                  np.zeros((1,), np.float32), hw, 1, 0)
    assert hw == (1, 1)
    return {
        "a1": jnp.asarray(a1, dtype), "b1": jnp.asarray(b1, jnp.float32),
        "a2": jnp.asarray(a2, dtype), "b2": jnp.asarray(b2, jnp.float32),
        "a3": jnp.asarray(a3, dtype), "b3": jnp.asarray(b3, jnp.float32),
        "a4": jnp.asarray(a4, dtype),
    }


# ----------------------------------------------------------------------------
# Forward pass (single pallas_call)
# ----------------------------------------------------------------------------
def discr_forward(x, folded, *, block_m=256):
    """x: [33*33, N]  (same contract as Discr.forward's `input`). Returns [N, 1]."""
    a1, b1 = folded["a1"], folded["b1"]
    a2, b2 = folded["a2"], folded["b2"]
    a3, b3 = folded["a3"], folded["b3"]
    a4 = folded["a4"]

    # transpose(input, 0, 1) -> reshape [-1, 33, 33] -> flatten (c=1, y, x)
    x0 = x.T.astype(a1.dtype)                      # [N, 1089]
    m, d_in = x0.shape
    bm = m if m <= block_m else block_m            # M tile (VMEM / megacore safe)
    grid = (pl.cdiv(m, bm),)

    def full_spec(arr):                            # whole operand resident in VMEM
        return pl.BlockSpec(arr.shape, lambda i: (0, 0))

    operands = (x0, a1, b1, a2, b2, a3, b3, a4)
    flops = 2 * m * sum(int(a.shape[0]) * int(a.shape[1]) for a in (a1, a2, a3, a4))
    bytes_accessed = sum(int(v.size) * v.dtype.itemsize for v in operands) + m * 4

    out = pl.pallas_call(
        functools.partial(_discr_fused_kernel, neg_slope=0.2),
        out_shape=jax.ShapeDtypeStruct((m, 1), jnp.float32),
        grid=grid,
        in_specs=[
            pl.BlockSpec((bm, d_in), lambda i: (i, 0)),
            full_spec(a1), full_spec(b1),
            full_spec(a2), full_spec(b2),
            full_spec(a3), full_spec(b3),
            full_spec(a4),
        ],
        out_specs=pl.BlockSpec((bm, 1), lambda i: (i, 0)),
        compiler_params=pltpu.CompilerParams(
            dimension_semantics=("parallel",),
            vmem_limit_bytes=64 << 20,
        ),
        cost_estimate=pl.CostEstimate(flops=flops, transcendentals=m,
                                      bytes_accessed=bytes_accessed),
    )(*operands)
    return out                                     # == outputs.view(-1, 1)


# ----------------------------------------------------------------------------
# Parameters + pure-JAX reference (for a correctness sanity check)
# ----------------------------------------------------------------------------
def make_params(key):
    """Random conv weights + eval-mode BN statistics (stand-in for trained params)."""
    eps = 1e-5
    ks = jax.random.split(key, 16)
    p = {}
    p["w1"] = 0.1 * jax.random.normal(ks[0], (4, 1, 4, 4), jnp.float32)
    p["w2"] = 0.1 * jax.random.normal(ks[1], (4, 4, 4, 4), jnp.float32)
    p["w3"] = 0.1 * jax.random.normal(ks[2], (4, 4, 4, 4), jnp.float32)
    p["w4"] = 0.1 * jax.random.normal(ks[3], (1, 4, 4, 4), jnp.float32)
    for li, kk in zip((1, 2, 3), (ks[4:8], ks[8:12], ks[12:16])):
        gamma = 1.0 + 0.1 * jax.random.normal(kk[0], (4,), jnp.float32)
        beta = 0.1 * jax.random.normal(kk[1], (4,), jnp.float32)
        rmean = 0.1 * jax.random.normal(kk[2], (4,), jnp.float32)
        rvar = 1.0 + 0.1 * jax.random.uniform(kk[3], (4,), jnp.float32)
        scale = gamma / jnp.sqrt(rvar + eps)
        p[f"bn{li}_scale"] = scale
        p[f"bn{li}_shift"] = beta - rmean * scale
    return p


def _reference_forward(x, params):
    """Plain XLA (f32) reference of Discr.forward."""
    h = x.T.reshape(-1, 1, 33, 33)

    def conv(v, w, stride, pad):
        return jax.lax.conv_general_dilated(
            v, w, (stride, stride), [(pad, pad), (pad, pad)],
            dimension_numbers=("NCHW", "OIHW", "NCHW"))

    def bn(v, s, t):
        return v * s[None, :, None, None] + t[None, :, None, None]

    leaky = lambda v: jnp.where(v >= 0, v, 0.2 * v)
    h = leaky(bn(conv(h, params["w1"], 2, 1), params["bn1_scale"], params["bn1_shift"]))
    h = leaky(bn(conv(h, params["w2"], 2, 1), params["bn2_scale"], params["bn2_shift"]))
    h = leaky(bn(conv(h, params["w3"], 2, 1), params["bn3_scale"], params["bn3_shift"]))
    h = jax.nn.sigmoid(conv(h, params["w4"], 1, 0))
    return h.reshape(-1, 1)


if __name__ == "__main__":
    key = jax.random.PRNGKey(0)
    kx, kp = jax.random.split(key)
    # Discr input: [33*33, N] -> here N=2 images of 33x33.
    x = jax.random.normal(kx, (33 * 33, 2), jnp.float32)
    params = make_params(kp)
    folded = fold_params(params)           # one-time conv+BN -> dense-affine folding

    fwd = jax.jit(discr_forward)
    out = jax.block_until_ready(fwd(x, folded))

    assert out.shape == (2, 1), out.shape
    assert bool(jnp.all((out > 0.0) & (out < 1.0)))
    ref = _reference_forward(x, params)
    assert float(jnp.max(jnp.abs(out - ref))) < 2e-3, (out, ref)
    print("KERNEL_OK")
</pallas_src>

<mosaic_0001>
module attributes {stable_mosaic.version = 11 : i64} {
  func.func @_discr_fused_kernel(%arg0: i32, %arg1: memref<2x1089xf32, #tpu.memory_space<vmem>>, %arg2: memref<1089x1024xf32, #tpu.memory_space<vmem>>, %arg3: memref<1x1024xf32, #tpu.memory_space<vmem>>, %arg4: memref<1024x256xf32, #tpu.memory_space<vmem>>, %arg5: memref<1x256xf32, #tpu.memory_space<vmem>>, %arg6: memref<256x64xf32, #tpu.memory_space<vmem>>, %arg7: memref<1x64xf32, #tpu.memory_space<vmem>>, %arg8: memref<64x1xf32, #tpu.memory_space<vmem>>, %arg9: memref<2x1xf32, #tpu.memory_space<vmem>>) attributes {dimension_semantics = [#tpu.dimension_semantics<parallel>], iteration_bounds = array<i64: 1>, scalar_prefetch = 0 : i64, scratch_operands = 0 : i64, tpu.core_type = #tpu.core_type<tc>, window_params = [{transform_indices = @transform_0, window_bounds = array<i64: 2, 1089>}, {pipeline_mode = #tpu.pipeline_mode<synchronous>, transform_indices = @transform_1, window_bounds = array<i64: 1089, 1024>}, {pipeline_mode = #tpu.pipeline_mode<synchronous>, transform_indices = @transform_2, window_bounds = array<i64: 1, 1024>}, {pipeline_mode = #tpu.pipeline_mode<synchronous>, transform_indices = @transform_3, window_bounds = array<i64: 1024, 256>}, {pipeline_mode = #tpu.pipeline_mode<synchronous>, transform_indices = @transform_4, window_bounds = array<i64: 1, 256>}, {pipeline_mode = #tpu.pipeline_mode<synchronous>, transform_indices = @transform_5, window_bounds = array<i64: 256, 64>}, {pipeline_mode = #tpu.pipeline_mode<synchronous>, transform_indices = @transform_6, window_bounds = array<i64: 1, 64>}, {pipeline_mode = #tpu.pipeline_mode<synchronous>, transform_indices = @transform_7, window_bounds = array<i64: 64, 1>}, {transform_indices = @transform_8, window_bounds = array<i64: 2, 1>}]} {
    %c0 = arith.constant 0 : index
    %c0_0 = arith.constant 0 : index
    %0 = vector.load %arg1[%c0, %c0_0] : memref<2x1089xf32, #tpu.memory_space<vmem>>, vector<2x1089xf32>
    %c0_1 = arith.constant 0 : index
    %c0_2 = arith.constant 0 : index
    %1 = vector.load %arg2[%c0_1, %c0_2] : memref<1089x1024xf32, #tpu.memory_space<vmem>>, vector<1089x1024xf32>
    %cst = arith.constant dense<0.000000e+00> : vector<2x1024xf32>
    %2 = tpu.matmul %0, %1, %cst {dimension_numbers = #tpu.dot_dimension_numbers<[1], [0], [0], [1], [0, 0, 1, 1], [], []>} : vector<2x1089xf32>, vector<1089x1024xf32>, vector<2x1024xf32> -> vector<2x1024xf32>
    %c0_3 = arith.constant 0 : index
    %c0_4 = arith.constant 0 : index
    %3 = vector.load %arg3[%c0_3, %c0_4] : memref<1x1024xf32, #tpu.memory_space<vmem>>, vector<1x1024xf32>
    %4 = vector.broadcast %3 : vector<1x1024xf32> to vector<2x1024xf32>
    %5 = arith.addf %2, %4 : vector<2x1024xf32>
    %cst_5 = arith.constant 0.000000e+00 : f32
    %6 = vector.broadcast %cst_5 : f32 to vector<2x1024xf32>
    %7 = arith.cmpf oge, %5, %6 : vector<2x1024xf32>
    %cst_6 = arith.constant 2.000000e-01 : f32
    %8 = vector.broadcast %cst_6 : f32 to vector<2x1024xf32>
    %9 = arith.mulf %8, %5 : vector<2x1024xf32>
    %10 = arith.select %7, %5, %9 : vector<2x1024xi1>, vector<2x1024xf32>
    %c0_7 = arith.constant 0 : index
    %c0_8 = arith.constant 0 : index
    %11 = vector.load %arg4[%c0_7, %c0_8] : memref<1024x256xf32, #tpu.memory_space<vmem>>, vector<1024x256xf32>
    %cst_9 = arith.constant dense<0.000000e+00> : vector<2x256xf32>
    %12 = tpu.matmul %10, %11, %cst_9 {dimension_numbers = #tpu.dot_dimension_numbers<[1], [0], [0], [1], [0, 0, 1, 1], [], []>} : vector<2x1024xf32>, vector<1024x256xf32>, vector<2x256xf32> -> vector<2x256xf32>
    %c0_10 = arith.constant 0 : index
    %c0_11 = arith.constant 0 : index
    %13 = vector.load %arg5[%c0_10, %c0_11] : memref<1x256xf32, #tpu.memory_space<vmem>>, vector<1x256xf32>
    %14 = vector.broadcast %13 : vector<1x256xf32> to vector<2x256xf32>
    %15 = arith.addf %12, %14 : vector<2x256xf32>
    %cst_12 = arith.constant 0.000000e+00 : f32
    %16 = vector.broadcast %cst_12 : f32 to vector<2x256xf32>
    %17 = arith.cmpf oge, %15, %16 : vector<2x256xf32>
    %cst_13 = arith.constant 2.000000e-01 : f32
    %18 = vector.broadcast %cst_13 : f32 to vector<2x256xf32>
    %19 = arith.mulf %18, %15 : vector<2x256xf32>
    %20 = arith.select %17, %15, %19 : vector<2x256xi1>, vector<2x256xf32>
    %c0_14 = arith.constant 0 : index
    %c0_15 = arith.constant 0 : index
    %21 = vector.load %arg6[%c0_14, %c0_15] : memref<256x64xf32, #tpu.memory_space<vmem>>, vector<256x64xf32>
    %cst_16 = arith.constant dense<0.000000e+00> : vector<2x64xf32>
    %22 = tpu.matmul %20, %21, %cst_16 {dimension_numbers = #tpu.dot_dimension_numbers<[1], [0], [0], [1], [0, 0, 1, 1], [], []>} : vector<2x256xf32>, vector<256x64xf32>, vector<2x64xf32> -> vector<2x64xf32>
    %c0_17 = arith.constant 0 : index
    %c0_18 = arith.constant 0 : index
    %23 = vector.load %arg7[%c0_17, %c0_18] : memref<1x64xf32, #tpu.memory_space<vmem>>, vector<1x64xf32>
    %24 = vector.broadcast %23 : vector<1x64xf32> to vector<2x64xf32>
    %25 = arith.addf %22, %24 : vector<2x64xf32>
    %cst_19 = arith.constant 0.000000e+00 : f32
    %26 = vector.broadcast %cst_19 : f32 to vector<2x64xf32>
    %27 = arith.cmpf oge, %25, %26 : vector<2x64xf32>
    %cst_20 = arith.constant 2.000000e-01 : f32
    %28 = vector.broadcast %cst_20 : f32 to vector<2x64xf32>
    %29 = arith.mulf %28, %25 : vector<2x64xf32>
    %30 = arith.select %27, %25, %29 : vector<2x64xi1>, vector<2x64xf32>
    %c0_21 = arith.constant 0 : index
    %c0_22 = arith.constant 0 : index
    %31 = vector.load %arg8[%c0_21, %c0_22] : memref<64x1xf32, #tpu.memory_space<vmem>>, vector<64x1xf32>
    %cst_23 = arith.constant dense<0.000000e+00> : vector<2x1xf32>
    %32 = tpu.matmul %30, %31, %cst_23 {dimension_numbers = #tpu.dot_dimension_numbers<[1], [0], [0], [1], [0, 0, 1, 1], [], []>} : vector<2x64xf32>, vector<64x1xf32>, vector<2x1xf32> -> vector<2x1xf32>
    %cst_24 = arith.constant 0.000000e+00 : f32
    %33 = vector.broadcast %cst_24 : f32 to vector<2x1xf32>
    %34 = arith.subf %33, %32 : vector<2x1xf32>
    %35 = math.exp %34 : vector<2x1xf32>
    %cst_25 = arith.constant 1.000000e+00 : f32
    %36 = vector.broadcast %cst_25 : f32 to vector<2x1xf32>
    %37 = arith.addf %36, %35 : vector<2x1xf32>
    %38 = tpu.reciprocal %37 : vector<2x1xf32> -> vector<2x1xf32>
    %c0_26 = arith.constant 0 : index
    %c0_27 = arith.constant 0 : index
    %39 = vector.load %arg9[%c0_26, %c0_27] : memref<2x1xf32, #tpu.memory_space<vmem>>, vector<2x1xf32>
    tpu.vector_store %arg9[%c0_26, %c0_27], %38 {strides = array<i32>} : memref<2x1xf32, #tpu.memory_space<vmem>>, vector<2x1xf32>,
    return
  }
  func.func @transform_0(%arg0: i32) -> (i32, i32) {
    %c0_i32 = arith.constant 0 : i32
    %c0_i32_0 = arith.constant 0 : i32
    return %arg0, %c0_i32 : i32, i32
  }
  func.func @transform_1(%arg0: i32) -> (i32, i32) {
    %c0_i32 = arith.constant 0 : i32
    %c0_i32_0 = arith.constant 0 : i32
    %c0_i32_1 = arith.constant 0 : i32
    return %c0_i32, %c0_i32_0 : i32, i32
  }
  func.func @transform_2(%arg0: i32) -> (i32, i32) {
    %c0_i32 = arith.constant 0 : i32
    %c0_i32_0 = arith.constant 0 : i32
    %c0_i32_1 = arith.constant 0 : i32
    return %c0_i32, %c0_i32_0 : i32, i32
  }
  func.func @transform_3(%arg0: i32) -> (i32, i32) {
    %c0_i32 = arith.constant 0 : i32
    %c0_i32_0 = arith.constant 0 : i32
    %c0_i32_1 = arith.constant 0 : i32
    return %c0_i32, %c0_i32_0 : i32, i32
  }
  func.func @transform_4(%arg0: i32) -> (i32, i32) {
    %c0_i32 = arith.constant 0 : i32
    %c0_i32_0 = arith.constant 0 : i32
    %c0_i32_1 = arith.constant 0 : i32
    return %c0_i32, %c0_i32_0 : i32, i32
  }
  func.func @transform_5(%arg0: i32) -> (i32, i32) {
    %c0_i32 = arith.constant 0 : i32
    %c0_i32_0 = arith.constant 0 : i32
    %c0_i32_1 = arith.constant 0 : i32
    return %c0_i32, %c0_i32_0 : i32, i32
  }
  func.func @transform_6(%arg0: i32) -> (i32, i32) {
    %c0_i32 = arith.constant 0 : i32
    %c0_i32_0 = arith.constant 0 : i32
    %c0_i32_1 = arith.constant 0 : i32
    return %c0_i32, %c0_i32_0 : i32, i32
  }
  func.func @transform_7(%arg0: i32) -> (i32, i32) {
    %c0_i32 = arith.constant 0 : i32
    %c0_i32_0 = arith.constant 0 : i32
    %c0_i32_1 = arith.constant 0 : i32
    return %c0_i32, %c0_i32_0 : i32, i32
  }
  func.func @transform_8(%arg0: i32) -> (i32, i32) {
    %c0_i32 = arith.constant 0 : i32
    %c0_i32_0 = arith.constant 0 : i32
    return %arg0, %c0_i32 : i32, i32
  }
}

</mosaic_0001>

<llo_original>
// kernel: discr_forward.1
$region0: #{discr_forward.1}
  #allocation0 [shape = 'u32[]', space=smem, size = 0x4, offset = 0x4, fixed_abs, tag = 'smem constant byte address 0x4 - core index']
  #allocation1 [shape = 'u32[72,128]{1,0:T(1,128)}', space=vmem, size = 0x9000, scoped, tag = 'internal scratch']
  %s0 = inlined_call_operand.hbm [shape: f32[2,1089], index: 0, kind: input, shape index: {}]
  %s1 = inlined_call_operand.hbm [shape: f32[1089,1024], index: 1, kind: input, shape index: {}]
  %s2 = inlined_call_operand.hbm [shape: f32[1,1024], index: 2, kind: input, shape index: {}]
  %s3 = inlined_call_operand.hbm [shape: f32[1024,256], index: 3, kind: input, shape index: {}]
  %s4 = inlined_call_operand.hbm [shape: f32[1,256], index: 4, kind: input, shape index: {}]
  %s5 = inlined_call_operand.vmem [shape: f32[256,64], index: 5, kind: input, shape index: {}]
  %s6 = inlined_call_operand.hbm [shape: f32[1,64], index: 6, kind: input, shape index: {}]
  %s7 = inlined_call_operand.vmem [shape: f32[64,1], index: 7, kind: input, shape index: {}]
  %s8 = inlined_call_operand.vmem [shape: f32[2,1], index: 8, kind: output, shape index: {}]
  %s9 = sld [smem:[#allocation0]]
  $region66: #{discr_forward.1} parent=0
    _
  %s11 = ssub.s32 1, %s9
  %s12 = scalar_select 0, %s11, %s9
  $region1: #{discr_forward.1} parent=0
    #allocation2 [shape = 'u8[9216]{0}', space=vmem, size = 0x2400, scoped, tag = 'input window, operand 0, single buffered']
    #allocation3 [shape = 's32[1]{0}', space=sflag, size = 0x4, scoped, tag = 'scoped memory for discr_forward.1']
    #allocation4 [shape = 'u8[4489216]{0}', space=vmem, size = 0x448000, scoped, tag = 'input window, operand 1, single buffered']
    #allocation5 [shape = 's32[1]{0}', space=sflag, size = 0x4, scoped, tag = 'scoped memory for discr_forward.1']
    #allocation6 [shape = 'u8[4096]{0}', space=vmem, size = 0x1000, scoped, tag = 'input window, operand 2, single buffered']
    #allocation7 [shape = 'u8[1048576]{0}', space=vmem, size = 0x100000, scoped, tag = 'input window, operand 3, single buffered']
    #allocation8 [shape = 's32[1]{0}', space=sflag, size = 0x4, scoped, tag = 'scoped memory for discr_forward.1']
    #allocation9 [shape = 'u8[1024]{0}', space=vmem, size = 0x400, scoped, tag = 'input window, operand 4, single buffered']
    #allocation10 [shape = 'u8[512]{0}', space=vmem, size = 0x400, scoped, tag = 'input window, operand 6, single buffered']
    #allocation11 [shape = 's32[1]{0}', space=sflag, size = 0x4, scoped, tag = 'scoped memory for discr_forward.1']
    %13 = vsyncpa [#allocation3], 0
    %14 = vsyncpa [#allocation5], 0
    %15 = vsyncpa [#allocation8], 0
    %16 = vsyncpa [#allocation11], 0
    // Predicated region
    $region2: #{discr_forward.1} parent=1 // pred_check
      _
    $region3: #{discr_forward.1} parent=1 // pred_check_branch
      %18 = sbr.rel (0) target = $region5
    $region4: #{discr_forward.1} parent=1 // pred_region
      %20 = vsyncadd [#allocation3], 0
      %s22 = sshll.u32 %s0, 4
      %s23 = int_to_ptr.hbm [resolvable:$true] %s22
      %s24 = sshll.u32 [#allocation2], 4
      %s25 = int_to_ptr.vmem [resolvable:$true] %s24
      %27 = dma.hbm_to_vmem [thread:$0]  %s23, 288, %s25, [#allocation3]
    $region5: #{discr_forward.1} parent=1 // pred_fallthru
      _
    // Predicated region
    $region6: #{discr_forward.1} parent=1 // pred_check
      _
    $region7: #{discr_forward.1} parent=1 // pred_check_branch
      %29 = sbr.rel (0) target = $region9
    $region8: #{discr_forward.1} parent=1 // pred_region
      %31 = vsyncadd [#allocation5], 0
      %s32 = sshll.u32 %s1, 4
      %s33 = int_to_ptr.hbm [resolvable:$true] %s32
      %s34 = sshll.u32 [#allocation4], 4
      %s35 = int_to_ptr.vmem [resolvable:$true] %s34
      %40 = dma.hbm_to_vmem [thread:$0]  %s33, 140288, %s35, [#allocation5], 1024, 1024, 64
    $region9: #{discr_forward.1} parent=1 // pred_fallthru
      _
    // Predicated region
    $region10: #{discr_forward.1} parent=1 // pred_check
      _
    $region11: #{discr_forward.1} parent=1 // pred_check_branch
      %42 = sbr.rel (0) target = $region13
    $region12: #{discr_forward.1} parent=1 // pred_region
      %44 = vsyncadd [#allocation5], 0
      %s46 = sshll.u32 %s2, 4
      %s47 = int_to_ptr.hbm [resolvable:$true] %s46
      %s48 = sshll.u32 [#allocation6], 4
      %s49 = int_to_ptr.vmem [resolvable:$true] %s48
      %51 = dma.hbm_to_vmem [thread:$0]  %s47, 128, %s49, [#allocation5]
    $region13: #{discr_forward.1} parent=1 // pred_fallthru
      _
    // Predicated region
    $region14: #{discr_forward.1} parent=1 // pred_check
      _
    $region15: #{discr_forward.1} parent=1 // pred_check_branch
      %53 = sbr.rel (0) target = $region17
    $region16: #{discr_forward.1} parent=1 // pred_region
      %55 = vsyncadd [#allocation8], 0
      %s56 = sshll.u32 %s3, 4
      %s57 = int_to_ptr.hbm [resolvable:$true] %s56
      %s58 = sshll.u32 [#allocation7], 4
      %s59 = int_to_ptr.vmem [resolvable:$true] %s58
      %64 = dma.hbm_to_vmem [thread:$0]  %s57, 32768, %s59, [#allocation8], 256, 256, 16
    $region17: #{discr_forward.1} parent=1 // pred_fallthru
      _
    // Predicated region
    $region18: #{discr_forward.1} parent=1 // pred_check
      _
    $region19: #{discr_forward.1} parent=1 // pred_check_branch
      %66 = sbr.rel (0) target = $region21
    $region20: #{discr_forward.1} parent=1 // pred_region
      %68 = vsyncadd [#allocation8], 0
      %s70 = sshll.u32 %s4, 4
      %s71 = int_to_ptr.hbm [resolvable:$true] %s70
      %s72 = sshll.u32 [#allocation9], 4
      %s73 = int_to_ptr.vmem [resolvable:$true] %s72
      %75 = dma.hbm_to_vmem [thread:$0]  %s71, 32, %s73, [#allocation8]
    $region21: #{discr_forward.1} parent=1 // pred_fallthru
      _
    // Predicated region
    $region22: #{discr_forward.1} parent=1 // pred_check
      _
    $region23: #{discr_forward.1} parent=1 // pred_check_branch
      %77 = sbr.rel (0) target = $region25
    $region24: #{discr_forward.1} parent=1 // pred_region
      _
    $region25: #{discr_forward.1} parent=1 // pred_fallthru
      _
    // Predicated region
    $region26: #{discr_forward.1} parent=1 // pred_check
      _
    $region27: #{discr_forward.1} parent=1 // pred_check_branch
      %79 = sbr.rel (0) target = $region29
    $region28: #{discr_forward.1} parent=1 // pred_region
      %81 = vsyncadd [#allocation11], 0
      %s83 = sshll.u32 %s6, 4
      %s84 = int_to_ptr.hbm [resolvable:$true] %s83
      %s85 = sshll.u32 [#allocation10], 4
      %s86 = int_to_ptr.vmem [resolvable:$true] %s85
      %88 = dma.hbm_to_vmem [thread:$0]  %s84, 16, %s86, [#allocation11]
    $region29: #{discr_forward.1} parent=1 // pred_fallthru
      _
    // Predicated region
    $region30: #{discr_forward.1} parent=1 // pred_check
      _
    $region31: #{discr_forward.1} parent=1 // pred_check_branch
      %90 = sbr.rel (0) target = $region33
    $region32: #{discr_forward.1} parent=1 // pred_region
      _
    $region33: #{discr_forward.1} parent=1 // pred_fallthru
      _
    // Predicated region
    $region34: #{discr_forward.1} parent=1 // pred_check
      _
    $region35: #{discr_forward.1} parent=1 // pred_check_branch
      %92 = sbr.rel (0) target = $region37
    $region36: #{discr_forward.1} parent=1 // pred_region
      %94 = dma.done [#allocation3], 288
    $region37: #{discr_forward.1} parent=1 // pred_fallthru
      _
    // Predicated region
    $region38: #{discr_forward.1} parent=1 // pred_check
      _
    $region39: #{discr_forward.1} parent=1 // pred_check_branch
      %96 = sbr.rel (0) target = $region41
    $region40: #{discr_forward.1} parent=1 // pred_region
      %98 = dma.done [#allocation5], 140288
    $region41: #{discr_forward.1} parent=1 // pred_fallthru
      _
    // Predicated region
    $region42: #{discr_forward.1} parent=1 // pred_check
      _
    $region43: #{discr_forward.1} parent=1 // pred_check_branch
      %100 = sbr.rel (0) target = $region45
    $region44: #{discr_forward.1} parent=1 // pred_region
      %102 = dma.done [#allocation5], 128
    $region45: #{discr_forward.1} parent=1 // pred_fallthru
      _
    // Predicated region
    $region46: #{discr_forward.1} parent=1 // pred_check
      _
    $region47: #{discr_forward.1} parent=1 // pred_check_branch
      %104 = sbr.rel (0) target = $region49
    $region48: #{discr_forward.1} parent=1 // pred_region
      %106 = dma.done [#allocation8], 32768
    $region49: #{discr_forward.1} parent=1 // pred_fallthru
      _
    // Predicated region
    $region50: #{discr_forward.1} parent=1 // pred_check
      _
    $region51: #{discr_forward.1} parent=1 // pred_check_branch
      %108 = sbr.rel (0) target = $region53
    $region52: #{discr_forward.1} parent=1 // pred_region
      %110 = dma.done [#allocation8], 32
    $region53: #{discr_forward.1} parent=1 // pred_fallthru
      _
    // Predicated region
    $region54: #{discr_forward.1} parent=1 // pred_check
      _
    $region55: #{discr_forward.1} parent=1 // pred_check_branch
      %112 = sbr.rel (0) target = $region57
    $region56: #{discr_forward.1} parent=1 // pred_region
      %114 = dma.done [#allocation11], 16
    $region57: #{discr_forward.1} parent=1 // pred_fallthru
      _
    %v115 = vld [vmem:[#allocation2] sm:$0xff]
    %v116 = vld [vmem:[#allocation2 + $0x8] sm:$0xff]
    %v117 = vld [vmem:[#allocation2 + $0x10] sm:$0x3]
    %v118 = vld [vmem:[#allocation4] sm:$0xff]
    %v119 = vld [vmem:[#allocation4 + $0x8] sm:$0xff]
    %v120 = vld [vmem:[#allocation4 + $0x10] sm:$0xff]
    %v121 = vld [vmem:[#allocation4 + $0x18] sm:$0xff]
    %v122 = vld [vmem:[#allocation4 + $0x20] sm:$0xff]
    %v123 = vld [vmem:[#allocation4 + $0x28] sm:$0xff]
    %v124 = vld [vmem:[#allocation4 + $0x30] sm:$0xff]
    %v125 = vld [vmem:[#allocation4 + $0x38] sm:$0xff]
    %v126 = vld [vmem:[#allocation4 + $0x40] sm:$0xff]
    %v127 = vld [vmem:[#allocation4 + $0x48] sm:$0xff]
    %v128 = vld [vmem:[#allocation4 + $0x50] sm:$0xff]
    %v129 = vld [vmem:[#allocation4 + $0x58] sm:$0xff]
    %v130 = vld [vmem:[#allocation4 + $0x60] sm:$0xff]
    %v131 = vld [vmem:[#allocation4 + $0x68] sm:$0xff]
    %v132 = vld [vmem:[#allocation4 + $0x70] sm:$0xff]
    %v133 = vld [vmem:[#allocation4 + $0x78] sm:$0xff]
    %v134 = vld [vmem:[#allocation4 + $0x80] sm:$0xff]
    %v135 = vld [vmem:[#allocation4 + $0x88] sm:$0xff]
    %v136 = vld [vmem:[#allocation4 + $0x90] sm:$0xff]
    %v137 = vld [vmem:[#allocation4 + $0x98] sm:$0xff]
    %v138 = vld [vmem:[#allocation4 + $0xa0] sm:$0xff]
    %v139 = vld [vmem:[#allocation4 + $0xa8] sm:$0xff]
    %v140 = vld [vmem:[#allocation4 + $0xb0] sm:$0xff]
    %v141 = vld [vmem:[#allocation4 + $0xb8] sm:$0xff]
    %v142 = vld [vmem:[#allocation4 + $0xc0] sm:$0xff]
    %v143 = vld [vmem:[#allocation4 + $0xc8] sm:$0xff]
    %v144 = vld [vmem:[#allocation4 + $0xd0] sm:$0xff]
    %v145 = vld [vmem:[#allocation4 + $0xd8] sm:$0xff]
    %v146 = vld [vmem:[#allocation4 + $0xe0] sm:$0xff]
    %v147 = vld [vmem:[#allocation4 + $0xe8] sm:$0xff]
    %v148 = vld [vmem:[#allocation4 + $0xf0] sm:$0xff]
    %v149 = vld [vmem:[#allocation4 + $0xf8] sm:$0xff]
    %v150 = vld [vmem:[#allocation4 + $0x100] sm:$0xff]
    %v151 = vld [vmem:[#allocation4 + $0x108] sm:$0xff]
    %v152 = vld [vmem:[#allocation4 + $0x110] sm:$0xff]
    %v153 = vld [vmem:[#allocation4 + $0x118] sm:$0xff]
    %v154 = vld [vmem:[#allocation4 + $0x120] sm:$0xff]
    %v155 = vld [vmem:[#allocation4 + $0x128] sm:$0xff]
    %v156 = vld [vmem:[#allocation4 + $0x130] sm:$0xff]
    %v157 = vld [vmem:[#allocation4 + $0x138] sm:$0xff]
    %v158 = vld [vmem:[#allocation4 + $0x140] sm:$0xff]
    %v159 = vld [vmem:[#allocation4 + $0x148] sm:$0xff]
    %v160 = vld [vmem:[#allocation4 + $0x150] sm:$0xff]
    %v161 = vld [vmem:[#allocation4 + $0x158] sm:$0xff]
    %v162 = vld [vmem:[#allocation4 + $0x160] sm:$0xff]
    %v163 = vld [vmem:[#allocation4 + $0x168] sm:$0xff]
    %v164 = vld [vmem:[#allocation4 + $0x170] sm:$0xff]
    %v165 = vld [vmem:[#allocation4 + $0x178] sm:$0xff]
    %v166 = vld [vmem:[#allocation4 + $0x180] sm:$0xff]
    %v167 = vld [vmem:[#allocation4 + $0x188] sm:$0xff]
    %v168 = vld [vmem:[#allocation4 + $0x190] sm:$0xff]
    %v169 = vld [vmem:[#allocation4 + $0x198] sm:$0xff]
    %v170 = vld [vmem:[#allocation4 + $0x1a0] sm:$0xff]
    %v171 = vld [vmem:[#allocation4 + $0x1a8] sm:$0xff]
    %v172 = vld [vmem:[#allocation4 + $0x1b0] sm:$0xff]
    %v173 = vld [vmem:[#allocation4 + $0x1b8] sm:$0xff]
    %v174 = vld [vmem:[#allocation4 + $0x1c0] sm:$0xff]
    %v175 = vld [vmem:[#allocation4 + $0x1c8] sm:$0xff]
    %v176 = vld [vmem:[#allocation4 + $0x1d0] sm:$0xff]
    %v177 = vld [vmem:[#allocation4 + $0x1d8] sm:$0xff]
    %v178 = vld [vmem:[#allocation4 + $0x1e0] sm:$0xff]
    %v179 = vld [vmem:[#allocation4 + $0x1e8] sm:$0xff]
    %v180 = vld [vmem:[#allocation4 + $0x1f0] sm:$0xff]
    %v181 = vld [vmem:[#allocation4 + $0x1f8] sm:$0xff]
    %v182 = vld [vmem:[#allocation4 + $0x200] sm:$0xff]
    %v183 = vld [vmem:[#allocation4 + $0x208] sm:$0xff]
    %v184 = vld [vmem:[#allocation4 + $0x210] sm:$0xff]
    %v185 = vld [vmem:[#allocation4 + $0x218] sm:$0xff]
    %v186 = vld [vmem:[#allocation4 + $0x220] sm:$0xff]
    %v187 = vld [vmem:[#allocation4 + $0x228] sm:$0xff]
    %v188 = vld [vmem:[#allocation4 + $0x230] sm:$0xff]
    %v189 = vld [vmem:[#allocation4 + $0x238] sm:$0xff]
    %v190 = vld [vmem:[#allocation4 + $0x240] sm:$0xff]
    %v191 = vld [vmem:[#allocation4 + $0x248] sm:$0xff]
    %v192 = vld [vmem:[#allocation4 + $0x250] sm:$0xff]
    %v193 = vld [vmem:[#allocation4 + $0x258] sm:$0xff]
    %v194 = vld [vmem:[#allocation4 + $0x260] sm:$0xff]
    %v195 = vld [vmem:[#allocation4 + $0x268] sm:$0xff]
    %v196 = vld [vmem:[#allocation4 + $0x270] sm:$0xff]
    %v197 = vld [vmem:[#allocation4 + $0x278] sm:$0xff]
    %v198 = vld [vmem:[#allocation4 + $0x280] sm:$0xff]
    %v199 = vld [vmem:[#allocation4 + $0x288] sm:$0xff]
    %v200 = vld [vmem:[#allocation4 + $0x290] sm:$0xff]
    %v201 = vld [vmem:[#allocation4 + $0x298] sm:$0xff]
    %v202 = vld [vmem:[#allocation4 + $0x2a0] sm:$0xff]
    %v203 = vld [vmem:[#allocation4 + $0x2a8] sm:$0xff]
    %v204 = vld [vmem:[#allocation4 + $0x2b0] sm:$0xff]
    %v205 = vld [vmem:[#allocation4 + $0x2b8] sm:$0xff]
    %v206 = vld [vmem:[#allocation4 + $0x2c0] sm:$0xff]
    %v207 = vld [vmem:[#allocation4 + $0x2c8] sm:$0xff]
    %v208 = vld [vmem:[#allocation4 + $0x2d0] sm:$0xff]
    %v209 = vld [vmem:[#allocation4 + $0x2d8] sm:$0xff]
    %v210 = vld [vmem:[#allocation4 + $0x2e0] sm:$0xff]
    %v211 = vld [vmem:[#allocation4 + $0x2e8] sm:$0xff]
    %v212 = vld [vmem:[#allocation4 + $0x2f0] sm:$0xff]
    %v213 = vld [vmem:[#allocation4 + $0x2f8] sm:$0xff]
    %v214 = vld [vmem:[#allocation4 + $0x300] sm:$0xff]
    %v215 = vld [vmem:[#allocation4 + $0x308] sm:$0xff]
    %v216 = vld [vmem:[#allocation4 + $0x310] sm:$0xff]
    %v217 = vld [vmem:[#allocation4 + $0x318] sm:$0xff]
    %v218 = vld [vmem:[#allocation4 + $0x320] sm:$0xff]
    %v219 = vld [vmem:[#allocation4 + $0x328] sm:$0xff]
    %v220 = vld [vmem:[#allocation4 + $0x330] sm:$0xff]
    %v221 = vld [vmem:[#allocation4 + $0x338] sm:$0xff]
    %v222 = vld [vmem:[#allocation4 + $0x340] sm:$0xff]
    %v223 = vld [vmem:[#allocation4 + $0x348] sm:$0xff]
    %v224 = vld [vmem:[#allocation4 + $0x350] sm:$0xff]
    %v225 = vld [vmem:[#allocation4 + $0x358] sm:$0xff]
    %v226 = vld [vmem:[#allocation4 + $0x360] sm:$0xff]
    %v227 = vld [vmem:[#allocation4 + $0x368] sm:$0xff]
    %v228 = vld [vmem:[#allocation4 + $0x370] sm:$0xff]
    %v229 = vld [vmem:[#allocation4 + $0x378] sm:$0xff]
    %v230 = vld [vmem:[#allocation4 + $0x380] sm:$0xff]
    %v231 = vld [vmem:[#allocation4 + $0x388] sm:$0xff]
    %v232 = vld [vmem:[#allocation4 + $0x390] sm:$0xff]
    %v233 = vld [vmem:[#allocation4 + $0x398] sm:$0xff]
    %v234 = vld [vmem:[#allocation4 + $0x3a0] sm:$0xff]
    %v235 = vld [vmem:[#allocation4 + $0x3a8] sm:$0xff]
    %v236 = vld [vmem:[#allocation4 + $0x3b0] sm:$0xff]
    %v237 = vld [vmem:[#allocation4 + $0x3b8] sm:$0xff]
    %v238 = vld [vmem:[#allocation4 + $0x3c0] sm:$0xff]
    %v239 = vld [vmem:[#allocation4 + $0x3c8] sm:$0xff]
    %v240 = vld [vmem:[#allocation4 + $0x3d0] sm:$0xff]
    %v241 = vld [vmem:[#allocation4 + $0x3d8] sm:$0xff]
    %v242 = vld [vmem:[#allocation4 + $0x3e0] sm:$0xff]
    %v243 = vld [vmem:[#allocation4 + $0x3e8] sm:$0xff]
    %v244 = vld [vmem:[#allocation4 + $0x3f0] sm:$0xff]
    %v245 = vld [vmem:[#allocation4 + $0x3f8] sm:$0xff]
    %v246 = vld [vmem:[#allocation4 + $0x400] sm:$0xff]
    %v247 = vld [vmem:[#allocation4 + $0x408] sm:$0xff]
    %v248 = vld [vmem:[#allocation4 + $0x410] sm:$0xff]
    %v249 = vld [vmem:[#allocation4 + $0x418] sm:$0xff]
    %v250 = vld [vmem:[#allocation4 + $0x420] sm:$0xff]
    %v251 = vld [vmem:[#allocation4 + $0x428] sm:$0xff]
    %v252 = vld [vmem:[#allocation4 + $0x430] sm:$0xff]
    %v253 = vld [vmem:[#allocation4 + $0x438] sm:$0xff]
    %v254 = vld [vmem:[#allocation4 + $0x440] sm:$0xff]
    %v255 = vld [vmem:[#allocation4 + $0x448] sm:$0xff]
    %v256 = vld [vmem:[#allocation4 + $0x450] sm:$0xff]
    %v257 = vld [vmem:[#allocation4 + $0x458] sm:$0xff]
    %v258 = vld [vmem:[#allocation4 + $0x460] sm:$0xff]
    %v259 = vld [vmem:[#allocation4 + $0x468] sm:$0xff]
    %v260 = vld [vmem:[#allocation4 + $0x470] sm:$0xff]
    %v261 = vld [vmem:[#allocation4 + $0x478] sm:$0xff]
    %v262 = vld [vmem:[#allocation4 + $0x480] sm:$0xff]
    %v263 = vld [vmem:[#allocation4 + $0x488] sm:$0xff]
    %v264 = vld [vmem:[#allocation4 + $0x490] sm:$0xff]
    %v265 = vld [vmem:[#allocation4 + $0x498] sm:$0xff]
    %v266 = vld [vmem:[#allocation4 + $0x4a0] sm:$0xff]
    %v267 = vld [vmem:[#allocation4 + $0x4a8] sm:$0xff]
    %v268 = vld [vmem:[#allocation4 + $0x4b0] sm:$0xff]
    %v269 = vld [vmem:[#allocation4 + $0x4b8] sm:$0xff]
    %v270 = vld [vmem:[#allocation4 + $0x4c0] sm:$0xff]
    %v271 = vld [vmem:[#allocation4 + $0x4c8] sm:$0xff]
    %v272 = vld [vmem:[#allocation4 + $0x4d0] sm:$0xff]
    %v273 = vld [vmem:[#allocation4 + $0x4d8] sm:$0xff]
    %v274 = vld [vmem:[#allocation4 + $0x4e0] sm:$0xff]
    %v275 = vld [vmem:[#allocation4 + $0x4e8] sm:$0xff]
    %v276 = vld [vmem:[#allocation4 + $0x4f0] sm:$0xff]
    %v277 = vld [vmem:[#allocation4 + $0x4f8] sm:$0xff]
    %v278 = vld [vmem:[#allocation4 + $0x500] sm:$0xff]
    %v279 = vld [vmem:[#allocation4 + $0x508] sm:$0xff]
    %v280 = vld [vmem:[#allocation4 + $0x510] sm:$0xff]
    %v281 = vld [vmem:[#allocation4 + $0x518] sm:$0xff]
    %v282 = vld [vmem:[#allocation4 + $0x520] sm:$0xff]
    %v283 = vld [vmem:[#allocation4 + $0x528] sm:$0xff]
    %v284 = vld [vmem:[#allocation4 + $0x530] sm:$0xff]
    %v285 = vld [vmem:[#allocation4 + $0x538] sm:$0xff]
    %v286 = vld [vmem:[#allocation4 + $0x540] sm:$0xff]
    %v287 = vld [vmem:[#allocation4 + $0x548] sm:$0xff]
    %v288 = vld [vmem:[#allocation4 + $0x550] sm:$0xff]
    %v289 = vld [vmem:[#allocation4 + $0x558] sm:$0xff]
    %v290 = vld [vmem:[#allocation4 + $0x560] sm:$0xff]
    %v291 = vld [vmem:[#allocation4 + $0x568] sm:$0xff]
    %v292 = vld [vmem:[#allocation4 + $0x570] sm:$0xff]
    %v293 = vld [vmem:[#allocation4 + $0x578] sm:$0xff]
    %v294 = vld [vmem:[#allocation4 + $0x580] sm:$0xff]
    %v295 = vld [vmem:[#allocation4 + $0x588] sm:$0xff]
    %v296 = vld [vmem:[#allocation4 + $0x590] sm:$0xff]
    %v297 = vld [vmem:[#allocation4 + $0x598] sm:$0xff]
    %v298 = vld [vmem:[#allocation4 + $0x5a0] sm:$0xff]
    %v299 = vld [vmem:[#allocation4 + $0x5a8] sm:$0xff]
    %v300 = vld [vmem:[#allocation4 + $0x5b0] sm:$0xff]
    %v301 = vld [vmem:[#allocation4 + $0x5b8] sm:$0xff]
    %v302 = vld [vmem:[#allocation4 + $0x5c0] sm:$0xff]
    %v303 = vld [vmem:[#allocation4 + $0x5c8] sm:$0xff]
    %v304 = vld [vmem:[#allocation4 + $0x5d0] sm:$0xff]
    %v305 = vld [vmem:[#allocation4 + $0x5d8] sm:$0xff]
    %v306 = vld [vmem:[#allocation4 + $0x5e0] sm:$0xff]
    %v307 = vld [vmem:[#allocation4 + $0x5e8] sm:$0xff]
    %v308 = vld [vmem:[#allocation4 + $0x5f0] sm:$0xff]
    %v309 = vld [vmem:[#allocation4 + $0x5f8] sm:$0xff]
    %v310 = vld [vmem:[#allocation4 + $0x600] sm:$0xff]
    %v311 = vld [vmem:[#allocation4 + $0x608] sm:$0xff]
    %v312 = vld [vmem:[#allocation4 + $0x610] sm:$0xff]
    %v313 = vld [vmem:[#allocation4 + $0x618] sm:$0xff]
    %v314 = vld [vmem:[#allocation4 + $0x620] sm:$0xff]
    %v315 = vld [vmem:[#allocation4 + $0x628] sm:$0xff]
    %v316 = vld [vmem:[#allocation4 + $0x630] sm:$0xff]
    %v317 = vld [vmem:[#allocation4 + $0x638] sm:$0xff]
    %v318 = vld [vmem:[#allocation4 + $0x640] sm:$0xff]
    %v319 = vld [vmem:[#allocation4 + $0x648] sm:$0xff]
    %v320 = vld [vmem:[#allocation4 + $0x650] sm:$0xff]
    %v321 = vld [vmem:[#allocation4 + $0x658] sm:$0xff]
    %v322 = vld [vmem:[#allocation4 + $0x660] sm:$0xff]
    %v323 = vld [vmem:[#allocation4 + $0x668] sm:$0xff]
    %v324 = vld [vmem:[#allocation4 + $0x670] sm:$0xff]
    %v325 = vld [vmem:[#allocation4 + $0x678] sm:$0xff]
    %v326 = vld [vmem:[#allocation4 + $0x680] sm:$0xff]
    %v327 = vld [vmem:[#allocation4 + $0x688] sm:$0xff]
    %v328 = vld [vmem:[#allocation4 + $0x690] sm:$0xff]
    %v329 = vld [vmem:[#allocation4 + $0x698] sm:$0xff]
    %v330 = vld [vmem:[#allocation4 + $0x6a0] sm:$0xff]
    %v331 = vld [vmem:[#allocation4 + $0x6a8] sm:$0xff]
    %v332 = vld [vmem:[#allocation4 + $0x6b0] sm:$0xff]
    %v333 = vld [vmem:[#allocation4 + $0x6b8] sm:$0xff]
    %v334 = vld [vmem:[#allocation4 + $0x6c0] sm:$0xff]
    %v335 = vld [vmem:[#allocation4 + $0x6c8] sm:$0xff]
    %v336 = vld [vmem:[#allocation4 + $0x6d0] sm:$0xff]
    %v337 = vld [vmem:[#allocation4 + $0x6d8] sm:$0xff]
    %v338 = vld [vmem:[#allocation4 + $0x6e0] sm:$0xff]
    %v339 = vld [vmem:[#allocation4 + $0x6e8] sm:$0xff]
    %v340 = vld [vmem:[#allocation4 + $0x6f0] sm:$0xff]
    %v341 = vld [vmem:[#allocation4 + $0x6f8] sm:$0xff]
    %v342 = vld [vmem:[#allocation4 + $0x700] sm:$0xff]
    %v343 = vld [vmem:[#allocation4 + $0x708] sm:$0xff]
    %v344 = vld [vmem:[#allocation4 + $0x710] sm:$0xff]
    %v345 = vld [vmem:[#allocation4 + $0x718] sm:$0xff]
    %v346 = vld [vmem:[#allocation4 + $0x720] sm:$0xff]
    %v347 = vld [vmem:[#allocation4 + $0x728] sm:$0xff]
    %v348 = vld [vmem:[#allocation4 + $0x730] sm:$0xff]
    %v349 = vld [vmem:[#allocation4 + $0x738] sm:$0xff]
    %v350 = vld [vmem:[#allocation4 + $0x740] sm:$0xff]
    %v351 = vld [vmem:[#allocation4 + $0x748] sm:$0xff]
    %v352 = vld [vmem:[#allocation4 + $0x750] sm:$0xff]
    %v353 = vld [vmem:[#allocation4 + $0x758] sm:$0xff]
    %v354 = vld [vmem:[#allocation4 + $0x760] sm:$0xff]
    %v355 = vld [vmem:[#allocation4 + $0x768] sm:$0xff]
    %v356 = vld [vmem:[#allocation4 + $0x770] sm:$0xff]
    %v357 = vld [vmem:[#allocation4 + $0x778] sm:$0xff]
    %v358 = vld [vmem:[#allocation4 + $0x780] sm:$0xff]
    %v359 = vld [vmem:[#allocation4 + $0x788] sm:$0xff]
    %v360 = vld [vmem:[#allocation4 + $0x790] sm:$0xff]
    %v361 = vld [vmem:[#allocation4 + $0x798] sm:$0xff]
    %v362 = vld [vmem:[#allocation4 + $0x7a0] sm:$0xff]
    %v363 = vld [vmem:[#allocation4 + $0x7a8] sm:$0xff]
    %v364 = vld [vmem:[#allocation4 + $0x7b0] sm:$0xff]
    %v365 = vld [vmem:[#allocation4 + $0x7b8] sm:$0xff]
    %v366 = vld [vmem:[#allocation4 + $0x7c0] sm:$0xff]
    %v367 = vld [vmem:[#allocation4 + $0x7c8] sm:$0xff]
    %v368 = vld [vmem:[#allocation4 + $0x7d0] sm:$0xff]
    %v369 = vld [vmem:[#allocation4 + $0x7d8] sm:$0xff]
    %v370 = vld [vmem:[#allocation4 + $0x7e0] sm:$0xff]
    %v371 = vld [vmem:[#allocation4 + $0x7e8] sm:$0xff]
    %v372 = vld [vmem:[#allocation4 + $0x7f0] sm:$0xff]
    %v373 = vld [vmem:[#allocation4 + $0x7f8] sm:$0xff]
    %v374 = vld [vmem:[#allocation4 + $0x800] sm:$0xff]
    %v375 = vld [vmem:[#allocation4 + $0x808] sm:$0xff]
    %v376 = vld [vmem:[#allocation4 + $0x810] sm:$0xff]
    %v377 = vld [vmem:[#allocation4 + $0x818] sm:$0xff]
    %v378 = vld [vmem:[#allocation4 + $0x820] sm:$0xff]
    %v379 = vld [vmem:[#allocation4 + $0x828] sm:$0xff]
    %v380 = vld [vmem:[#allocation4 + $0x830] sm:$0xff]
    %v381 = vld [vmem:[#allocation4 + $0x838] sm:$0xff]
    %v382 = vld [vmem:[#allocation4 + $0x840] sm:$0xff]
    %v383 = vld [vmem:[#allocation4 + $0x848] sm:$0xff]
    %v384 = vld [vmem:[#allocation4 + $0x850] sm:$0xff]
    %v385 = vld [vmem:[#allocation4 + $0x858] sm:$0xff]
    %v386 = vld [vmem:[#allocation4 + $0x860] sm:$0xff]
    %v387 = vld [vmem:[#allocation4 + $0x868] sm:$0xff]
    %v388 = vld [vmem:[#allocation4 + $0x870] sm:$0xff]
    %v389 = vld [vmem:[#allocation4 + $0x878] sm:$0xff]
    %v390 = vld [vmem:[#allocation4 + $0x880] sm:$0xff]
    %v391 = vld [vmem:[#allocation4 + $0x888] sm:$0xff]
    %v392 = vld [vmem:[#allocation4 + $0x890] sm:$0xff]
    %v393 = vld [vmem:[#allocation4 + $0x898] sm:$0xff]
    %v394 = vld [vmem:[#allocation4 + $0x8a0] sm:$0xff]
    %v395 = vld [vmem:[#allocation4 + $0x8a8] sm:$0xff]
    %v396 = vld [vmem:[#allocation4 + $0x8b0] sm:$0xff]
    %v397 = vld [vmem:[#allocation4 + $0x8b8] sm:$0xff]
    %v398 = vld [vmem:[#allocation4 + $0x8c0] sm:$0xff]
    %v399 = vld [vmem:[#allocation4 + $0x8c8] sm:$0xff]
    %v400 = vld [vmem:[#allocation4 + $0x8d0] sm:$0xff]
    %v401 = vld [vmem:[#allocation4 + $0x8d8] sm:$0xff]
    %v402 = vld [vmem:[#allocation4 + $0x8e0] sm:$0xff]
    %v403 = vld [vmem:[#allocation4 + $0x8e8] sm:$0xff]
    %v404 = vld [vmem:[#allocation4 + $0x8f0] sm:$0xff]
    %v405 = vld [vmem:[#allocation4 + $0x8f8] sm:$0xff]
    %v406 = vld [vmem:[#allocation4 + $0x900] sm:$0xff]
    %v407 = vld [vmem:[#allocation4 + $0x908] sm:$0xff]
    %v408 = vld [vmem:[#allocation4 + $0x910] sm:$0xff]
    %v409 = vld [vmem:[#allocation4 + $0x918] sm:$0xff]
    %v410 = vld [vmem:[#allocation4 + $0x920] sm:$0xff]
    %v411 = vld [vmem:[#allocation4 + $0x928] sm:$0xff]
    %v412 = vld [vmem:[#allocation4 + $0x930] sm:$0xff]
    %v413 = vld [vmem:[#allocation4 + $0x938] sm:$0xff]
    %v414 = vld [vmem:[#allocation4 + $0x940] sm:$0xff]
    %v415 = vld [vmem:[#allocation4 + $0x948] sm:$0xff]
    %v416 = vld [vmem:[#allocation4 + $0x950] sm:$0xff]
    %v417 = vld [vmem:[#allocation4 + $0x958] sm:$0xff]
    %v418 = vld [vmem:[#allocation4 + $0x960] sm:$0xff]
    %v419 = vld [vmem:[#allocation4 + $0x968] sm:$0xff]
    %v420 = vld [vmem:[#allocation4 + $0x970] sm:$0xff]
    %v421 = vld [vmem:[#allocation4 + $0x978] sm:$0xff]
    %v422 = vld [vmem:[#allocation4 + $0x980] sm:$0xff]
    %v423 = vld [vmem:[#allocation4 + $0x988] sm:$0xff]
    %v424 = vld [vmem:[#allocation4 + $0x990] sm:$0xff]
    %v425 = vld [vmem:[#allocation4 + $0x998] sm:$0xff]
    %v426 = vld [vmem:[#allocation4 + $0x9a0] sm:$0xff]
    %v427 = vld [vmem:[#allocation4 + $0x9a8] sm:$0xff]
    %v428 = vld [vmem:[#allocation4 + $0x9b0] sm:$0xff]
    %v429 = vld [vmem:[#allocation4 + $0x9b8] sm:$0xff]
    %v430 = vld [vmem:[#allocation4 + $0x9c0] sm:$0xff]
    %v431 = vld [vmem:[#allocation4 + $0x9c8] sm:$0xff]
    %v432 = vld [vmem:[#allocation4 + $0x9d0] sm:$0xff]
    %v433 = vld [vmem:[#allocation4 + $0x9d8] sm:$0xff]
    %v434 = vld [vmem:[#allocation4 + $0x9e0] sm:$0xff]
    %v435 = vld [vmem:[#allocation4 + $0x9e8] sm:$0xff]
    %v436 = vld [vmem:[#allocation4 + $0x9f0] sm:$0xff]
    %v437 = vld [vmem:[#allocation4 + $0x9f8] sm:$0xff]
    %v438 = vld [vmem:[#allocation4 + $0xa00] sm:$0xff]
    %v439 = vld [vmem:[#allocation4 + $0xa08] sm:$0xff]
    %v440 = vld [vmem:[#allocation4 + $0xa10] sm:$0xff]
    %v441 = vld [vmem:[#allocation4 + $0xa18] sm:$0xff]
    %v442 = vld [vmem:[#allocation4 + $0xa20] sm:$0xff]
    %v443 = vld [vmem:[#allocation4 + $0xa28] sm:$0xff]
    %v444 = vld [vmem:[#allocation4 + $0xa30] sm:$0xff]
    %v445 = vld [vmem:[#allocation4 + $0xa38] sm:$0xff]
    %v446 = vld [vmem:[#allocation4 + $0xa40] sm:$0xff]
    %v447 = vld [vmem:[#allocation4 + $0xa48] sm:$0xff]
    %v448 = vld [vmem:[#allocation4 + $0xa50] sm:$0xff]
    %v449 = vld [vmem:[#allocation4 + $0xa58] sm:$0xff]
    %v450 = vld [vmem:[#allocation4 + $0xa60] sm:$0xff]
    %v451 = vld [vmem:[#allocation4 + $0xa68] sm:$0xff]
    %v452 = vld [vmem:[#allocation4 + $0xa70] sm:$0xff]
    %v453 = vld [vmem:[#allocation4 + $0xa78] sm:$0xff]
    %v454 = vld [vmem:[#allocation4 + $0xa80] sm:$0xff]
    %v455 = vld [vmem:[#allocation4 + $0xa88] sm:$0xff]
    %v456 = vld [vmem:[#allocation4 + $0xa90] sm:$0xff]
    %v457 = vld [vmem:[#allocation4 + $0xa98] sm:$0xff]
    %v458 = vld [vmem:[#allocation4 + $0xaa0] sm:$0xff]
    %v459 = vld [vmem:[#allocation4 + $0xaa8] sm:$0xff]
    %v460 = vld [vmem:[#allocation4 + $0xab0] sm:$0xff]
    %v461 = vld [vmem:[#allocation4 + $0xab8] sm:$0xff]
    %v462 = vld [vmem:[#allocation4 + $0xac0] sm:$0xff]
    %v463 = vld [vmem:[#allocation4 + $0xac8] sm:$0xff]
    %v464 = vld [vmem:[#allocation4 + $0xad0] sm:$0xff]
    %v465 = vld [vmem:[#allocation4 + $0xad8] sm:$0xff]
    %v466 = vld [vmem:[#allocation4 + $0xae0] sm:$0xff]
    %v467 = vld [vmem:[#allocation4 + $0xae8] sm:$0xff]
    %v468 = vld [vmem:[#allocation4 + $0xaf0] sm:$0xff]
    %v469 = vld [vmem:[#allocation4 + $0xaf8] sm:$0xff]
    %v470 = vld [vmem:[#allocation4 + $0xb00] sm:$0xff]
    %v471 = vld [vmem:[#allocation4 + $0xb08] sm:$0xff]
    %v472 = vld [vmem:[#allocation4 + $0xb10] sm:$0xff]
    %v473 = vld [vmem:[#allocation4 + $0xb18] sm:$0xff]
    %v474 = vld [vmem:[#allocation4 + $0xb20] sm:$0xff]
    %v475 = vld [vmem:[#allocation4 + $0xb28] sm:$0xff]
    %v476 = vld [vmem:[#allocation4 + $0xb30] sm:$0xff]
    %v477 = vld [vmem:[#allocation4 + $0xb38] sm:$0xff]
    %v478 = vld [vmem:[#allocation4 + $0xb40] sm:$0xff]
    %v479 = vld [vmem:[#allocation4 + $0xb48] sm:$0xff]
    %v480 = vld [vmem:[#allocation4 + $0xb50] sm:$0xff]
    %v481 = vld [vmem:[#allocation4 + $0xb58] sm:$0xff]
    %v482 = vld [vmem:[#allocation4 + $0xb60] sm:$0xff]
    %v483 = vld [vmem:[#allocation4 + $0xb68] sm:$0xff]
    %v484 = vld [vmem:[#allocation4 + $0xb70] sm:$0xff]
    %v485 = vld [vmem:[#allocation4 + $0xb78] sm:$0xff]
    %v486 = vld [vmem:[#allocation4 + $0xb80] sm:$0xff]
    %v487 = vld [vmem:[#allocation4 + $0xb88] sm:$0xff]
    %v488 = vld [vmem:[#allocation4 + $0xb90] sm:$0xff]
    %v489 = vld [vmem:[#allocation4 + $0xb98] sm:$0xff]
    %v490 = vld [vmem:[#allocation4 + $0xba0] sm:$0xff]
    %v491 = vld [vmem:[#allocation4 + $0xba8] sm:$0xff]
    %v492 = vld [vmem:[#allocation4 + $0xbb0] sm:$0xff]
    %v493 = vld [vmem:[#allocation4 + $0xbb8] sm:$0xff]
    %v494 = vld [vmem:[#allocation4 + $0xbc0] sm:$0xff]
    %v495 = vld [vmem:[#allocation4 + $0xbc8] sm:$0xff]
    %v496 = vld [vmem:[#allocation4 + $0xbd0] sm:$0xff]
    %v497 = vld [vmem:[#allocation4 + $0xbd8] sm:$0xff]
    %v498 = vld [vmem:[#allocation4 + $0xbe0] sm:$0xff]
    %v499 = vld [vmem:[#allocation4 + $0xbe8] sm:$0xff]
    %v500 = vld [vmem:[#allocation4 + $0xbf0] sm:$0xff]
    %v501 = vld [vmem:[#allocation4 + $0xbf8] sm:$0xff]
    %v502 = vld [vmem:[#allocation4 + $0xc00] sm:$0xff]
    %v503 = vld [vmem:[#allocation4 + $0xc08] sm:$0xff]
    %v504 = vld [vmem:[#allocation4 + $0xc10] sm:$0xff]
    %v505 = vld [vmem:[#allocation4 + $0xc18] sm:$0xff]
    %v506 = vld [vmem:[#allocation4 + $0xc20] sm:$0xff]
    %v507 = vld [vmem:[#allocation4 + $0xc28] sm:$0xff]
    %v508 = vld [vmem:[#allocation4 + $0xc30] sm:$0xff]
    %v509 = vld [vmem:[#allocation4 + $0xc38] sm:$0xff]
    %v510 = vld [vmem:[#allocation4 + $0xc40] sm:$0xff]
    %v511 = vld [vmem:[#allocation4 + $0xc48] sm:$0xff]
    %v512 = vld [vmem:[#allocation4 + $0xc50] sm:$0xff]
    %v513 = vld [vmem:[#allocation4 + $0xc58] sm:$0xff]
    %v514 = vld [vmem:[#allocation4 + $0xc60] sm:$0xff]
    %v515 = vld [vmem:[#allocation4 + $0xc68] sm:$0xff]
    %v516 = vld [vmem:[#allocation4 + $0xc70] sm:$0xff]
    %v517 = vld [vmem:[#allocation4 + $0xc78] sm:$0xff]
    %v518 = vld [vmem:[#allocation4 + $0xc80] sm:$0xff]
    %v519 = vld [vmem:[#allocation4 + $0xc88] sm:$0xff]
    %v520 = vld [vmem:[#allocation4 + $0xc90] sm:$0xff]
    %v521 = vld [vmem:[#allocation4 + $0xc98] sm:$0xff]
    %v522 = vld [vmem:[#allocation4 + $0xca0] sm:$0xff]
    %v523 = vld [vmem:[#allocation4 + $0xca8] sm:$0xff]
    %v524 = vld [vmem:[#allocation4 + $0xcb0] sm:$0xff]
    %v525 = vld [vmem:[#allocation4 + $0xcb8] sm:$0xff]
    %v526 = vld [vmem:[#allocation4 + $0xcc0] sm:$0xff]
    %v527 = vld [vmem:[#allocation4 + $0xcc8] sm:$0xff]
    %v528 = vld [vmem:[#allocation4 + $0xcd0] sm:$0xff]
    %v529 = vld [vmem:[#allocation4 + $0xcd8] sm:$0xff]
    %v530 = vld [vmem:[#allocation4 + $0xce0] sm:$0xff]
    %v531 = vld [vmem:[#allocation4 + $0xce8] sm:$0xff]
    %v532 = vld [vmem:[#allocation4 + $0xcf0] sm:$0xff]
    %v533 = vld [vmem:[#allocation4 + $0xcf8] sm:$0xff]
    %v534 = vld [vmem:[#allocation4 + $0xd00] sm:$0xff]
    %v535 = vld [vmem:[#allocation4 + $0xd08] sm:$0xff]
    %v536 = vld [vmem:[#allocation4 + $0xd10] sm:$0xff]
    %v537 = vld [vmem:[#allocation4 + $0xd18] sm:$0xff]
    %v538 = vld [vmem:[#allocation4 + $0xd20] sm:$0xff]
    %v539 = vld [vmem:[#allocation4 + $0xd28] sm:$0xff]
    %v540 = vld [vmem:[#allocation4 + $0xd30] sm:$0xff]
    %v541 = vld [vmem:[#allocation4 + $0xd38] sm:$0xff]
    %v542 = vld [vmem:[#allocation4 + $0xd40] sm:$0xff]
    %v543 = vld [vmem:[#allocation4 + $0xd48] sm:$0xff]
    %v544 = vld [vmem:[#allocation4 + $0xd50] sm:$0xff]
    %v545 = vld [vmem:[#allocation4 + $0xd58] sm:$0xff]
    %v546 = vld [vmem:[#allocation4 + $0xd60] sm:$0xff]
    %v547 = vld [vmem:[#allocation4 + $0xd68] sm:$0xff]
    %v548 = vld [vmem:[#allocation4 + $0xd70] sm:$0xff]
    %v549 = vld [vmem:[#allocation4 + $0xd78] sm:$0xff]
    %v550 = vld [vmem:[#allocation4 + $0xd80] sm:$0xff]
    %v551 = vld [vmem:[#allocation4 + $0xd88] sm:$0xff]
    %v552 = vld [vmem:[#allocation4 + $0xd90] sm:$0xff]
    %v553 = vld [vmem:[#allocation4 + $0xd98] sm:$0xff]
    %v554 = vld [vmem:[#allocation4 + $0xda0] sm:$0xff]
    %v555 = vld [vmem:[#allocation4 + $0xda8] sm:$0xff]
    %v556 = vld [vmem:[#allocation4 + $0xdb0] sm:$0xff]
    %v557 = vld [vmem:[#allocation4 + $0xdb8] sm:$0xff]
    %v558 = vld [vmem:[#allocation4 + $0xdc0] sm:$0xff]
    %v559 = vld [vmem:[#allocation4 + $0xdc8] sm:$0xff]
    %v560 = vld [vmem:[#allocation4 + $0xdd0] sm:$0xff]
    %v561 = vld [vmem:[#allocation4 + $0xdd8] sm:$0xff]
    %v562 = vld [vmem:[#allocation4 + $0xde0] sm:$0xff]
    %v563 = vld [vmem:[#allocation4 + $0xde8] sm:$0xff]
    %v564 = vld [vmem:[#allocation4 + $0xdf0] sm:$0xff]
    %v565 = vld [vmem:[#allocation4 + $0xdf8] sm:$0xff]
    %v566 = vld [vmem:[#allocation4 + $0xe00] sm:$0xff]
    %v567 = vld [vmem:[#allocation4 + $0xe08] sm:$0xff]
    %v568 = vld [vmem:[#allocation4 + $0xe10] sm:$0xff]
    %v569 = vld [vmem:[#allocation4 + $0xe18] sm:$0xff]
    %v570 = vld [vmem:[#allocation4 + $0xe20] sm:$0xff]
    %v571 = vld [vmem:[#allocation4 + $0xe28] sm:$0xff]
    %v572 = vld [vmem:[#allocation4 + $0xe30] sm:$0xff]
    %v573 = vld [vmem:[#allocation4 + $0xe38] sm:$0xff]
    %v574 = vld [vmem:[#allocation4 + $0xe40] sm:$0xff]
    %v575 = vld [vmem:[#allocation4 + $0xe48] sm:$0xff]
    %v576 = vld [vmem:[#allocation4 + $0xe50] sm:$0xff]
    %v577 = vld [vmem:[#allocation4 + $0xe58] sm:$0xff]
    %v578 = vld [vmem:[#allocation4 + $0xe60] sm:$0xff]
    %v579 = vld [vmem:[#allocation4 + $0xe68] sm:$0xff]
    %v580 = vld [vmem:[#allocation4 + $0xe70] sm:$0xff]
    %v581 = vld [vmem:[#allocation4 + $0xe78] sm:$0xff]
    %v582 = vld [vmem:[#allocation4 + $0xe80] sm:$0xff]
    %v583 = vld [vmem:[#allocation4 + $0xe88] sm:$0xff]
    %v584 = vld [vmem:[#allocation4 + $0xe90] sm:$0xff]
    %v585 = vld [vmem:[#allocation4 + $0xe98] sm:$0xff]
    %v586 = vld [vmem:[#allocation4 + $0xea0] sm:$0xff]
    %v587 = vld [vmem:[#allocation4 + $0xea8] sm:$0xff]
    %v588 = vld [vmem:[#allocation4 + $0xeb0] sm:$0xff]
    %v589 = vld [vmem:[#allocation4 + $0xeb8] sm:$0xff]
    %v590 = vld [vmem:[#allocation4 + $0xec0] sm:$0xff]
    %v591 = vld [vmem:[#allocation4 + $0xec8] sm:$0xff]
    %v592 = vld [vmem:[#allocation4 + $0xed0] sm:$0xff]
    %v593 = vld [vmem:[#allocation4 + $0xed8] sm:$0xff]
    %v594 = vld [vmem:[#allocation4 + $0xee0] sm:$0xff]
    %v595 = vld [vmem:[#allocation4 + $0xee8] sm:$0xff]
    %v596 = vld [vmem:[#allocation4 + $0xef0] sm:$0xff]
    %v597 = vld [vmem:[#allocation4 + $0xef8] sm:$0xff]
    %v598 = vld [vmem:[#allocation4 + $0xf00] sm:$0xff]
    %v599 = vld [vmem:[#allocation4 + $0xf08] sm:$0xff]
    %v600 = vld [vmem:[#allocation4 + $0xf10] sm:$0xff]
    %v601 = vld [vmem:[#allocation4 + $0xf18] sm:$0xff]
    %v602 = vld [vmem:[#allocation4 + $0xf20] sm:$0xff]
    %v603 = vld [vmem:[#allocation4 + $0xf28] sm:$0xff]
    %v604 = vld [vmem:[#allocation4 + $0xf30] sm:$0xff]
    %v605 = vld [vmem:[#allocation4 + $0xf38] sm:$0xff]
    %v606 = vld [vmem:[#allocation4 + $0xf40] sm:$0xff]
    %v607 = vld [vmem:[#allocation4 + $0xf48] sm:$0xff]
    %v608 = vld [vmem:[#allocation4 + $0xf50] sm:$0xff]
    %v609 = vld [vmem:[#allocation4 + $0xf58] sm:$0xff]
    %v610 = vld [vmem:[#allocation4 + $0xf60] sm:$0xff]
    %v611 = vld [vmem:[#allocation4 + $0xf68] sm:$0xff]
    %v612 = vld [vmem:[#allocation4 + $0xf70] sm:$0xff]
    %v613 = vld [vmem:[#allocation4 + $0xf78] sm:$0xff]
    %v614 = vld [vmem:[#allocation4 + $0xf80] sm:$0xff]
    %v615 = vld [vmem:[#allocation4 + $0xf88] sm:$0xff]
    %v616 = vld [vmem:[#allocation4 + $0xf90] sm:$0xff]
    %v617 = vld [vmem:[#allocation4 + $0xf98] sm:$0xff]
    %v618 = vld [vmem:[#allocation4 + $0xfa0] sm:$0xff]
    %v619 = vld [vmem:[#allocation4 + $0xfa8] sm:$0xff]
    %v620 = vld [vmem:[#allocation4 + $0xfb0] sm:$0xff]
    %v621 = vld [vmem:[#allocation4 + $0xfb8] sm:$0xff]
    %v622 = vld [vmem:[#allocation4 + $0xfc0] sm:$0xff]
    %v623 = vld [vmem:[#allocation4 + $0xfc8] sm:$0xff]
    %v624 = vld [vmem:[#allocation4 + $0xfd0] sm:$0xff]
    %v625 = vld [vmem:[#allocation4 + $0xfd8] sm:$0xff]
    %v626 = vld [vmem:[#allocation4 + $0xfe0] sm:$0xff]
    %v627 = vld [vmem:[#allocation4 + $0xfe8] sm:$0xff]
    %v628 = vld [vmem:[#allocation4 + $0xff0] sm:$0xff]
    %v629 = vld [vmem:[#allocation4 + $0xff8] sm:$0xff]
    %v630 = vld [vmem:[#allocation4 + $0x1000] sm:$0xff]
    %v631 = vld [vmem:[#allocation4 + $0x1008] sm:$0xff]
    %v632 = vld [vmem:[#allocation4 + $0x1010] sm:$0xff]
    %v633 = vld [vmem:[#allocation4 + $0x1018] sm:$0xff]
    %v634 = vld [vmem:[#allocation4 + $0x1020] sm:$0xff]
    %v635 = vld [vmem:[#allocation4 + $0x1028] sm:$0xff]
    %v636 = vld [vmem:[#allocation4 + $0x1030] sm:$0xff]
    %v637 = vld [vmem:[#allocation4 + $0x1038] sm:$0xff]
    %v638 = vld [vmem:[#allocation4 + $0x1040] sm:$0xff]
    %v639 = vld [vmem:[#allocation4 + $0x1048] sm:$0xff]
    %v640 = vld [vmem:[#allocation4 + $0x1050] sm:$0xff]
    %v641 = vld [vmem:[#allocation4 + $0x1058] sm:$0xff]
    %v642 = vld [vmem:[#allocation4 + $0x1060] sm:$0xff]
    %v643 = vld [vmem:[#allocation4 + $0x1068] sm:$0xff]
    %v644 = vld [vmem:[#allocation4 + $0x1070] sm:$0xff]
    %v645 = vld [vmem:[#allocation4 + $0x1078] sm:$0xff]
    %v646 = vld [vmem:[#allocation4 + $0x1080] sm:$0xff]
    %v647 = vld [vmem:[#allocation4 + $0x1088] sm:$0xff]
    %v648 = vld [vmem:[#allocation4 + $0x1090] sm:$0xff]
    %v649 = vld [vmem:[#allocation4 + $0x1098] sm:$0xff]
    %v650 = vld [vmem:[#allocation4 + $0x10a0] sm:$0xff]
    %v651 = vld [vmem:[#allocation4 + $0x10a8] sm:$0xff]
    %v652 = vld [vmem:[#allocation4 + $0x10b0] sm:$0xff]
    %v653 = vld [vmem:[#allocation4 + $0x10b8] sm:$0xff]
    %v654 = vld [vmem:[#allocation4 + $0x10c0] sm:$0xff]
    %v655 = vld [vmem:[#allocation4 + $0x10c8] sm:$0xff]
    %v656 = vld [vmem:[#allocation4 + $0x10d0] sm:$0xff]
    %v657 = vld [vmem:[#allocation4 + $0x10d8] sm:$0xff]
    %v658 = vld [vmem:[#allocation4 + $0x10e0] sm:$0xff]
    %v659 = vld [vmem:[#allocation4 + $0x10e8] sm:$0xff]
    %v660 = vld [vmem:[#allocation4 + $0x10f0] sm:$0xff]
    %v661 = vld [vmem:[#allocation4 + $0x10f8] sm:$0xff]
    %v662 = vld [vmem:[#allocation4 + $0x1100] sm:$0xff]
    %v663 = vld [vmem:[#allocation4 + $0x1108] sm:$0xff]
    %v664 = vld [vmem:[#allocation4 + $0x1110] sm:$0xff]
    %v665 = vld [vmem:[#allocation4 + $0x1118] sm:$0xff]
    %v666 = vld [vmem:[#allocation4 + $0x1120] sm:$0xff]
    %v667 = vld [vmem:[#allocation4 + $0x1128] sm:$0xff]
    %v668 = vld [vmem:[#allocation4 + $0x1130] sm:$0xff]
    %v669 = vld [vmem:[#allocation4 + $0x1138] sm:$0xff]
    %v670 = vld [vmem:[#allocation4 + $0x1140] sm:$0xff]
    %v671 = vld [vmem:[#allocation4 + $0x1148] sm:$0xff]
    %v672 = vld [vmem:[#allocation4 + $0x1150] sm:$0xff]
    %v673 = vld [vmem:[#allocation4 + $0x1158] sm:$0xff]
    %v674 = vld [vmem:[#allocation4 + $0x1160] sm:$0xff]
    %v675 = vld [vmem:[#allocation4 + $0x1168] sm:$0xff]
    %v676 = vld [vmem:[#allocation4 + $0x1170] sm:$0xff]
    %v677 = vld [vmem:[#allocation4 + $0x1178] sm:$0xff]
    %v678 = vld [vmem:[#allocation4 + $0x1180] sm:$0xff]
    %v679 = vld [vmem:[#allocation4 + $0x1188] sm:$0xff]
    %v680 = vld [vmem:[#allocation4 + $0x1190] sm:$0xff]
    %v681 = vld [vmem:[#allocation4 + $0x1198] sm:$0xff]
    %v682 = vld [vmem:[#allocation4 + $0x11a0] sm:$0xff]
    %v683 = vld [vmem:[#allocation4 + $0x11a8] sm:$0xff]
    %v684 = vld [vmem:[#allocation4 + $0x11b0] sm:$0xff]
    %v685 = vld [vmem:[#allocation4 + $0x11b8] sm:$0xff]
    %v686 = vld [vmem:[#allocation4 + $0x11c0] sm:$0xff]
    %v687 = vld [vmem:[#allocation4 + $0x11c8] sm:$0xff]
    %v688 = vld [vmem:[#allocation4 + $0x11d0] sm:$0xff]
    %v689 = vld [vmem:[#allocation4 + $0x11d8] sm:$0xff]
    %v690 = vld [vmem:[#allocation4 + $0x11e0] sm:$0xff]
    %v691 = vld [vmem:[#allocation4 + $0x11e8] sm:$0xff]
    %v692 = vld [vmem:[#allocation4 + $0x11f0] sm:$0xff]
    %v693 = vld [vmem:[#allocation4 + $0x11f8] sm:$0xff]
    %v694 = vld [vmem:[#allocation4 + $0x1200] sm:$0xff]
    %v695 = vld [vmem:[#allocation4 + $0x1208] sm:$0xff]
    %v696 = vld [vmem:[#allocation4 + $0x1210] sm:$0xff]
    %v697 = vld [vmem:[#allocation4 + $0x1218] sm:$0xff]
    %v698 = vld [vmem:[#allocation4 + $0x1220] sm:$0xff]
    %v699 = vld [vmem:[#allocation4 + $0x1228] sm:$0xff]
    %v700 = vld [vmem:[#allocation4 + $0x1230] sm:$0xff]
    %v701 = vld [vmem:[#allocation4 + $0x1238] sm:$0xff]
    %v702 = vld [vmem:[#allocation4 + $0x1240] sm:$0xff]
    %v703 = vld [vmem:[#allocation4 + $0x1248] sm:$0xff]
    %v704 = vld [vmem:[#allocation4 + $0x1250] sm:$0xff]
    %v705 = vld [vmem:[#allocation4 + $0x1258] sm:$0xff]
    %v706 = vld [vmem:[#allocation4 + $0x1260] sm:$0xff]
    %v707 = vld [vmem:[#allocation4 + $0x1268] sm:$0xff]
    %v708 = vld [vmem:[#allocation4 + $0x1270] sm:$0xff]
    %v709 = vld [vmem:[#allocation4 + $0x1278] sm:$0xff]
    %v710 = vld [vmem:[#allocation4 + $0x1280] sm:$0xff]
    %v711 = vld [vmem:[#allocation4 + $0x1288] sm:$0xff]
    %v712 = vld [vmem:[#allocation4 + $0x1290] sm:$0xff]
    %v713 = vld [vmem:[#allocation4 + $0x1298] sm:$0xff]
    %v714 = vld [vmem:[#allocation4 + $0x12a0] sm:$0xff]
    %v715 = vld [vmem:[#allocation4 + $0x12a8] sm:$0xff]
    %v716 = vld [vmem:[#allocation4 + $0x12b0] sm:$0xff]
    %v717 = vld [vmem:[#allocation4 + $0x12b8] sm:$0xff]
    %v718 = vld [vmem:[#allocation4 + $0x12c0] sm:$0xff]
    %v719 = vld [vmem:[#allocation4 + $0x12c8] sm:$0xff]
    %v720 = vld [vmem:[#allocation4 + $0x12d0] sm:$0xff]
    %v721 = vld [vmem:[#allocation4 + $0x12d8] sm:$0xff]
    %v722 = vld [vmem:[#allocation4 + $0x12e0] sm:$0xff]
    %v723 = vld [vmem:[#allocation4 + $0x12e8] sm:$0xff]
    %v724 = vld [vmem:[#allocation4 + $0x12f0] sm:$0xff]
    %v725 = vld [vmem:[#allocation4 + $0x12f8] sm:$0xff]
    %v726 = vld [vmem:[#allocation4 + $0x1300] sm:$0xff]
    %v727 = vld [vmem:[#allocation4 + $0x1308] sm:$0xff]
    %v728 = vld [vmem:[#allocation4 + $0x1310] sm:$0xff]
    %v729 = vld [vmem:[#allocation4 + $0x1318] sm:$0xff]
    %v730 = vld [vmem:[#allocation4 + $0x1320] sm:$0xff]
    %v731 = vld [vmem:[#allocation4 + $0x1328] sm:$0xff]
    %v732 = vld [vmem:[#allocation4 + $0x1330] sm:$0xff]
    %v733 = vld [vmem:[#allocation4 + $0x1338] sm:$0xff]
    %v734 = vld [vmem:[#allocation4 + $0x1340] sm:$0xff]
    %v735 = vld [vmem:[#allocation4 + $0x1348] sm:$0xff]
    %v736 = vld [vmem:[#allocation4 + $0x1350] sm:$0xff]
    %v737 = vld [vmem:[#allocation4 + $0x1358] sm:$0xff]
    %v738 = vld [vmem:[#allocation4 + $0x1360] sm:$0xff]
    %v739 = vld [vmem:[#allocation4 + $0x1368] sm:$0xff]
    %v740 = vld [vmem:[#allocation4 + $0x1370] sm:$0xff]
    %v741 = vld [vmem:[#allocation4 + $0x1378] sm:$0xff]
    %v742 = vld [vmem:[#allocation4 + $0x1380] sm:$0xff]
    %v743 = vld [vmem:[#allocation4 + $0x1388] sm:$0xff]
    %v744 = vld [vmem:[#allocation4 + $0x1390] sm:$0xff]
    %v745 = vld [vmem:[#allocation4 + $0x1398] sm:$0xff]
    %v746 = vld [vmem:[#allocation4 + $0x13a0] sm:$0xff]
    %v747 = vld [vmem:[#allocation4 + $0x13a8] sm:$0xff]
    %v748 = vld [vmem:[#allocation4 + $0x13b0] sm:$0xff]
    %v749 = vld [vmem:[#allocation4 + $0x13b8] sm:$0xff]
    %v750 = vld [vmem:[#allocation4 + $0x13c0] sm:$0xff]
    %v751 = vld [vmem:[#allocation4 + $0x13c8] sm:$0xff]
    %v752 = vld [vmem:[#allocation4 + $0x13d0] sm:$0xff]
    %v753 = vld [vmem:[#allocation4 + $0x13d8] sm:$0xff]
    %v754 = vld [vmem:[#allocation4 + $0x13e0] sm:$0xff]
    %v755 = vld [vmem:[#allocation4 + $0x13e8] sm:$0xff]
    %v756 = vld [vmem:[#allocation4 + $0x13f0] sm:$0xff]
    %v757 = vld [vmem:[#allocation4 + $0x13f8] sm:$0xff]
    %v758 = vld [vmem:[#allocation4 + $0x1400] sm:$0xff]
    %v759 = vld [vmem:[#allocation4 + $0x1408] sm:$0xff]
    %v760 = vld [vmem:[#allocation4 + $0x1410] sm:$0xff]
    %v761 = vld [vmem:[#allocation4 + $0x1418] sm:$0xff]
    %v762 = vld [vmem:[#allocation4 + $0x1420] sm:$0xff]
    %v763 = vld [vmem:[#allocation4 + $0x1428] sm:$0xff]
    %v764 = vld [vmem:[#allocation4 + $0x1430] sm:$0xff]
    %v765 = vld [vmem:[#allocation4 + $0x1438] sm:$0xff]
    %v766 = vld [vmem:[#allocation4 + $0x1440] sm:$0xff]
    %v767 = vld [vmem:[#allocation4 + $0x1448] sm:$0xff]
    %v768 = vld [vmem:[#allocation4 + $0x1450] sm:$0xff]
    %v769 = vld [vmem:[#allocation4 + $0x1458] sm:$0xff]
    %v770 = vld [vmem:[#allocation4 + $0x1460] sm:$0xff]
    %v771 = vld [vmem:[#allocation4 + $0x1468] sm:$0xff]
    %v772 = vld [vmem:[#allocation4 + $0x1470] sm:$0xff]
    %v773 = vld [vmem:[#allocation4 + $0x1478] sm:$0xff]
    %v774 = vld [vmem:[#allocation4 + $0x1480] sm:$0xff]
    %v775 = vld [vmem:[#allocation4 + $0x1488] sm:$0xff]
    %v776 = vld [vmem:[#allocation4 + $0x1490] sm:$0xff]
    %v777 = vld [vmem:[#allocation4 + $0x1498] sm:$0xff]
    %v778 = vld [vmem:[#allocation4 + $0x14a0] sm:$0xff]
    %v779 = vld [vmem:[#allocation4 + $0x14a8] sm:$0xff]
    %v780 = vld [vmem:[#allocation4 + $0x14b0] sm:$0xff]
    %v781 = vld [vmem:[#allocation4 + $0x14b8] sm:$0xff]
    %v782 = vld [vmem:[#allocation4 + $0x14c0] sm:$0xff]
    %v783 = vld [vmem:[#allocation4 + $0x14c8] sm:$0xff]
    %v784 = vld [vmem:[#allocation4 + $0x14d0] sm:$0xff]
    %v785 = vld [vmem:[#allocation4 + $0x14d8] sm:$0xff]
    %v786 = vld [vmem:[#allocation4 + $0x14e0] sm:$0xff]
    %v787 = vld [vmem:[#allocation4 + $0x14e8] sm:$0xff]
    %v788 = vld [vmem:[#allocation4 + $0x14f0] sm:$0xff]
    %v789 = vld [vmem:[#allocation4 + $0x14f8] sm:$0xff]
    %v790 = vld [vmem:[#allocation4 + $0x1500] sm:$0xff]
    %v791 = vld [vmem:[#allocation4 + $0x1508] sm:$0xff]
    %v792 = vld [vmem:[#allocation4 + $0x1510] sm:$0xff]
    %v793 = vld [vmem:[#allocation4 + $0x1518] sm:$0xff]
    %v794 = vld [vmem:[#allocation4 + $0x1520] sm:$0xff]
    %v795 = vld [vmem:[#allocation4 + $0x1528] sm:$0xff]
    %v796 = vld [vmem:[#allocation4 + $0x1530] sm:$0xff]
    %v797 = vld [vmem:[#allocation4 + $0x1538] sm:$0xff]
    %v798 = vld [vmem:[#allocation4 + $0x1540] sm:$0xff]
    %v799 = vld [vmem:[#allocation4 + $0x1548] sm:$0xff]
    %v800 = vld [vmem:[#allocation4 + $0x1550] sm:$0xff]
    %v801 = vld [vmem:[#allocation4 + $0x1558] sm:$0xff]
    %v802 = vld [vmem:[#allocation4 + $0x1560] sm:$0xff]
    %v803 = vld [vmem:[#allocation4 + $0x1568] sm:$0xff]
    %v804 = vld [vmem:[#allocation4 + $0x1570] sm:$0xff]
    %v805 = vld [vmem:[#allocation4 + $0x1578] sm:$0xff]
    %v806 = vld [vmem:[#allocation4 + $0x1580] sm:$0xff]
    %v807 = vld [vmem:[#allocation4 + $0x1588] sm:$0xff]
    %v808 = vld [vmem:[#allocation4 + $0x1590] sm:$0xff]
    %v809 = vld [vmem:[#allocation4 + $0x1598] sm:$0xff]
    %v810 = vld [vmem:[#allocation4 + $0x15a0] sm:$0xff]
    %v811 = vld [vmem:[#allocation4 + $0x15a8] sm:$0xff]
    %v812 = vld [vmem:[#allocation4 + $0x15b0] sm:$0xff]
    %v813 = vld [vmem:[#allocation4 + $0x15b8] sm:$0xff]
    %v814 = vld [vmem:[#allocation4 + $0x15c0] sm:$0xff]
    %v815 = vld [vmem:[#allocation4 + $0x15c8] sm:$0xff]
    %v816 = vld [vmem:[#allocation4 + $0x15d0] sm:$0xff]
    %v817 = vld [vmem:[#allocation4 + $0x15d8] sm:$0xff]
    %v818 = vld [vmem:[#allocation4 + $0x15e0] sm:$0xff]
    %v819 = vld [vmem:[#allocation4 + $0x15e8] sm:$0xff]
    %v820 = vld [vmem:[#allocation4 + $0x15f0] sm:$0xff]
    %v821 = vld [vmem:[#allocation4 + $0x15f8] sm:$0xff]
    %v822 = vld [vmem:[#allocation4 + $0x1600] sm:$0xff]
    %v823 = vld [vmem:[#allocation4 + $0x1608] sm:$0xff]
    %v824 = vld [vmem:[#allocation4 + $0x1610] sm:$0xff]
    %v825 = vld [vmem:[#allocation4 + $0x1618] sm:$0xff]
    %v826 = vld [vmem:[#allocation4 + $0x1620] sm:$0xff]
    %v827 = vld [vmem:[#allocation4 + $0x1628] sm:$0xff]
    %v828 = vld [vmem:[#allocation4 + $0x1630] sm:$0xff]
    %v829 = vld [vmem:[#allocation4 + $0x1638] sm:$0xff]
    %v830 = vld [vmem:[#allocation4 + $0x1640] sm:$0xff]
    %v831 = vld [vmem:[#allocation4 + $0x1648] sm:$0xff]
    %v832 = vld [vmem:[#allocation4 + $0x1650] sm:$0xff]
    %v833 = vld [vmem:[#allocation4 + $0x1658] sm:$0xff]
    %v834 = vld [vmem:[#allocation4 + $0x1660] sm:$0xff]
    %v835 = vld [vmem:[#allocation4 + $0x1668] sm:$0xff]
    %v836 = vld [vmem:[#allocation4 + $0x1670] sm:$0xff]
    %v837 = vld [vmem:[#allocation4 + $0x1678] sm:$0xff]
    %v838 = vld [vmem:[#allocation4 + $0x1680] sm:$0xff]
    %v839 = vld [vmem:[#allocation4 + $0x1688] sm:$0xff]
    %v840 = vld [vmem:[#allocation4 + $0x1690] sm:$0xff]
    %v841 = vld [vmem:[#allocation4 + $0x1698] sm:$0xff]
    %v842 = vld [vmem:[#allocation4 + $0x16a0] sm:$0xff]
    %v843 = vld [vmem:[#allocation4 + $0x16a8] sm:$0xff]
    %v844 = vld [vmem:[#allocation4 + $0x16b0] sm:$0xff]
    %v845 = vld [vmem:[#allocation4 + $0x16b8] sm:$0xff]
    %v846 = vld [vmem:[#allocation4 + $0x16c0] sm:$0xff]
    %v847 = vld [vmem:[#allocation4 + $0x16c8] sm:$0xff]
    %v848 = vld [vmem:[#allocation4 + $0x16d0] sm:$0xff]
    %v849 = vld [vmem:[#allocation4 + $0x16d8] sm:$0xff]
    %v850 = vld [vmem:[#allocation4 + $0x16e0] sm:$0xff]
    %v851 = vld [vmem:[#allocation4 + $0x16e8] sm:$0xff]
    %v852 = vld [vmem:[#allocation4 + $0x16f0] sm:$0xff]
    %v853 = vld [vmem:[#allocation4 + $0x16f8] sm:$0xff]
    %v854 = vld [vmem:[#allocation4 + $0x1700] sm:$0xff]
    %v855 = vld [vmem:[#allocation4 + $0x1708] sm:$0xff]
    %v856 = vld [vmem:[#allocation4 + $0x1710] sm:$0xff]
    %v857 = vld [vmem:[#allocation4 + $0x1718] sm:$0xff]
    %v858 = vld [vmem:[#allocation4 + $0x1720] sm:$0xff]
    %v859 = vld [vmem:[#allocation4 + $0x1728] sm:$0xff]
    %v860 = vld [vmem:[#allocation4 + $0x1730] sm:$0xff]
    %v861 = vld [vmem:[#allocation4 + $0x1738] sm:$0xff]
    %v862 = vld [vmem:[#allocation4 + $0x1740] sm:$0xff]
    %v863 = vld [vmem:[#allocation4 + $0x1748] sm:$0xff]
    %v864 = vld [vmem:[#allocation4 + $0x1750] sm:$0xff]
    %v865 = vld [vmem:[#allocation4 + $0x1758] sm:$0xff]
    %v866 = vld [vmem:[#allocation4 + $0x1760] sm:$0xff]
    %v867 = vld [vmem:[#allocation4 + $0x1768] sm:$0xff]
    %v868 = vld [vmem:[#allocation4 + $0x1770] sm:$0xff]
    %v869 = vld [vmem:[#allocation4 + $0x1778] sm:$0xff]
    %v870 = vld [vmem:[#allocation4 + $0x1780] sm:$0xff]
    %v871 = vld [vmem:[#allocation4 + $0x1788] sm:$0xff]
    %v872 = vld [vmem:[#allocation4 + $0x1790] sm:$0xff]
    %v873 = vld [vmem:[#allocation4 + $0x1798] sm:$0xff]
    %v874 = vld [vmem:[#allocation4 + $0x17a0] sm:$0xff]
    %v875 = vld [vmem:[#allocation4 + $0x17a8] sm:$0xff]
    %v876 = vld [vmem:[#allocation4 + $0x17b0] sm:$0xff]
    %v877 = vld [vmem:[#allocation4 + $0x17b8] sm:$0xff]
    %v878 = vld [vmem:[#allocation4 + $0x17c0] sm:$0xff]
    %v879 = vld [vmem:[#allocation4 + $0x17c8] sm:$0xff]
    %v880 = vld [vmem:[#allocation4 + $0x17d0] sm:$0xff]
    %v881 = vld [vmem:[#allocation4 + $0x17d8] sm:$0xff]
    %v882 = vld [vmem:[#allocation4 + $0x17e0] sm:$0xff]
    %v883 = vld [vmem:[#allocation4 + $0x17e8] sm:$0xff]
    %v884 = vld [vmem:[#allocation4 + $0x17f0] sm:$0xff]
    %v885 = vld [vmem:[#allocation4 + $0x17f8] sm:$0xff]
    %v886 = vld [vmem:[#allocation4 + $0x1800] sm:$0xff]
    %v887 = vld [vmem:[#allocation4 + $0x1808] sm:$0xff]
    %v888 = vld [vmem:[#allocation4 + $0x1810] sm:$0xff]
    %v889 = vld [vmem:[#allocation4 + $0x1818] sm:$0xff]
    %v890 = vld [vmem:[#allocation4 + $0x1820] sm:$0xff]
    %v891 = vld [vmem:[#allocation4 + $0x1828] sm:$0xff]
    %v892 = vld [vmem:[#allocation4 + $0x1830] sm:$0xff]
    %v893 = vld [vmem:[#allocation4 + $0x1838] sm:$0xff]
    %v894 = vld [vmem:[#allocation4 + $0x1840] sm:$0xff]
    %v895 = vld [vmem:[#allocation4 + $0x1848] sm:$0xff]
    %v896 = vld [vmem:[#allocation4 + $0x1850] sm:$0xff]
    %v897 = vld [vmem:[#allocation4 + $0x1858] sm:$0xff]
    %v898 = vld [vmem:[#allocation4 + $0x1860] sm:$0xff]
    %v899 = vld [vmem:[#allocation4 + $0x1868] sm:$0xff]
    %v900 = vld [vmem:[#allocation4 + $0x1870] sm:$0xff]
    %v901 = vld [vmem:[#allocation4 + $0x1878] sm:$0xff]
    %v902 = vld [vmem:[#allocation4 + $0x1880] sm:$0xff]
    %v903 = vld [vmem:[#allocation4 + $0x1888] sm:$0xff]
    %v904 = vld [vmem:[#allocation4 + $0x1890] sm:$0xff]
    %v905 = vld [vmem:[#allocation4 + $0x1898] sm:$0xff]
    %v906 = vld [vmem:[#allocation4 + $0x18a0] sm:$0xff]
    %v907 = vld [vmem:[#allocation4 + $0x18a8] sm:$0xff]
    %v908 = vld [vmem:[#allocation4 + $0x18b0] sm:$0xff]
    %v909 = vld [vmem:[#allocation4 + $0x18b8] sm:$0xff]
    %v910 = vld [vmem:[#allocation4 + $0x18c0] sm:$0xff]
    %v911 = vld [vmem:[#allocation4 + $0x18c8] sm:$0xff]
    %v912 = vld [vmem:[#allocation4 + $0x18d0] sm:$0xff]
    %v913 = vld [vmem:[#allocation4 + $0x18d8] sm:$0xff]
    %v914 = vld [vmem:[#allocation4 + $0x18e0] sm:$0xff]
    %v915 = vld [vmem:[#allocation4 + $0x18e8] sm:$0xff]
    %v916 = vld [vmem:[#allocation4 + $0x18f0] sm:$0xff]
    %v917 = vld [vmem:[#allocation4 + $0x18f8] sm:$0xff]
    %v918 = vld [vmem:[#allocation4 + $0x1900] sm:$0xff]
    %v919 = vld [vmem:[#allocation4 + $0x1908] sm:$0xff]
    %v920 = vld [vmem:[#allocation4 + $0x1910] sm:$0xff]
    %v921 = vld [vmem:[#allocation4 + $0x1918] sm:$0xff]
    %v922 = vld [vmem:[#allocation4 + $0x1920] sm:$0xff]
    %v923 = vld [vmem:[#allocation4 + $0x1928] sm:$0xff]
    %v924 = vld [vmem:[#allocation4 + $0x1930] sm:$0xff]
    %v925 = vld [vmem:[#allocation4 + $0x1938] sm:$0xff]
    %v926 = vld [vmem:[#allocation4 + $0x1940] sm:$0xff]
    %v927 = vld [vmem:[#allocation4 + $0x1948] sm:$0xff]
    %v928 = vld [vmem:[#allocation4 + $0x1950] sm:$0xff]
    %v929 = vld [vmem:[#allocation4 + $0x1958] sm:$0xff]
    %v930 = vld [vmem:[#allocation4 + $0x1960] sm:$0xff]
    %v931 = vld [vmem:[#allocation4 + $0x1968] sm:$0xff]
    %v932 = vld [vmem:[#allocation4 + $0x1970] sm:$0xff]
    %v933 = vld [vmem:[#allocation4 + $0x1978] sm:$0xff]
    %v934 = vld [vmem:[#allocation4 + $0x1980] sm:$0xff]
    %v935 = vld [vmem:[#allocation4 + $0x1988] sm:$0xff]
    %v936 = vld [vmem:[#allocation4 + $0x1990] sm:$0xff]
    %v937 = vld [vmem:[#allocation4 + $0x1998] sm:$0xff]
    %v938 = vld [vmem:[#allocation4 + $0x19a0] sm:$0xff]
    %v939 = vld [vmem:[#allocation4 + $0x19a8] sm:$0xff]
    %v940 = vld [vmem:[#allocation4 + $0x19b0] sm:$0xff]
    %v941 = vld [vmem:[#allocation4 + $0x19b8] sm:$0xff]
    %v942 = vld [vmem:[#allocation4 + $0x19c0] sm:$0xff]
    %v943 = vld [vmem:[#allocation4 + $0x19c8] sm:$0xff]
    %v944 = vld [vmem:[#allocation4 + $0x19d0] sm:$0xff]
    %v945 = vld [vmem:[#allocation4 + $0x19d8] sm:$0xff]
    %v946 = vld [vmem:[#allocation4 + $0x19e0] sm:$0xff]
    %v947 = vld [vmem:[#allocation4 + $0x19e8] sm:$0xff]
    %v948 = vld [vmem:[#allocation4 + $0x19f0] sm:$0xff]
    %v949 = vld [vmem:[#allocation4 + $0x19f8] sm:$0xff]
    %v950 = vld [vmem:[#allocation4 + $0x1a00] sm:$0xff]
    %v951 = vld [vmem:[#allocation4 + $0x1a08] sm:$0xff]
    %v952 = vld [vmem:[#allocation4 + $0x1a10] sm:$0xff]
    %v953 = vld [vmem:[#allocation4 + $0x1a18] sm:$0xff]
    %v954 = vld [vmem:[#allocation4 + $0x1a20] sm:$0xff]
    %v955 = vld [vmem:[#allocation4 + $0x1a28] sm:$0xff]
    %v956 = vld [vmem:[#allocation4 + $0x1a30] sm:$0xff]
    %v957 = vld [vmem:[#allocation4 + $0x1a38] sm:$0xff]
    %v958 = vld [vmem:[#allocation4 + $0x1a40] sm:$0xff]
    %v959 = vld [vmem:[#allocation4 + $0x1a48] sm:$0xff]
    %v960 = vld [vmem:[#allocation4 + $0x1a50] sm:$0xff]
    %v961 = vld [vmem:[#allocation4 + $0x1a58] sm:$0xff]
    %v962 = vld [vmem:[#allocation4 + $0x1a60] sm:$0xff]
    %v963 = vld [vmem:[#allocation4 + $0x1a68] sm:$0xff]
    %v964 = vld [vmem:[#allocation4 + $0x1a70] sm:$0xff]
    %v965 = vld [vmem:[#allocation4 + $0x1a78] sm:$0xff]
    %v966 = vld [vmem:[#allocation4 + $0x1a80] sm:$0xff]
    %v967 = vld [vmem:[#allocation4 + $0x1a88] sm:$0xff]
    %v968 = vld [vmem:[#allocation4 + $0x1a90] sm:$0xff]
    %v969 = vld [vmem:[#allocation4 + $0x1a98] sm:$0xff]
    %v970 = vld [vmem:[#allocation4 + $0x1aa0] sm:$0xff]
    %v971 = vld [vmem:[#allocation4 + $0x1aa8] sm:$0xff]
    %v972 = vld [vmem:[#allocation4 + $0x1ab0] sm:$0xff]
    %v973 = vld [vmem:[#allocation4 + $0x1ab8] sm:$0xff]
    %v974 = vld [vmem:[#allocation4 + $0x1ac0] sm:$0xff]
    %v975 = vld [vmem:[#allocation4 + $0x1ac8] sm:$0xff]
    %v976 = vld [vmem:[#allocation4 + $0x1ad0] sm:$0xff]
    %v977 = vld [vmem:[#allocation4 + $0x1ad8] sm:$0xff]
    %v978 = vld [vmem:[#allocation4 + $0x1ae0] sm:$0xff]
    %v979 = vld [vmem:[#allocation4 + $0x1ae8] sm:$0xff]
    %v980 = vld [vmem:[#allocation4 + $0x1af0] sm:$0xff]
    %v981 = vld [vmem:[#allocation4 + $0x1af8] sm:$0xff]
    %v982 = vld [vmem:[#allocation4 + $0x1b00] sm:$0xff]
    %v983 = vld [vmem:[#allocation4 + $0x1b08] sm:$0xff]
    %v984 = vld [vmem:[#allocation4 + $0x1b10] sm:$0xff]
    %v985 = vld [vmem:[#allocation4 + $0x1b18] sm:$0xff]
    %v986 = vld [vmem:[#allocation4 + $0x1b20] sm:$0xff]
    %v987 = vld [vmem:[#allocation4 + $0x1b28] sm:$0xff]
    %v988 = vld [vmem:[#allocation4 + $0x1b30] sm:$0xff]
    %v989 = vld [vmem:[#allocation4 + $0x1b38] sm:$0xff]
    %v990 = vld [vmem:[#allocation4 + $0x1b40] sm:$0xff]
    %v991 = vld [vmem:[#allocation4 + $0x1b48] sm:$0xff]
    %v992 = vld [vmem:[#allocation4 + $0x1b50] sm:$0xff]
    %v993 = vld [vmem:[#allocation4 + $0x1b58] sm:$0xff]
    %v994 = vld [vmem:[#allocation4 + $0x1b60] sm:$0xff]
    %v995 = vld [vmem:[#allocation4 + $0x1b68] sm:$0xff]
    %v996 = vld [vmem:[#allocation4 + $0x1b70] sm:$0xff]
    %v997 = vld [vmem:[#allocation4 + $0x1b78] sm:$0xff]
    %v998 = vld [vmem:[#allocation4 + $0x1b80] sm:$0xff]
    %v999 = vld [vmem:[#allocation4 + $0x1b88] sm:$0xff]
    %v1000 = vld [vmem:[#allocation4 + $0x1b90] sm:$0xff]
    %v1001 = vld [vmem:[#allocation4 + $0x1b98] sm:$0xff]
    %v1002 = vld [vmem:[#allocation4 + $0x1ba0] sm:$0xff]
    %v1003 = vld [vmem:[#allocation4 + $0x1ba8] sm:$0xff]
    %v1004 = vld [vmem:[#allocation4 + $0x1bb0] sm:$0xff]
    %v1005 = vld [vmem:[#allocation4 + $0x1bb8] sm:$0xff]
    %v1006 = vld [vmem:[#allocation4 + $0x1bc0] sm:$0xff]
    %v1007 = vld [vmem:[#allocation4 + $0x1bc8] sm:$0xff]
    %v1008 = vld [vmem:[#allocation4 + $0x1bd0] sm:$0xff]
    %v1009 = vld [vmem:[#allocation4 + $0x1bd8] sm:$0xff]
    %v1010 = vld [vmem:[#allocation4 + $0x1be0] sm:$0xff]
    %v1011 = vld [vmem:[#allocation4 + $0x1be8] sm:$0xff]
    %v1012 = vld [vmem:[#allocation4 + $0x1bf0] sm:$0xff]
    %v1013 = vld [vmem:[#allocation4 + $0x1bf8] sm:$0xff]
    %v1014 = vld [vmem:[#allocation4 + $0x1c00] sm:$0xff]
    %v1015 = vld [vmem:[#allocation4 + $0x1c08] sm:$0xff]
    %v1016 = vld [vmem:[#allocation4 + $0x1c10] sm:$0xff]
    %v1017 = vld [vmem:[#allocation4 + $0x1c18] sm:$0xff]
    %v1018 = vld [vmem:[#allocation4 + $0x1c20] sm:$0xff]
    %v1019 = vld [vmem:[#allocation4 + $0x1c28] sm:$0xff]
    %v1020 = vld [vmem:[#allocation4 + $0x1c30] sm:$0xff]
    %v1021 = vld [vmem:[#allocation4 + $0x1c38] sm:$0xff]
    %v1022 = vld [vmem:[#allocation4 + $0x1c40] sm:$0xff]
    %v1023 = vld [vmem:[#allocation4 + $0x1c48] sm:$0xff]
    %v1024 = vld [vmem:[#allocation4 + $0x1c50] sm:$0xff]
    %v1025 = vld [vmem:[#allocation4 + $0x1c58] sm:$0xff]
    %v1026 = vld [vmem:[#allocation4 + $0x1c60] sm:$0xff]
    %v1027 = vld [vmem:[#allocation4 + $0x1c68] sm:$0xff]
    %v1028 = vld [vmem:[#allocation4 + $0x1c70] sm:$0xff]
    %v1029 = vld [vmem:[#allocation4 + $0x1c78] sm:$0xff]
    %v1030 = vld [vmem:[#allocation4 + $0x1c80] sm:$0xff]
    %v1031 = vld [vmem:[#allocation4 + $0x1c88] sm:$0xff]
    %v1032 = vld [vmem:[#allocation4 + $0x1c90] sm:$0xff]
    %v1033 = vld [vmem:[#allocation4 + $0x1c98] sm:$0xff]
    %v1034 = vld [vmem:[#allocation4 + $0x1ca0] sm:$0xff]
    %v1035 = vld [vmem:[#allocation4 + $0x1ca8] sm:$0xff]
    %v1036 = vld [vmem:[#allocation4 + $0x1cb0] sm:$0xff]
    %v1037 = vld [vmem:[#allocation4 + $0x1cb8] sm:$0xff]
    %v1038 = vld [vmem:[#allocation4 + $0x1cc0] sm:$0xff]
    %v1039 = vld [vmem:[#allocation4 + $0x1cc8] sm:$0xff]
    %v1040 = vld [vmem:[#allocation4 + $0x1cd0] sm:$0xff]
    %v1041 = vld [vmem:[#allocation4 + $0x1cd8] sm:$0xff]
    %v1042 = vld [vmem:[#allocation4 + $0x1ce0] sm:$0xff]
    %v1043 = vld [vmem:[#allocation4 + $0x1ce8] sm:$0xff]
    %v1044 = vld [vmem:[#allocation4 + $0x1cf0] sm:$0xff]
    %v1045 = vld [vmem:[#allocation4 + $0x1cf8] sm:$0xff]
    %v1046 = vld [vmem:[#allocation4 + $0x1d00] sm:$0xff]
    %v1047 = vld [vmem:[#allocation4 + $0x1d08] sm:$0xff]
    %v1048 = vld [vmem:[#allocation4 + $0x1d10] sm:$0xff]
    %v1049 = vld [vmem:[#allocation4 + $0x1d18] sm:$0xff]
    %v1050 = vld [vmem:[#allocation4 + $0x1d20] sm:$0xff]
    %v1051 = vld [vmem:[#allocation4 + $0x1d28] sm:$0xff]
    %v1052 = vld [vmem:[#allocation4 + $0x1d30] sm:$0xff]
    %v1053 = vld [vmem:[#allocation4 + $0x1d38] sm:$0xff]
    %v1054 = vld [vmem:[#allocation4 + $0x1d40] sm:$0xff]
    %v1055 = vld [vmem:[#allocation4 + $0x1d48] sm:$0xff]
    %v1056 = vld [vmem:[#allocation4 + $0x1d50] sm:$0xff]
    %v1057 = vld [vmem:[#allocation4 + $0x1d58] sm:$0xff]
    %v1058 = vld [vmem:[#allocation4 + $0x1d60] sm:$0xff]
    %v1059 = vld [vmem:[#allocation4 + $0x1d68] sm:$0xff]
    %v1060 = vld [vmem:[#allocation4 + $0x1d70] sm:$0xff]
    %v1061 = vld [vmem:[#allocation4 + $0x1d78] sm:$0xff]
    %v1062 = vld [vmem:[#allocation4 + $0x1d80] sm:$0xff]
    %v1063 = vld [vmem:[#allocation4 + $0x1d88] sm:$0xff]
    %v1064 = vld [vmem:[#allocation4 + $0x1d90] sm:$0xff]
    %v1065 = vld [vmem:[#allocation4 + $0x1d98] sm:$0xff]
    %v1066 = vld [vmem:[#allocation4 + $0x1da0] sm:$0xff]
    %v1067 = vld [vmem:[#allocation4 + $0x1da8] sm:$0xff]
    %v1068 = vld [vmem:[#allocation4 + $0x1db0] sm:$0xff]
    %v1069 = vld [vmem:[#allocation4 + $0x1db8] sm:$0xff]
    %v1070 = vld [vmem:[#allocation4 + $0x1dc0] sm:$0xff]
    %v1071 = vld [vmem:[#allocation4 + $0x1dc8] sm:$0xff]
    %v1072 = vld [vmem:[#allocation4 + $0x1dd0] sm:$0xff]
    %v1073 = vld [vmem:[#allocation4 + $0x1dd8] sm:$0xff]
    %v1074 = vld [vmem:[#allocation4 + $0x1de0] sm:$0xff]
    %v1075 = vld [vmem:[#allocation4 + $0x1de8] sm:$0xff]
    %v1076 = vld [vmem:[#allocation4 + $0x1df0] sm:$0xff]
    %v1077 = vld [vmem:[#allocation4 + $0x1df8] sm:$0xff]
    %v1078 = vld [vmem:[#allocation4 + $0x1e00] sm:$0xff]
    %v1079 = vld [vmem:[#allocation4 + $0x1e08] sm:$0xff]
    %v1080 = vld [vmem:[#allocation4 + $0x1e10] sm:$0xff]
    %v1081 = vld [vmem:[#allocation4 + $0x1e18] sm:$0xff]
    %v1082 = vld [vmem:[#allocation4 + $0x1e20] sm:$0xff]
    %v1083 = vld [vmem:[#allocation4 + $0x1e28] sm:$0xff]
    %v1084 = vld [vmem:[#allocation4 + $0x1e30] sm:$0xff]
    %v1085 = vld [vmem:[#allocation4 + $0x1e38] sm:$0xff]
    %v1086 = vld [vmem:[#allocation4 + $0x1e40] sm:$0xff]
    %v1087 = vld [vmem:[#allocation4 + $0x1e48] sm:$0xff]
    %v1088 = vld [vmem:[#allocation4 + $0x1e50] sm:$0xff]
    %v1089 = vld [vmem:[#allocation4 + $0x1e58] sm:$0xff]
    %v1090 = vld [vmem:[#allocation4 + $0x1e60] sm:$0xff]
    %v1091 = vld [vmem:[#allocation4 + $0x1e68] sm:$0xff]
    %v1092 = vld [vmem:[#allocation4 + $0x1e70] sm:$0xff]
    %v1093 = vld [vmem:[#allocation4 + $0x1e78] sm:$0xff]
    %v1094 = vld [vmem:[#allocation4 + $0x1e80] sm:$0xff]
    %v1095 = vld [vmem:[#allocation4 + $0x1e88] sm:$0xff]
    %v1096 = vld [vmem:[#allocation4 + $0x1e90] sm:$0xff]
    %v1097 = vld [vmem:[#allocation4 + $0x1e98] sm:$0xff]
    %v1098 = vld [vmem:[#allocation4 + $0x1ea0] sm:$0xff]
    %v1099 = vld [vmem:[#allocation4 + $0x1ea8] sm:$0xff]
    %v1100 = vld [vmem:[#allocation4 + $0x1eb0] sm:$0xff]
    %v1101 = vld [vmem:[#allocation4 + $0x1eb8] sm:$0xff]
    %v1102 = vld [vmem:[#allocation4 + $0x1ec0] sm:$0xff]
    %v1103 = vld [vmem:[#allocation4 + $0x1ec8] sm:$0xff]
    %v1104 = vld [vmem:[#allocation4 + $0x1ed0] sm:$0xff]
    %v1105 = vld [vmem:[#allocation4 + $0x1ed8] sm:$0xff]
    %v1106 = vld [vmem:[#allocation4 + $0x1ee0] sm:$0xff]
    %v1107 = vld [vmem:[#allocation4 + $0x1ee8] sm:$0xff]
    %v1108 = vld [vmem:[#allocation4 + $0x1ef0] sm:$0xff]
    %v1109 = vld [vmem:[#allocation4 + $0x1ef8] sm:$0xff]
    %v1110 = vld [vmem:[#allocation4 + $0x1f00] sm:$0xff]
    %v1111 = vld [vmem:[#allocation4 + $0x1f08] sm:$0xff]
    %v1112 = vld [vmem:[#allocation4 + $0x1f10] sm:$0xff]
    %v1113 = vld [vmem:[#allocation4 + $0x1f18] sm:$0xff]
    %v1114 = vld [vmem:[#allocation4 + $0x1f20] sm:$0xff]
    %v1115 = vld [vmem:[#allocation4 + $0x1f28] sm:$0xff]
    %v1116 = vld [vmem:[#allocation4 + $0x1f30] sm:$0xff]
    %v1117 = vld [vmem:[#allocation4 + $0x1f38] sm:$0xff]
    %v1118 = vld [vmem:[#allocation4 + $0x1f40] sm:$0xff]
    %v1119 = vld [vmem:[#allocation4 + $0x1f48] sm:$0xff]
    %v1120 = vld [vmem:[#allocation4 + $0x1f50] sm:$0xff]
    %v1121 = vld [vmem:[#allocation4 + $0x1f58] sm:$0xff]
    %v1122 = vld [vmem:[#allocation4 + $0x1f60] sm:$0xff]
    %v1123 = vld [vmem:[#allocation4 + $0x1f68] sm:$0xff]
    %v1124 = vld [vmem:[#allocation4 + $0x1f70] sm:$0xff]
    %v1125 = vld [vmem:[#allocation4 + $0x1f78] sm:$0xff]
    %v1126 = vld [vmem:[#allocation4 + $0x1f80] sm:$0xff]
    %v1127 = vld [vmem:[#allocation4 + $0x1f88] sm:$0xff]
    %v1128 = vld [vmem:[#allocation4 + $0x1f90] sm:$0xff]
    %v1129 = vld [vmem:[#allocation4 + $0x1f98] sm:$0xff]
    %v1130 = vld [vmem:[#allocation4 + $0x1fa0] sm:$0xff]
    %v1131 = vld [vmem:[#allocation4 + $0x1fa8] sm:$0xff]
    %v1132 = vld [vmem:[#allocation4 + $0x1fb0] sm:$0xff]
    %v1133 = vld [vmem:[#allocation4 + $0x1fb8] sm:$0xff]
    %v1134 = vld [vmem:[#allocation4 + $0x1fc0] sm:$0xff]
    %v1135 = vld [vmem:[#allocation4 + $0x1fc8] sm:$0xff]
    %v1136 = vld [vmem:[#allocation4 + $0x1fd0] sm:$0xff]
    %v1137 = vld [vmem:[#allocation4 + $0x1fd8] sm:$0xff]
    %v1138 = vld [vmem:[#allocation4 + $0x1fe0] sm:$0xff]
    %v1139 = vld [vmem:[#allocation4 + $0x1fe8] sm:$0xff]
    %v1140 = vld [vmem:[#allocation4 + $0x1ff0] sm:$0xff]
    %v1141 = vld [vmem:[#allocation4 + $0x1ff8] sm:$0xff]
    %v1142 = vld [vmem:[#allocation4 + $0x2000] sm:$0xff]
    %v1143 = vld [vmem:[#allocation4 + $0x2008] sm:$0xff]
    %v1144 = vld [vmem:[#allocation4 + $0x2010] sm:$0xff]
    %v1145 = vld [vmem:[#allocation4 + $0x2018] sm:$0xff]
    %v1146 = vld [vmem:[#allocation4 + $0x2020] sm:$0xff]
    %v1147 = vld [vmem:[#allocation4 + $0x2028] sm:$0xff]
    %v1148 = vld [vmem:[#allocation4 + $0x2030] sm:$0xff]
    %v1149 = vld [vmem:[#allocation4 + $0x2038] sm:$0xff]
    %v1150 = vld [vmem:[#allocation4 + $0x2040] sm:$0xff]
    %v1151 = vld [vmem:[#allocation4 + $0x2048] sm:$0xff]
    %v1152 = vld [vmem:[#allocation4 + $0x2050] sm:$0xff]
    %v1153 = vld [vmem:[#allocation4 + $0x2058] sm:$0xff]
    %v1154 = vld [vmem:[#allocation4 + $0x2060] sm:$0xff]
    %v1155 = vld [vmem:[#allocation4 + $0x2068] sm:$0xff]
    %v1156 = vld [vmem:[#allocation4 + $0x2070] sm:$0xff]
    %v1157 = vld [vmem:[#allocation4 + $0x2078] sm:$0xff]
    %v1158 = vld [vmem:[#allocation4 + $0x2080] sm:$0xff]
    %v1159 = vld [vmem:[#allocation4 + $0x2088] sm:$0xff]
    %v1160 = vld [vmem:[#allocation4 + $0x2090] sm:$0xff]
    %v1161 = vld [vmem:[#allocation4 + $0x2098] sm:$0xff]
    %v1162 = vld [vmem:[#allocation4 + $0x20a0] sm:$0xff]
    %v1163 = vld [vmem:[#allocation4 + $0x20a8] sm:$0xff]
    %v1164 = vld [vmem:[#allocation4 + $0x20b0] sm:$0xff]
    %v1165 = vld [vmem:[#allocation4 + $0x20b8] sm:$0xff]
    %v1166 = vld [vmem:[#allocation4 + $0x20c0] sm:$0xff]
    %v1167 = vld [vmem:[#allocation4 + $0x20c8] sm:$0xff]
    %v1168 = vld [vmem:[#allocation4 + $0x20d0] sm:$0xff]
    %v1169 = vld [vmem:[#allocation4 + $0x20d8] sm:$0xff]
    %v1170 = vld [vmem:[#allocation4 + $0x20e0] sm:$0xff]
    %v1171 = vld [vmem:[#allocation4 + $0x20e8] sm:$0xff]
    %v1172 = vld [vmem:[#allocation4 + $0x20f0] sm:$0xff]
    %v1173 = vld [vmem:[#allocation4 + $0x20f8] sm:$0xff]
    %v1174 = vld [vmem:[#allocation4 + $0x2100] sm:$0xff]
    %v1175 = vld [vmem:[#allocation4 + $0x2108] sm:$0xff]
    %v1176 = vld [vmem:[#allocation4 + $0x2110] sm:$0xff]
    %v1177 = vld [vmem:[#allocation4 + $0x2118] sm:$0xff]
    %v1178 = vld [vmem:[#allocation4 + $0x2120] sm:$0xff]
    %v1179 = vld [vmem:[#allocation4 + $0x2128] sm:$0xff]
    %v1180 = vld [vmem:[#allocation4 + $0x2130] sm:$0xff]
    %v1181 = vld [vmem:[#allocation4 + $0x2138] sm:$0xff]
    %v1182 = vld [vmem:[#allocation4 + $0x2140] sm:$0xff]
    %v1183 = vld [vmem:[#allocation4 + $0x2148] sm:$0xff]
    %v1184 = vld [vmem:[#allocation4 + $0x2150] sm:$0xff]
    %v1185 = vld [vmem:[#allocation4 + $0x2158] sm:$0xff]
    %v1186 = vld [vmem:[#allocation4 + $0x2160] sm:$0xff]
    %v1187 = vld [vmem:[#allocation4 + $0x2168] sm:$0xff]
    %v1188 = vld [vmem:[#allocation4 + $0x2170] sm:$0xff]
    %v1189 = vld [vmem:[#allocation4 + $0x2178] sm:$0xff]
    %v1190 = vld [vmem:[#allocation4 + $0x2180] sm:$0xff]
    %v1191 = vld [vmem:[#allocation4 + $0x2188] sm:$0xff]
    %v1192 = vld [vmem:[#allocation4 + $0x2190] sm:$0xff]
    %v1193 = vld [vmem:[#allocation4 + $0x2198] sm:$0xff]
    %v1194 = vld [vmem:[#allocation4 + $0x21a0] sm:$0xff]
    %v1195 = vld [vmem:[#allocation4 + $0x21a8] sm:$0xff]
    %v1196 = vld [vmem:[#allocation4 + $0x21b0] sm:$0xff]
    %v1197 = vld [vmem:[#allocation4 + $0x21b8] sm:$0xff]
    %v1198 = vld [vmem:[#allocation4 + $0x21c0] sm:$0xff]
    %v1199 = vld [vmem:[#allocation4 + $0x21c8] sm:$0xff]
    %v1200 = vld [vmem:[#allocation4 + $0x21d0] sm:$0xff]
    %v1201 = vld [vmem:[#allocation4 + $0x21d8] sm:$0xff]
    %v1202 = vld [vmem:[#allocation4 + $0x21e0] sm:$0xff]
    %v1203 = vld [vmem:[#allocation4 + $0x21e8] sm:$0xff]
    %v1204 = vld [vmem:[#allocation4 + $0x21f0] sm:$0xff]
    %v1205 = vld [vmem:[#allocation4 + $0x21f8] sm:$0xff]
    %v1206 = vld [vmem:[#allocation4 + $0x2200] sm:$0x1]
    %v1207 = vld [vmem:[#allocation4 + $0x2208] sm:$0x1]
    %v1208 = vld [vmem:[#allocation4 + $0x2210] sm:$0x1]
    %v1209 = vld [vmem:[#allocation4 + $0x2218] sm:$0x1]
    %v1210 = vld [vmem:[#allocation4 + $0x2220] sm:$0x1]
    %v1211 = vld [vmem:[#allocation4 + $0x2228] sm:$0x1]
    %v1212 = vld [vmem:[#allocation4 + $0x2230] sm:$0x1]
    %v1213 = vld [vmem:[#allocation4 + $0x2238] sm:$0x1]
    %v1214 = vld [vmem:[#allocation6] sm:$0xff]
    %v1216 = vperm.slane %v1214, 0
    %v1217 = vperm.slane %v1214, 1
    %v1218 = vperm.slane %v1214, 2
    %v1219 = vperm.slane %v1214, 3
    %v1220 = vperm.slane %v1214, 4
    %v1221 = vperm.slane %v1214, 5
    %v1222 = vperm.slane %v1214, 6
    %v1223 = vperm.slane %v1214, 7
    %1235 = vst [vmem:[#allocation1] ss:$4 sm:$0xff] %v115
    %s1236 = scalar_lea.vmem [#allocation1], 32
    %1237 = vst [vmem:[%s1236] ss:$4 sm:$0xff] %v116
    %v1238 = vld.sshfl [vmem:[#allocation1] sm:$0xff pattern:$0x73625140]
    %v1239 = vld.sshfl [vmem:[#allocation1 + $0x8] sm:$0xff pattern:$0x73625140]
    %v1240 = vld.sshfl [vmem:[#allocation1 + $0x10] sm:$0xff pattern:$0x73625140]
    %v1241 = vld.sshfl [vmem:[#allocation1 + $0x18] sm:$0xff pattern:$0x73625140]
    %v1242 = vld.sshfl [vmem:[#allocation1 + $0x20] sm:$0xff pattern:$0x73625140]
    %v1243 = vld.sshfl [vmem:[#allocation1 + $0x28] sm:$0xff pattern:$0x73625140]
    %v1244 = vld.sshfl [vmem:[#allocation1 + $0x30] sm:$0xff pattern:$0x73625140]
    %v1245 = vld.sshfl [vmem:[#allocation1 + $0x38] sm:$0xff pattern:$0x73625140]
    %1246 = vst [vmem:[#allocation1] ss:$4 sm:$0xff] %v117
    %v1247 = vld.sshfl [vmem:[#allocation1] sm:$0xff pattern:$0x73625140]
    %vm1256 = vcmask 531456
    %v1257 = vsel %vm1256, %v1247, 0
    %vm1259 = vcmask 1040384
    %v1261 = vsel %vm1259, %v1206, 0
    %v1264 = vsel %vm1259, %v1207, 0
    %v1267 = vsel %vm1259, %v1208, 0
    %v1270 = vsel %vm1259, %v1209, 0
    %v1273 = vsel %vm1259, %v1210, 0
    %v1276 = vsel %vm1259, %v1211, 0
    %v1279 = vsel %vm1259, %v1212, 0
    %v1282 = vsel %vm1259, %v1213, 0
    %1284 = vmatpush.msra.mxu0 %v238
    %1285 = vmatpush.msra.mxu0 %v230
    %1286 = vmatpush.msra.mxu0 %v222
    %1287 = vmatpush.msra.mxu0 %v214
    %1288 = vmatpush.msra.mxu0 %v206
    %1289 = vmatpush.msra.mxu0 %v198
    %1290 = vmatpush.msra.mxu0 %v190
    %1291 = vmatpush.msra.mxu0 %v182
    %1292 = vmatpush.msra.mxu0 %v174
    %1293 = vmatpush.msra.mxu0 %v166
    %1294 = vmatpush.msra.mxu0 %v158
    %1295 = vmatpush.msra.mxu0 %v150
    %1296 = vmatpush.msra.mxu0 %v142
    %1297 = vmatpush.msra.mxu0 %v134
    %1298 = vmatpush.msra.mxu0 %v126
    %1299 = vmatpush.msra.mxu0 %v118
    %1300 = vmatmul.f32.gmra.mxu0 %v1238
    %v1301 = vpop.f32.mrf.mxu0
    %v1302 = vadd.f32 %v1216, %v1301
    %1303 = vdwg.mxu0
    %1304 = vmatpush.msra.mxu0 %v366
    %1305 = vmatpush.msra.mxu0 %v358
    %1306 = vmatpush.msra.mxu0 %v350
    %1307 = vmatpush.msra.mxu0 %v342
    %1308 = vmatpush.msra.mxu0 %v334
    %1309 = vmatpush.msra.mxu0 %v326
    %1310 = vmatpush.msra.mxu0 %v318
    %1311 = vmatpush.msra.mxu0 %v310
    %1312 = vmatpush.msra.mxu0 %v302
    %1313 = vmatpush.msra.mxu0 %v294
    %1314 = vmatpush.msra.mxu0 %v286
    %1315 = vmatpush.msra.mxu0 %v278
    %1316 = vmatpush.msra.mxu0 %v270
    %1317 = vmatpush.msra.mxu0 %v262
    %1318 = vmatpush.msra.mxu0 %v254
    %1319 = vmatpush.msra.mxu0 %v246
    %1320 = vmatmul.f32.gmra.mxu0 %v1239
    %v1321 = vpop.f32.mrf.mxu0
    %v1322 = vadd.f32 %v1302, %v1321
    %1323 = vdwg.mxu0
    %1324 = vmatpush.msra.mxu0 %v494
    %1325 = vmatpush.msra.mxu0 %v486
    %1326 = vmatpush.msra.mxu0 %v478
    %1327 = vmatpush.msra.mxu0 %v470
    %1328 = vmatpush.msra.mxu0 %v462
    %1329 = vmatpush.msra.mxu0 %v454
    %1330 = vmatpush.msra.mxu0 %v446
    %1331 = vmatpush.msra.mxu0 %v438
    %1332 = vmatpush.msra.mxu0 %v430
    %1333 = vmatpush.msra.mxu0 %v422
    %1334 = vmatpush.msra.mxu0 %v414
    %1335 = vmatpush.msra.mxu0 %v406
    %1336 = vmatpush.msra.mxu0 %v398
    %1337 = vmatpush.msra.mxu0 %v390
    %1338 = vmatpush.msra.mxu0 %v382
    %1339 = vmatpush.msra.mxu0 %v374
    %1340 = vmatmul.f32.gmra.mxu0 %v1240
    %v1341 = vpop.f32.mrf.mxu0
    %v1342 = vadd.f32 %v1322, %v1341
    %1343 = vdwg.mxu0
    %1344 = vmatpush.msra.mxu0 %v622
    %1345 = vmatpush.msra.mxu0 %v614
    %1346 = vmatpush.msra.mxu0 %v606
    %1347 = vmatpush.msra.mxu0 %v598
    %1348 = vmatpush.msra.mxu0 %v590
    %1349 = vmatpush.msra.mxu0 %v582
    %1350 = vmatpush.msra.mxu0 %v574
    %1351 = vmatpush.msra.mxu0 %v566
    %1352 = vmatpush.msra.mxu0 %v558
    %1353 = vmatpush.msra.mxu0 %v550
    %1354 = vmatpush.msra.mxu0 %v542
    %1355 = vmatpush.msra.mxu0 %v534
    %1356 = vmatpush.msra.mxu0 %v526
    %1357 = vmatpush.msra.mxu0 %v518
    %1358 = vmatpush.msra.mxu0 %v510
    %1359 = vmatpush.msra.mxu0 %v502
    %1360 = vmatmul.f32.gmra.mxu0 %v1241
    %v1361 = vpop.f32.mrf.mxu0
    %v1362 = vadd.f32 %v1342, %v1361
    %1363 = vdwg.mxu0
    %1364 = vmatpush.msra.mxu0 %v750
    %1365 = vmatpush.msra.mxu0 %v742
    %1366 = vmatpush.msra.mxu0 %v734
    %1367 = vmatpush.msra.mxu0 %v726
    %1368 = vmatpush.msra.mxu0 %v718
    %1369 = vmatpush.msra.mxu0 %v710
    %1370 = vmatpush.msra.mxu0 %v702
    %1371 = vmatpush.msra.mxu0 %v694
    %1372 = vmatpush.msra.mxu0 %v686
    %1373 = vmatpush.msra.mxu0 %v678
    %1374 = vmatpush.msra.mxu0 %v670
    %1375 = vmatpush.msra.mxu0 %v662
    %1376 = vmatpush.msra.mxu0 %v654
    %1377 = vmatpush.msra.mxu0 %v646
    %1378 = vmatpush.msra.mxu0 %v638
    %1379 = vmatpush.msra.mxu0 %v630
    %1380 = vmatmul.f32.gmra.mxu0 %v1242
    %v1381 = vpop.f32.mrf.mxu0
    %v1382 = vadd.f32 %v1362, %v1381
    %1383 = vdwg.mxu0
    %1384 = vmatpush.msra.mxu0 %v878
    %1385 = vmatpush.msra.mxu0 %v870
    %1386 = vmatpush.msra.mxu0 %v862
    %1387 = vmatpush.msra.mxu0 %v854
    %1388 = vmatpush.msra.mxu0 %v846
    %1389 = vmatpush.msra.mxu0 %v838
    %1390 = vmatpush.msra.mxu0 %v830
    %1391 = vmatpush.msra.mxu0 %v822
    %1392 = vmatpush.msra.mxu0 %v814
    %1393 = vmatpush.msra.mxu0 %v806
    %1394 = vmatpush.msra.mxu0 %v798
    %1395 = vmatpush.msra.mxu0 %v790
    %1396 = vmatpush.msra.mxu0 %v782
    %1397 = vmatpush.msra.mxu0 %v774
    %1398 = vmatpush.msra.mxu0 %v766
    %1399 = vmatpush.msra.mxu0 %v758
    %1400 = vmatmul.f32.gmra.mxu0 %v1243
    %v1401 = vpop.f32.mrf.mxu0
    %v1402 = vadd.f32 %v1382, %v1401
    %1403 = vdwg.mxu0
    %1404 = vmatpush.msra.mxu0 %v1006
    %1405 = vmatpush.msra.mxu0 %v998
    %1406 = vmatpush.msra.mxu0 %v990
    %1407 = vmatpush.msra.mxu0 %v982
    %1408 = vmatpush.msra.mxu0 %v974
    %1409 = vmatpush.msra.mxu0 %v966
    %1410 = vmatpush.msra.mxu0 %v958
    %1411 = vmatpush.msra.mxu0 %v950
    %1412 = vmatpush.msra.mxu0 %v942
    %1413 = vmatpush.msra.mxu0 %v934
    %1414 = vmatpush.msra.mxu0 %v926
    %1415 = vmatpush.msra.mxu0 %v918
    %1416 = vmatpush.msra.mxu0 %v910
    %1417 = vmatpush.msra.mxu0 %v902
    %1418 = vmatpush.msra.mxu0 %v894
    %1419 = vmatpush.msra.mxu0 %v886
    %1420 = vmatmul.f32.gmra.mxu0 %v1244
    %v1421 = vpop.f32.mrf.mxu0
    %v1422 = vadd.f32 %v1402, %v1421
    %1423 = vdwg.mxu0
    %1424 = vmatpush.msra.mxu0 %v1134
    %1425 = vmatpush.msra.mxu0 %v1126
    %1426 = vmatpush.msra.mxu0 %v1118
    %1427 = vmatpush.msra.mxu0 %v1110
    %1428 = vmatpush.msra.mxu0 %v1102
    %1429 = vmatpush.msra.mxu0 %v1094
    %1430 = vmatpush.msra.mxu0 %v1086
    %1431 = vmatpush.msra.mxu0 %v1078
    %1432 = vmatpush.msra.mxu0 %v1070
    %1433 = vmatpush.msra.mxu0 %v1062
    %1434 = vmatpush.msra.mxu0 %v1054
    %1435 = vmatpush.msra.mxu0 %v1046
    %1436 = vmatpush.msra.mxu0 %v1038
    %1437 = vmatpush.msra.mxu0 %v1030
    %1438 = vmatpush.msra.mxu0 %v1022
    %1439 = vmatpush.msra.mxu0 %v1014
    %1440 = vmatmul.f32.gmra.mxu0 %v1245
    %v1441 = vpop.f32.mrf.mxu0
    %v1442 = vadd.f32 %v1422, %v1441
    %1443 = vdwg.mxu0
    %1444 = vmatpush.msra.mxu0 0.0
    %1445 = vmatpush.msra.mxu0 0.0
    %1446 = vmatpush.msra.mxu0 0.0
    %1447 = vmatpush.msra.mxu0 0.0
    %1448 = vmatpush.msra.mxu0 0.0
    %1449 = vmatpush.msra.mxu0 0.0
    %1450 = vmatpush.msra.mxu0 0.0
    %1451 = vmatpush.msra.mxu0 %v1261
    %1452 = vmatpush.msra.mxu0 %v1198
    %1453 = vmatpush.msra.mxu0 %v1190
    %1454 = vmatpush.msra.mxu0 %v1182
    %1455 = vmatpush.msra.mxu0 %v1174
    %1456 = vmatpush.msra.mxu0 %v1166
    %1457 = vmatpush.msra.mxu0 %v1158
    %1458 = vmatpush.msra.mxu0 %v1150
    %1459 = vmatpush.msra.mxu0 %v1142
    %1460 = vmatmul.f32.gmra.mxu0 %v1257
    %v1461 = vpop.f32.mrf.mxu0
    %v1462 = vadd.f32 %v1442, %v1461
    %1463 = vdwg.mxu0
    %1464 = vmatpush.msra.mxu0 %v239
    %1465 = vmatpush.msra.mxu0 %v231
    %1466 = vmatpush.msra.mxu0 %v223
    %1467 = vmatpush.msra.mxu0 %v215
    %1468 = vmatpush.msra.mxu0 %v207
    %1469 = vmatpush.msra.mxu0 %v199
    %1470 = vmatpush.msra.mxu0 %v191
    %1471 = vmatpush.msra.mxu0 %v183
    %1472 = vmatpush.msra.mxu0 %v175
    %1473 = vmatpush.msra.mxu0 %v167
    %1474 = vmatpush.msra.mxu0 %v159
    %1475 = vmatpush.msra.mxu0 %v151
    %1476 = vmatpush.msra.mxu0 %v143
    %1477 = vmatpush.msra.mxu0 %v135
    %1478 = vmatpush.msra.mxu0 %v127
    %1479 = vmatpush.msra.mxu0 %v119
    %1480 = vmatmul.f32.gmra.mxu0 %v1238
    %v1481 = vpop.f32.mrf.mxu0
    %v1482 = vadd.f32 %v1217, %v1481
    %1483 = vdwg.mxu0
    %1484 = vmatpush.msra.mxu0 %v367
    %1485 = vmatpush.msra.mxu0 %v359
    %1486 = vmatpush.msra.mxu0 %v351
    %1487 = vmatpush.msra.mxu0 %v343
    %1488 = vmatpush.msra.mxu0 %v335
    %1489 = vmatpush.msra.mxu0 %v327
    %1490 = vmatpush.msra.mxu0 %v319
    %1491 = vmatpush.msra.mxu0 %v311
    %1492 = vmatpush.msra.mxu0 %v303
    %1493 = vmatpush.msra.mxu0 %v295
    %1494 = vmatpush.msra.mxu0 %v287
    %1495 = vmatpush.msra.mxu0 %v279
    %1496 = vmatpush.msra.mxu0 %v271
    %1497 = vmatpush.msra.mxu0 %v263
    %1498 = vmatpush.msra.mxu0 %v255
    %1499 = vmatpush.msra.mxu0 %v247
    %1500 = vmatmul.f32.gmra.mxu0 %v1239
    %v1501 = vpop.f32.mrf.mxu0
    %v1502 = vadd.f32 %v1482, %v1501
    %1503 = vdwg.mxu0
    %1504 = vmatpush.msra.mxu0 %v495
    %1505 = vmatpush.msra.mxu0 %v487
    %1506 = vmatpush.msra.mxu0 %v479
    %1507 = vmatpush.msra.mxu0 %v471
    %1508 = vmatpush.msra.mxu0 %v463
    %1509 = vmatpush.msra.mxu0 %v455
    %1510 = vmatpush.msra.mxu0 %v447
    %1511 = vmatpush.msra.mxu0 %v439
    %1512 = vmatpush.msra.mxu0 %v431
    %1513 = vmatpush.msra.mxu0 %v423
    %1514 = vmatpush.msra.mxu0 %v415
    %1515 = vmatpush.msra.mxu0 %v407
    %1516 = vmatpush.msra.mxu0 %v399
    %1517 = vmatpush.msra.mxu0 %v391
    %1518 = vmatpush.msra.mxu0 %v383
    %1519 = vmatpush.msra.mxu0 %v375
    %1520 = vmatmul.f32.gmra.mxu0 %v1240
    %v1521 = vpop.f32.mrf.mxu0
    %v1522 = vadd.f32 %v1502, %v1521
    %1523 = vdwg.mxu0
    %1524 = vmatpush.msra.mxu0 %v623
    %1525 = vmatpush.msra.mxu0 %v615
    %1526 = vmatpush.msra.mxu0 %v607
    %1527 = vmatpush.msra.mxu0 %v599
    %1528 = vmatpush.msra.mxu0 %v591
    %1529 = vmatpush.msra.mxu0 %v583
    %1530 = vmatpush.msra.mxu0 %v575
    %1531 = vmatpush.msra.mxu0 %v567
    %1532 = vmatpush.msra.mxu0 %v559
    %1533 = vmatpush.msra.mxu0 %v551
    %1534 = vmatpush.msra.mxu0 %v543
    %1535 = vmatpush.msra.mxu0 %v535
    %1536 = vmatpush.msra.mxu0 %v527
    %1537 = vmatpush.msra.mxu0 %v519
    %1538 = vmatpush.msra.mxu0 %v511
    %1539 = vmatpush.msra.mxu0 %v503
    %1540 = vmatmul.f32.gmra.mxu0 %v1241
    %v1541 = vpop.f32.mrf.mxu0
    %v1542 = vadd.f32 %v1522, %v1541
    %1543 = vdwg.mxu0
    %1544 = vmatpush.msra.mxu0 %v751
    %1545 = vmatpush.msra.mxu0 %v743
    %1546 = vmatpush.msra.mxu0 %v735
    %1547 = vmatpush.msra.mxu0 %v727
    %1548 = vmatpush.msra.mxu0 %v719
    %1549 = vmatpush.msra.mxu0 %v711
    %1550 = vmatpush.msra.mxu0 %v703
    %1551 = vmatpush.msra.mxu0 %v695
    %1552 = vmatpush.msra.mxu0 %v687
    %1553 = vmatpush.msra.mxu0 %v679
    %1554 = vmatpush.msra.mxu0 %v671
    %1555 = vmatpush.msra.mxu0 %v663
    %1556 = vmatpush.msra.mxu0 %v655
    %1557 = vmatpush.msra.mxu0 %v647
    %1558 = vmatpush.msra.mxu0 %v639
    %1559 = vmatpush.msra.mxu0 %v631
    %1560 = vmatmul.f32.gmra.mxu0 %v1242
    %v1561 = vpop.f32.mrf.mxu0
    %v1562 = vadd.f32 %v1542, %v1561
    %1563 = vdwg.mxu0
    %1564 = vmatpush.msra.mxu0 %v879
    %1565 = vmatpush.msra.mxu0 %v871
    %1566 = vmatpush.msra.mxu0 %v863
    %1567 = vmatpush.msra.mxu0 %v855
    %1568 = vmatpush.msra.mxu0 %v847
    %1569 = vmatpush.msra.mxu0 %v839
    %1570 = vmatpush.msra.mxu0 %v831
    %1571 = vmatpush.msra.mxu0 %v823
    %1572 = vmatpush.msra.mxu0 %v815
    %1573 = vmatpush.msra.mxu0 %v807
    %1574 = vmatpush.msra.mxu0 %v799
    %1575 = vmatpush.msra.mxu0 %v791
    %1576 = vmatpush.msra.mxu0 %v783
    %1577 = vmatpush.msra.mxu0 %v775
    %1578 = vmatpush.msra.mxu0 %v767
    %1579 = vmatpush.msra.mxu0 %v759
    %1580 = vmatmul.f32.gmra.mxu0 %v1243
    %v1581 = vpop.f32.mrf.mxu0
    %v1582 = vadd.f32 %v1562, %v1581
    %1583 = vdwg.mxu0
    %1584 = vmatpush.msra.mxu0 %v1007
    %1585 = vmatpush.msra.mxu0 %v999
    %1586 = vmatpush.msra.mxu0 %v991
    %1587 = vmatpush.msra.mxu0 %v983
    %1588 = vmatpush.msra.mxu0 %v975
    %1589 = vmatpush.msra.mxu0 %v967
    %1590 = vmatpush.msra.mxu0 %v959
    %1591 = vmatpush.msra.mxu0 %v951
    %1592 = vmatpush.msra.mxu0 %v943
    %1593 = vmatpush.msra.mxu0 %v935
    %1594 = vmatpush.msra.mxu0 %v927
    %1595 = vmatpush.msra.mxu0 %v919
    %1596 = vmatpush.msra.mxu0 %v911
    %1597 = vmatpush.msra.mxu0 %v903
    %1598 = vmatpush.msra.mxu0 %v895
    %1599 = vmatpush.msra.mxu0 %v887
    %1600 = vmatmul.f32.gmra.mxu0 %v1244
    %v1601 = vpop.f32.mrf.mxu0
    %v1602 = vadd.f32 %v1582, %v1601
    %1603 = vdwg.mxu0
    %1604 = vmatpush.msra.mxu0 %v1135
    %1605 = vmatpush.msra.mxu0 %v1127
    %1606 = vmatpush.msra.mxu0 %v1119
    %1607 = vmatpush.msra.mxu0 %v1111
    %1608 = vmatpush.msra.mxu0 %v1103
    %1609 = vmatpush.msra.mxu0 %v1095
    %1610 = vmatpush.msra.mxu0 %v1087
    %1611 = vmatpush.msra.mxu0 %v1079
    %1612 = vmatpush.msra.mxu0 %v1071
    %1613 = vmatpush.msra.mxu0 %v1063
    %1614 = vmatpush.msra.mxu0 %v1055
    %1615 = vmatpush.msra.mxu0 %v1047
    %1616 = vmatpush.msra.mxu0 %v1039
    %1617 = vmatpush.msra.mxu0 %v1031
    %1618 = vmatpush.msra.mxu0 %v1023
    %1619 = vmatpush.msra.mxu0 %v1015
    %1620 = vmatmul.f32.gmra.mxu0 %v1245
    %v1621 = vpop.f32.mrf.mxu0
    %v1622 = vadd.f32 %v1602, %v1621
    %1623 = vdwg.mxu0
    %1624 = vmatpush.msra.mxu0 0.0
    %1625 = vmatpush.msra.mxu0 0.0
    %1626 = vmatpush.msra.mxu0 0.0
    %1627 = vmatpush.msra.mxu0 0.0
    %1628 = vmatpush.msra.mxu0 0.0
    %1629 = vmatpush.msra.mxu0 0.0
    %1630 = vmatpush.msra.mxu0 0.0
    %1631 = vmatpush.msra.mxu0 %v1264
    %1632 = vmatpush.msra.mxu0 %v1199
    %1633 = vmatpush.msra.mxu0 %v1191
    %1634 = vmatpush.msra.mxu0 %v1183
    %1635 = vmatpush.msra.mxu0 %v1175
    %1636 = vmatpush.msra.mxu0 %v1167
    %1637 = vmatpush.msra.mxu0 %v1159
    %1638 = vmatpush.msra.mxu0 %v1151
    %1639 = vmatpush.msra.mxu0 %v1143
    %1640 = vmatmul.f32.gmra.mxu0 %v1257
    %v1641 = vpop.f32.mrf.mxu0
    %v1642 = vadd.f32 %v1622, %v1641
    %1643 = vdwg.mxu0
    %1644 = vmatpush.msra.mxu0 %v240
    %1645 = vmatpush.msra.mxu0 %v232
    %1646 = vmatpush.msra.mxu0 %v224
    %1647 = vmatpush.msra.mxu0 %v216
    %1648 = vmatpush.msra.mxu0 %v208
    %1649 = vmatpush.msra.mxu0 %v200
    %1650 = vmatpush.msra.mxu0 %v192
    %1651 = vmatpush.msra.mxu0 %v184
    %1652 = vmatpush.msra.mxu0 %v176
    %1653 = vmatpush.msra.mxu0 %v168
    %1654 = vmatpush.msra.mxu0 %v160
    %1655 = vmatpush.msra.mxu0 %v152
    %1656 = vmatpush.msra.mxu0 %v144
    %1657 = vmatpush.msra.mxu0 %v136
    %1658 = vmatpush.msra.mxu0 %v128
    %1659 = vmatpush.msra.mxu0 %v120
    %1660 = vmatmul.f32.gmra.mxu0 %v1238
    %v1661 = vpop.f32.mrf.mxu0
    %v1662 = vadd.f32 %v1218, %v1661
    %1663 = vdwg.mxu0
    %1664 = vmatpush.msra.mxu0 %v368
    %1665 = vmatpush.msra.mxu0 %v360
    %1666 = vmatpush.msra.mxu0 %v352
    %1667 = vmatpush.msra.mxu0 %v344
    %1668 = vmatpush.msra.mxu0 %v336
    %1669 = vmatpush.msra.mxu0 %v328
    %1670 = vmatpush.msra.mxu0 %v320
    %1671 = vmatpush.msra.mxu0 %v312
    %1672 = vmatpush.msra.mxu0 %v304
    %1673 = vmatpush.msra.mxu0 %v296
    %1674 = vmatpush.msra.mxu0 %v288
    %1675 = vmatpush.msra.mxu0 %v280
    %1676 = vmatpush.msra.mxu0 %v272
    %1677 = vmatpush.msra.mxu0 %v264
    %1678 = vmatpush.msra.mxu0 %v256
    %1679 = vmatpush.msra.mxu0 %v248
    %1680 = vmatmul.f32.gmra.mxu0 %v1239
    %v1681 = vpop.f32.mrf.mxu0
    %v1682 = vadd.f32 %v1662, %v1681
    %1683 = vdwg.mxu0
    %1684 = vmatpush.msra.mxu0 %v496
    %1685 = vmatpush.msra.mxu0 %v488
    %1686 = vmatpush.msra.mxu0 %v480
    %1687 = vmatpush.msra.mxu0 %v472
    %1688 = vmatpush.msra.mxu0 %v464
    %1689 = vmatpush.msra.mxu0 %v456
    %1690 = vmatpush.msra.mxu0 %v448
    %1691 = vmatpush.msra.mxu0 %v440
    %1692 = vmatpush.msra.mxu0 %v432
    %1693 = vmatpush.msra.mxu0 %v424
    %1694 = vmatpush.msra.mxu0 %v416
    %1695 = vmatpush.msra.mxu0 %v408
    %1696 = vmatpush.msra.mxu0 %v400
    %1697 = vmatpush.msra.mxu0 %v392
    %1698 = vmatpush.msra.mxu0 %v384
    %1699 = vmatpush.msra.mxu0 %v376
    %1700 = vmatmul.f32.gmra.mxu0 %v1240
    %v1701 = vpop.f32.mrf.mxu0
    %v1702 = vadd.f32 %v1682, %v1701
    %1703 = vdwg.mxu0
    %1704 = vmatpush.msra.mxu0 %v624
    %1705 = vmatpush.msra.mxu0 %v616
    %1706 = vmatpush.msra.mxu0 %v608
    %1707 = vmatpush.msra.mxu0 %v600
    %1708 = vmatpush.msra.mxu0 %v592
    %1709 = vmatpush.msra.mxu0 %v584
    %1710 = vmatpush.msra.mxu0 %v576
    %1711 = vmatpush.msra.mxu0 %v568
    %1712 = vmatpush.msra.mxu0 %v560
    %1713 = vmatpush.msra.mxu0 %v552
    %1714 = vmatpush.msra.mxu0 %v544
    %1715 = vmatpush.msra.mxu0 %v536
    %1716 = vmatpush.msra.mxu0 %v528
    %1717 = vmatpush.msra.mxu0 %v520
    %1718 = vmatpush.msra.mxu0 %v512
    %1719 = vmatpush.msra.mxu0 %v504
    %1720 = vmatmul.f32.gmra.mxu0 %v1241
    %v1721 = vpop.f32.mrf.mxu0
    %v1722 = vadd.f32 %v1702, %v1721
    %1723 = vdwg.mxu0
    %1724 = vmatpush.msra.mxu0 %v752
    %1725 = vmatpush.msra.mxu0 %v744
    %1726 = vmatpush.msra.mxu0 %v736
    %1727 = vmatpush.msra.mxu0 %v728
    %1728 = vmatpush.msra.mxu0 %v720
    %1729 = vmatpush.msra.mxu0 %v712
    %1730 = vmatpush.msra.mxu0 %v704
    %1731 = vmatpush.msra.mxu0 %v696
    %1732 = vmatpush.msra.mxu0 %v688
    %1733 = vmatpush.msra.mxu0 %v680
    %1734 = vmatpush.msra.mxu0 %v672
    %1735 = vmatpush.msra.mxu0 %v664
    %1736 = vmatpush.msra.mxu0 %v656
    %1737 = vmatpush.msra.mxu0 %v648
    %1738 = vmatpush.msra.mxu0 %v640
    %1739 = vmatpush.msra.mxu0 %v632
    %1740 = vmatmul.f32.gmra.mxu0 %v1242
    %v1741 = vpop.f32.mrf.mxu0
    %v1742 = vadd.f32 %v1722, %v1741
    %1743 = vdwg.mxu0
    %1744 = vmatpush.msra.mxu0 %v880
    %1745 = vmatpush.msra.mxu0 %v872
    %1746 = vmatpush.msra.mxu0 %v864
    %1747 = vmatpush.msra.mxu0 %v856
    %1748 = vmatpush.msra.mxu0 %v848
    %1749 = vmatpush.msra.mxu0 %v840
    %1750 = vmatpush.msra.mxu0 %v832
    %1751 = vmatpush.msra.mxu0 %v824
    %1752 = vmatpush.msra.mxu0 %v816
    %1753 = vmatpush.msra.mxu0 %v808
    %1754 = vmatpush.msra.mxu0 %v800
    %1755 = vmatpush.msra.mxu0 %v792
    %1756 = vmatpush.msra.mxu0 %v784
    %1757 = vmatpush.msra.mxu0 %v776
    %1758 = vmatpush.msra.mxu0 %v768
    %1759 = vmatpush.msra.mxu0 %v760
    %1760 = vmatmul.f32.gmra.mxu0 %v1243
    %v1761 = vpop.f32.mrf.mxu0
    %v1762 = vadd.f32 %v1742, %v1761
    %1763 = vdwg.mxu0
    %1764 = vmatpush.msra.mxu0 %v1008
    %1765 = vmatpush.msra.mxu0 %v1000
    %1766 = vmatpush.msra.mxu0 %v992
    %1767 = vmatpush.msra.mxu0 %v984
    %1768 = vmatpush.msra.mxu0 %v976
    %1769 = vmatpush.msra.mxu0 %v968
    %1770 = vmatpush.msra.mxu0 %v960
    %1771 = vmatpush.msra.mxu0 %v952
    %1772 = vmatpush.msra.mxu0 %v944
    %1773 = vmatpush.msra.mxu0 %v936
    %1774 = vmatpush.msra.mxu0 %v928
    %1775 = vmatpush.msra.mxu0 %v920
    %1776 = vmatpush.msra.mxu0 %v912
    %1777 = vmatpush.msra.mxu0 %v904
    %1778 = vmatpush.msra.mxu0 %v896
    %1779 = vmatpush.msra.mxu0 %v888
    %1780 = vmatmul.f32.gmra.mxu0 %v1244
    %v1781 = vpop.f32.mrf.mxu0
    %v1782 = vadd.f32 %v1762, %v1781
    %1783 = vdwg.mxu0
    %1784 = vmatpush.msra.mxu0 %v1136
    %1785 = vmatpush.msra.mxu0 %v1128
    %1786 = vmatpush.msra.mxu0 %v1120
    %1787 = vmatpush.msra.mxu0 %v1112
    %1788 = vmatpush.msra.mxu0 %v1104
    %1789 = vmatpush.msra.mxu0 %v1096
    %1790 = vmatpush.msra.mxu0 %v1088
    %1791 = vmatpush.msra.mxu0 %v1080
    %1792 = vmatpush.msra.mxu0 %v1072
    %1793 = vmatpush.msra.mxu0 %v1064
    %1794 = vmatpush.msra.mxu0 %v1056
    %1795 = vmatpush.msra.mxu0 %v1048
    %1796 = vmatpush.msra.mxu0 %v1040
    %1797 = vmatpush.msra.mxu0 %v1032
    %1798 = vmatpush.msra.mxu0 %v1024
    %1799 = vmatpush.msra.mxu0 %v1016
    %1800 = vmatmul.f32.gmra.mxu0 %v1245
    %v1801 = vpop.f32.mrf.mxu0
    %v1802 = vadd.f32 %v1782, %v1801
    %1803 = vdwg.mxu0
    %1804 = vmatpush.msra.mxu0 0.0
    %1805 = vmatpush.msra.mxu0 0.0
    %1806 = vmatpush.msra.mxu0 0.0
    %1807 = vmatpush.msra.mxu0 0.0
    %1808 = vmatpush.msra.mxu0 0.0
    %1809 = vmatpush.msra.mxu0 0.0
    %1810 = vmatpush.msra.mxu0 0.0
    %1811 = vmatpush.msra.mxu0 %v1267
    %1812 = vmatpush.msra.mxu0 %v1200
    %1813 = vmatpush.msra.mxu0 %v1192
    %1814 = vmatpush.msra.mxu0 %v1184
    %1815 = vmatpush.msra.mxu0 %v1176
    %1816 = vmatpush.msra.mxu0 %v1168
    %1817 = vmatpush.msra.mxu0 %v1160
    %1818 = vmatpush.msra.mxu0 %v1152
    %1819 = vmatpush.msra.mxu0 %v1144
    %1820 = vmatmul.f32.gmra.mxu0 %v1257
    %v1821 = vpop.f32.mrf.mxu0
    %v1822 = vadd.f32 %v1802, %v1821
    %1823 = vdwg.mxu0
    %1824 = vmatpush.msra.mxu0 %v241
    %1825 = vmatpush.msra.mxu0 %v233
    %1826 = vmatpush.msra.mxu0 %v225
    %1827 = vmatpush.msra.mxu0 %v217
    %1828 = vmatpush.msra.mxu0 %v209
    %1829 = vmatpush.msra.mxu0 %v201
    %1830 = vmatpush.msra.mxu0 %v193
    %1831 = vmatpush.msra.mxu0 %v185
    %1832 = vmatpush.msra.mxu0 %v177
    %1833 = vmatpush.msra.mxu0 %v169
    %1834 = vmatpush.msra.mxu0 %v161
    %1835 = vmatpush.msra.mxu0 %v153
    %1836 = vmatpush.msra.mxu0 %v145
    %1837 = vmatpush.msra.mxu0 %v137
    %1838 = vmatpush.msra.mxu0 %v129
    %1839 = vmatpush.msra.mxu0 %v121
    %1840 = vmatmul.f32.gmra.mxu0 %v1238
    %v1841 = vpop.f32.mrf.mxu0
    %v1842 = vadd.f32 %v1219, %v1841
    %1843 = vdwg.mxu0
    %1844 = vmatpush.msra.mxu0 %v369
    %1845 = vmatpush.msra.mxu0 %v361
    %1846 = vmatpush.msra.mxu0 %v353
    %1847 = vmatpush.msra.mxu0 %v345
    %1848 = vmatpush.msra.mxu0 %v337
    %1849 = vmatpush.msra.mxu0 %v329
    %1850 = vmatpush.msra.mxu0 %v321
    %1851 = vmatpush.msra.mxu0 %v313
    %1852 = vmatpush.msra.mxu0 %v305
    %1853 = vmatpush.msra.mxu0 %v297
    %1854 = vmatpush.msra.mxu0 %v289
    %1855 = vmatpush.msra.mxu0 %v281
    %1856 = vmatpush.msra.mxu0 %v273
    %1857 = vmatpush.msra.mxu0 %v265
    %1858 = vmatpush.msra.mxu0 %v257
    %1859 = vmatpush.msra.mxu0 %v249
    %1860 = vmatmul.f32.gmra.mxu0 %v1239
    %v1861 = vpop.f32.mrf.mxu0
    %v1862 = vadd.f32 %v1842, %v1861
    %1863 = vdwg.mxu0
    %1864 = vmatpush.msra.mxu0 %v497
    %1865 = vmatpush.msra.mxu0 %v489
    %1866 = vmatpush.msra.mxu0 %v481
    %1867 = vmatpush.msra.mxu0 %v473
    %1868 = vmatpush.msra.mxu0 %v465
    %1869 = vmatpush.msra.mxu0 %v457
    %1870 = vmatpush.msra.mxu0 %v449
    %1871 = vmatpush.msra.mxu0 %v441
    %1872 = vmatpush.msra.mxu0 %v433
    %1873 = vmatpush.msra.mxu0 %v425
    %1874 = vmatpush.msra.mxu0 %v417
    %1875 = vmatpush.msra.mxu0 %v409
    %1876 = vmatpush.msra.mxu0 %v401
    %1877 = vmatpush.msra.mxu0 %v393
    %1878 = vmatpush.msra.mxu0 %v385
    %1879 = vmatpush.msra.mxu0 %v377
    %1880 = vmatmul.f32.gmra.mxu0 %v1240
    %v1881 = vpop.f32.mrf.mxu0
    %v1882 = vadd.f32 %v1862, %v1881
    %1883 = vdwg.mxu0
    %1884 = vmatpush.msra.mxu0 %v625
    %1885 = vmatpush.msra.mxu0 %v617
    %1886 = vmatpush.msra.mxu0 %v609
    %1887 = vmatpush.msra.mxu0 %v601
    %1888 = vmatpush.msra.mxu0 %v593
    %1889 = vmatpush.msra.mxu0 %v585
    %1890 = vmatpush.msra.mxu0 %v577
    %1891 = vmatpush.msra.mxu0 %v569
    %1892 = vmatpush.msra.mxu0 %v561
    %1893 = vmatpush.msra.mxu0 %v553
    %1894 = vmatpush.msra.mxu0 %v545
    %1895 = vmatpush.msra.mxu0 %v537
    %1896 = vmatpush.msra.mxu0 %v529
    %1897 = vmatpush.msra.mxu0 %v521
    %1898 = vmatpush.msra.mxu0 %v513
    %1899 = vmatpush.msra.mxu0 %v505
    %1900 = vmatmul.f32.gmra.mxu0 %v1241
    %v1901 = vpop.f32.mrf.mxu0
    %v1902 = vadd.f32 %v1882, %v1901
    %1903 = vdwg.mxu0
    %1904 = vmatpush.msra.mxu0 %v753
    %1905 = vmatpush.msra.mxu0 %v745
    %1906 = vmatpush.msra.mxu0 %v737
    %1907 = vmatpush.msra.mxu0 %v729
    %1908 = vmatpush.msra.mxu0 %v721
    %1909 = vmatpush.msra.mxu0 %v713
    %1910 = vmatpush.msra.mxu0 %v705
    %1911 = vmatpush.msra.mxu0 %v697
    %1912 = vmatpush.msra.mxu0 %v689
    %1913 = vmatpush.msra.mxu0 %v681
    %1914 = vmatpush.msra.mxu0 %v673
    %1915 = vmatpush.msra.mxu0 %v665
    %1916 = vmatpush.msra.mxu0 %v657
    %1917 = vmatpush.msra.mxu0 %v649
    %1918 = vmatpush.msra.mxu0 %v641
    %1919 = vmatpush.msra.mxu0 %v633
    %1920 = vmatmul.f32.gmra.mxu0 %v1242
    %v1921 = vpop.f32.mrf.mxu0
    %v1922 = vadd.f32 %v1902, %v1921
    %1923 = vdwg.mxu0
    %1924 = vmatpush.msra.mxu0 %v881
    %1925 = vmatpush.msra.mxu0 %v873
    %1926 = vmatpush.msra.mxu0 %v865
    %1927 = vmatpush.msra.mxu0 %v857
    %1928 = vmatpush.msra.mxu0 %v849
    %1929 = vmatpush.msra.mxu0 %v841
    %1930 = vmatpush.msra.mxu0 %v833
    %1931 = vmatpush.msra.mxu0 %v825
    %1932 = vmatpush.msra.mxu0 %v817
    %1933 = vmatpush.msra.mxu0 %v809
    %1934 = vmatpush.msra.mxu0 %v801
    %1935 = vmatpush.msra.mxu0 %v793
    %1936 = vmatpush.msra.mxu0 %v785
    %1937 = vmatpush.msra.mxu0 %v777
    %1938 = vmatpush.msra.mxu0 %v769
    %1939 = vmatpush.msra.mxu0 %v761
    %1940 = vmatmul.f32.gmra.mxu0 %v1243
    %v1941 = vpop.f32.mrf.mxu0
    %v1942 = vadd.f32 %v1922, %v1941
    %1943 = vdwg.mxu0
    %1944 = vmatpush.msra.mxu0 %v1009
    %1945 = vmatpush.msra.mxu0 %v1001
    %1946 = vmatpush.msra.mxu0 %v993
    %1947 = vmatpush.msra.mxu0 %v985
    %1948 = vmatpush.msra.mxu0 %v977
    %1949 = vmatpush.msra.mxu0 %v969
    %1950 = vmatpush.msra.mxu0 %v961
    %1951 = vmatpush.msra.mxu0 %v953
    %1952 = vmatpush.msra.mxu0 %v945
    %1953 = vmatpush.msra.mxu0 %v937
    %1954 = vmatpush.msra.mxu0 %v929
    %1955 = vmatpush.msra.mxu0 %v921
    %1956 = vmatpush.msra.mxu0 %v913
    %1957 = vmatpush.msra.mxu0 %v905
    %1958 = vmatpush.msra.mxu0 %v897
    %1959 = vmatpush.msra.mxu0 %v889
    %1960 = vmatmul.f32.gmra.mxu0 %v1244
    %v1961 = vpop.f32.mrf.mxu0
    %v1962 = vadd.f32 %v1942, %v1961
    %1963 = vdwg.mxu0
    %1964 = vmatpush.msra.mxu0 %v1137
    %1965 = vmatpush.msra.mxu0 %v1129
    %1966 = vmatpush.msra.mxu0 %v1121
    %1967 = vmatpush.msra.mxu0 %v1113
    %1968 = vmatpush.msra.mxu0 %v1105
    %1969 = vmatpush.msra.mxu0 %v1097
    %1970 = vmatpush.msra.mxu0 %v1089
    %1971 = vmatpush.msra.mxu0 %v1081
    %1972 = vmatpush.msra.mxu0 %v1073
    %1973 = vmatpush.msra.mxu0 %v1065
    %1974 = vmatpush.msra.mxu0 %v1057
    %1975 = vmatpush.msra.mxu0 %v1049
    %1976 = vmatpush.msra.mxu0 %v1041
    %1977 = vmatpush.msra.mxu0 %v1033
    %1978 = vmatpush.msra.mxu0 %v1025
    %1979 = vmatpush.msra.mxu0 %v1017
    %1980 = vmatmul.f32.gmra.mxu0 %v1245
    %v1981 = vpop.f32.mrf.mxu0
    %v1982 = vadd.f32 %v1962, %v1981
    %1983 = vdwg.mxu0
    %1984 = vmatpush.msra.mxu0 0.0
    %1985 = vmatpush.msra.mxu0 0.0
    %1986 = vmatpush.msra.mxu0 0.0
    %1987 = vmatpush.msra.mxu0 0.0
    %1988 = vmatpush.msra.mxu0 0.0
    %1989 = vmatpush.msra.mxu0 0.0
    %1990 = vmatpush.msra.mxu0 0.0
    %1991 = vmatpush.msra.mxu0 %v1270
    %1992 = vmatpush.msra.mxu0 %v1201
    %1993 = vmatpush.msra.mxu0 %v1193
    %1994 = vmatpush.msra.mxu0 %v1185
    %1995 = vmatpush.msra.mxu0 %v1177
    %1996 = vmatpush.msra.mxu0 %v1169
    %1997 = vmatpush.msra.mxu0 %v1161
    %1998 = vmatpush.msra.mxu0 %v1153
    %1999 = vmatpush.msra.mxu0 %v1145
    %2000 = vmatmul.f32.gmra.mxu0 %v1257
    %v2001 = vpop.f32.mrf.mxu0
    %v2002 = vadd.f32 %v1982, %v2001
    %2003 = vdwg.mxu0
    %2004 = vmatpush.msra.mxu0 %v242
    %2005 = vmatpush.msra.mxu0 %v234
    %2006 = vmatpush.msra.mxu0 %v226
    %2007 = vmatpush.msra.mxu0 %v218
    %2008 = vmatpush.msra.mxu0 %v210
    %2009 = vmatpush.msra.mxu0 %v202
    %2010 = vmatpush.msra.mxu0 %v194
    %2011 = vmatpush.msra.mxu0 %v186
    %2012 = vmatpush.msra.mxu0 %v178
    %2013 = vmatpush.msra.mxu0 %v170
    %2014 = vmatpush.msra.mxu0 %v162
    %2015 = vmatpush.msra.mxu0 %v154
    %2016 = vmatpush.msra.mxu0 %v146
    %2017 = vmatpush.msra.mxu0 %v138
    %2018 = vmatpush.msra.mxu0 %v130
    %2019 = vmatpush.msra.mxu0 %v122
    %2020 = vmatmul.f32.gmra.mxu0 %v1238
    %v2021 = vpop.f32.mrf.mxu0
    %v2022 = vadd.f32 %v1220, %v2021
    %2023 = vdwg.mxu0
    %2024 = vmatpush.msra.mxu0 %v370
    %2025 = vmatpush.msra.mxu0 %v362
    %2026 = vmatpush.msra.mxu0 %v354
    %2027 = vmatpush.msra.mxu0 %v346
    %2028 = vmatpush.msra.mxu0 %v338
    %2029 = vmatpush.msra.mxu0 %v330
    %2030 = vmatpush.msra.mxu0 %v322
    %2031 = vmatpush.msra.mxu0 %v314
    %2032 = vmatpush.msra.mxu0 %v306
    %2033 = vmatpush.msra.mxu0 %v298
    %2034 = vmatpush.msra.mxu0 %v290
    %2035 = vmatpush.msra.mxu0 %v282
    %2036 = vmatpush.msra.mxu0 %v274
    %2037 = vmatpush.msra.mxu0 %v266
    %2038 = vmatpush.msra.mxu0 %v258
    %2039 = vmatpush.msra.mxu0 %v250
    %2040 = vmatmul.f32.gmra.mxu0 %v1239
    %v2041 = vpop.f32.mrf.mxu0
    %v2042 = vadd.f32 %v2022, %v2041
    %2043 = vdwg.mxu0
    %2044 = vmatpush.msra.mxu0 %v498
    %2045 = vmatpush.msra.mxu0 %v490
    %2046 = vmatpush.msra.mxu0 %v482
    %2047 = vmatpush.msra.mxu0 %v474
    %2048 = vmatpush.msra.mxu0 %v466
    %2049 = vmatpush.msra.mxu0 %v458
    %2050 = vmatpush.msra.mxu0 %v450
    %2051 = vmatpush.msra.mxu0 %v442
    %2052 = vmatpush.msra.mxu0 %v434
    %2053 = vmatpush.msra.mxu0 %v426
    %2054 = vmatpush.msra.mxu0 %v418
    %2055 = vmatpush.msra.mxu0 %v410
    %2056 = vmatpush.msra.mxu0 %v402
    %2057 = vmatpush.msra.mxu0 %v394
    %2058 = vmatpush.msra.mxu0 %v386
    %2059 = vmatpush.msra.mxu0 %v378
    %2060 = vmatmul.f32.gmra.mxu0 %v1240
    %v2061 = vpop.f32.mrf.mxu0
    %v2062 = vadd.f32 %v2042, %v2061
    %2063 = vdwg.mxu0
    %2064 = vmatpush.msra.mxu0 %v626
    %2065 = vmatpush.msra.mxu0 %v618
    %2066 = vmatpush.msra.mxu0 %v610
    %2067 = vmatpush.msra.mxu0 %v602
    %2068 = vmatpush.msra.mxu0 %v594
    %2069 = vmatpush.msra.mxu0 %v586
    %2070 = vmatpush.msra.mxu0 %v578
    %2071 = vmatpush.msra.mxu0 %v570
    %2072 = vmatpush.msra.mxu0 %v562
    %2073 = vmatpush.msra.mxu0 %v554
    %2074 = vmatpush.msra.mxu0 %v546
    %2075 = vmatpush.msra.mxu0 %v538
    %2076 = vmatpush.msra.mxu0 %v530
    %2077 = vmatpush.msra.mxu0 %v522
    %2078 = vmatpush.msra.mxu0 %v514
    %2079 = vmatpush.msra.mxu0 %v506
    %2080 = vmatmul.f32.gmra.mxu0 %v1241
    %v2081 = vpop.f32.mrf.mxu0
    %v2082 = vadd.f32 %v2062, %v2081
    %2083 = vdwg.mxu0
    %2084 = vmatpush.msra.mxu0 %v754
    %2085 = vmatpush.msra.mxu0 %v746
    %2086 = vmatpush.msra.mxu0 %v738
    %2087 = vmatpush.msra.mxu0 %v730
    %2088 = vmatpush.msra.mxu0 %v722
    %2089 = vmatpush.msra.mxu0 %v714
    %2090 = vmatpush.msra.mxu0 %v706
    %2091 = vmatpush.msra.mxu0 %v698
    %2092 = vmatpush.msra.mxu0 %v690
    %2093 = vmatpush.msra.mxu0 %v682
    %2094 = vmatpush.msra.mxu0 %v674
    %2095 = vmatpush.msra.mxu0 %v666
    %2096 = vmatpush.msra.mxu0 %v658
    %2097 = vmatpush.msra.mxu0 %v650
    %2098 = vmatpush.msra.mxu0 %v642
    %2099 = vmatpush.msra.mxu0 %v634
    %2100 = vmatmul.f32.gmra.mxu0 %v1242
    %v2101 = vpop.f32.mrf.mxu0
    %v2102 = vadd.f32 %v2082, %v2101
    %2103 = vdwg.mxu0
    %2104 = vmatpush.msra.mxu0 %v882
    %2105 = vmatpush.msra.mxu0 %v874
    %2106 = vmatpush.msra.mxu0 %v866
    %2107 = vmatpush.msra.mxu0 %v858
    %2108 = vmatpush.msra.mxu0 %v850
    %2109 = vmatpush.msra.mxu0 %v842
    %2110 = vmatpush.msra.mxu0 %v834
    %2111 = vmatpush.msra.mxu0 %v826
    %2112 = vmatpush.msra.mxu0 %v818
    %2113 = vmatpush.msra.mxu0 %v810
    %2114 = vmatpush.msra.mxu0 %v802
    %2115 = vmatpush.msra.mxu0 %v794
    %2116 = vmatpush.msra.mxu0 %v786
    %2117 = vmatpush.msra.mxu0 %v778
    %2118 = vmatpush.msra.mxu0 %v770
    %2119 = vmatpush.msra.mxu0 %v762
    %2120 = vmatmul.f32.gmra.mxu0 %v1243
    %v2121 = vpop.f32.mrf.mxu0
    %v2122 = vadd.f32 %v2102, %v2121
    %2123 = vdwg.mxu0
    %2124 = vmatpush.msra.mxu0 %v1010
    %2125 = vmatpush.msra.mxu0 %v1002
    %2126 = vmatpush.msra.mxu0 %v994
    %2127 = vmatpush.msra.mxu0 %v986
    %2128 = vmatpush.msra.mxu0 %v978
    %2129 = vmatpush.msra.mxu0 %v970
    %2130 = vmatpush.msra.mxu0 %v962
    %2131 = vmatpush.msra.mxu0 %v954
    %2132 = vmatpush.msra.mxu0 %v946
    %2133 = vmatpush.msra.mxu0 %v938
    %2134 = vmatpush.msra.mxu0 %v930
    %2135 = vmatpush.msra.mxu0 %v922
    %2136 = vmatpush.msra.mxu0 %v914
    %2137 = vmatpush.msra.mxu0 %v906
    %2138 = vmatpush.msra.mxu0 %v898
    %2139 = vmatpush.msra.mxu0 %v890
    %2140 = vmatmul.f32.gmra.mxu0 %v1244
    %v2141 = vpop.f32.mrf.mxu0
    %v2142 = vadd.f32 %v2122, %v2141
    %2143 = vdwg.mxu0
    %2144 = vmatpush.msra.mxu0 %v1138
    %2145 = vmatpush.msra.mxu0 %v1130
    %2146 = vmatpush.msra.mxu0 %v1122
    %2147 = vmatpush.msra.mxu0 %v1114
    %2148 = vmatpush.msra.mxu0 %v1106
    %2149 = vmatpush.msra.mxu0 %v1098
    %2150 = vmatpush.msra.mxu0 %v1090
    %2151 = vmatpush.msra.mxu0 %v1082
    %2152 = vmatpush.msra.mxu0 %v1074
    %2153 = vmatpush.msra.mxu0 %v1066
    %2154 = vmatpush.msra.mxu0 %v1058
    %2155 = vmatpush.msra.mxu0 %v1050
    %2156 = vmatpush.msra.mxu0 %v1042
    %2157 = vmatpush.msra.mxu0 %v1034
    %2158 = vmatpush.msra.mxu0 %v1026
    %2159 = vmatpush.msra.mxu0 %v1018
    %2160 = vmatmul.f32.gmra.mxu0 %v1245
    %v2161 = vpop.f32.mrf.mxu0
    %v2162 = vadd.f32 %v2142, %v2161
    %2163 = vdwg.mxu0
    %2164 = vmatpush.msra.mxu0 0.0
    %2165 = vmatpush.msra.mxu0 0.0
    %2166 = vmatpush.msra.mxu0 0.0
    %2167 = vmatpush.msra.mxu0 0.0
    %2168 = vmatpush.msra.mxu0 0.0
    %2169 = vmatpush.msra.mxu0 0.0
    %2170 = vmatpush.msra.mxu0 0.0
    %2171 = vmatpush.msra.mxu0 %v1273
    %2172 = vmatpush.msra.mxu0 %v1202
    %2173 = vmatpush.msra.mxu0 %v1194
    %2174 = vmatpush.msra.mxu0 %v1186
    %2175 = vmatpush.msra.mxu0 %v1178
    %2176 = vmatpush.msra.mxu0 %v1170
    %2177 = vmatpush.msra.mxu0 %v1162
    %2178 = vmatpush.msra.mxu0 %v1154
    %2179 = vmatpush.msra.mxu0 %v1146
    %2180 = vmatmul.f32.gmra.mxu0 %v1257
    %v2181 = vpop.f32.mrf.mxu0
    %v2182 = vadd.f32 %v2162, %v2181
    %2183 = vdwg.mxu0
    %2184 = vmatpush.msra.mxu0 %v243
    %2185 = vmatpush.msra.mxu0 %v235
    %2186 = vmatpush.msra.mxu0 %v227
    %2187 = vmatpush.msra.mxu0 %v219
    %2188 = vmatpush.msra.mxu0 %v211
    %2189 = vmatpush.msra.mxu0 %v203
    %2190 = vmatpush.msra.mxu0 %v195
    %2191 = vmatpush.msra.mxu0 %v187
    %2192 = vmatpush.msra.mxu0 %v179
    %2193 = vmatpush.msra.mxu0 %v171
    %2194 = vmatpush.msra.mxu0 %v163
    %2195 = vmatpush.msra.mxu0 %v155
    %2196 = vmatpush.msra.mxu0 %v147
    %2197 = vmatpush.msra.mxu0 %v139
    %2198 = vmatpush.msra.mxu0 %v131
    %2199 = vmatpush.msra.mxu0 %v123
    %2200 = vmatmul.f32.gmra.mxu0 %v1238
    %v2201 = vpop.f32.mrf.mxu0
    %v2202 = vadd.f32 %v1221, %v2201
    %2203 = vdwg.mxu0
    %2204 = vmatpush.msra.mxu0 %v371
    %2205 = vmatpush.msra.mxu0 %v363
    %2206 = vmatpush.msra.mxu0 %v355
    %2207 = vmatpush.msra.mxu0 %v347
    %2208 = vmatpush.msra.mxu0 %v339
    %2209 = vmatpush.msra.mxu0 %v331
    %2210 = vmatpush.msra.mxu0 %v323
    %2211 = vmatpush.msra.mxu0 %v315
    %2212 = vmatpush.msra.mxu0 %v307
    %2213 = vmatpush.msra.mxu0 %v299
    %2214 = vmatpush.msra.mxu0 %v291
    %2215 = vmatpush.msra.mxu0 %v283
    %2216 = vmatpush.msra.mxu0 %v275
    %2217 = vmatpush.msra.mxu0 %v267
    %2218 = vmatpush.msra.mxu0 %v259
    %2219 = vmatpush.msra.mxu0 %v251
    %2220 = vmatmul.f32.gmra.mxu0 %v1239
    %v2221 = vpop.f32.mrf.mxu0
    %v2222 = vadd.f32 %v2202, %v2221
    %2223 = vdwg.mxu0
    %2224 = vmatpush.msra.mxu0 %v499
    %2225 = vmatpush.msra.mxu0 %v491
    %2226 = vmatpush.msra.mxu0 %v483
    %2227 = vmatpush.msra.mxu0 %v475
    %2228 = vmatpush.msra.mxu0 %v467
    %2229 = vmatpush.msra.mxu0 %v459
    %2230 = vmatpush.msra.mxu0 %v451
    %2231 = vmatpush.msra.mxu0 %v443
    %2232 = vmatpush.msra.mxu0 %v435
    %2233 = vmatpush.msra.mxu0 %v427
    %2234 = vmatpush.msra.mxu0 %v419
    %2235 = vmatpush.msra.mxu0 %v411
    %2236 = vmatpush.msra.mxu0 %v403
    %2237 = vmatpush.msra.mxu0 %v395
    %2238 = vmatpush.msra.mxu0 %v387
    %2239 = vmatpush.msra.mxu0 %v379
    %2240 = vmatmul.f32.gmra.mxu0 %v1240
    %v2241 = vpop.f32.mrf.mxu0
    %v2242 = vadd.f32 %v2222, %v2241
    %2243 = vdwg.mxu0
    %2244 = vmatpush.msra.mxu0 %v627
    %2245 = vmatpush.msra.mxu0 %v619
    %2246 = vmatpush.msra.mxu0 %v611
    %2247 = vmatpush.msra.mxu0 %v603
    %2248 = vmatpush.msra.mxu0 %v595
    %2249 = vmatpush.msra.mxu0 %v587
    %2250 = vmatpush.msra.mxu0 %v579
    %2251 = vmatpush.msra.mxu0 %v571
    %2252 = vmatpush.msra.mxu0 %v563
    %2253 = vmatpush.msra.mxu0 %v555
    %2254 = vmatpush.msra.mxu0 %v547
    %2255 = vmatpush.msra.mxu0 %v539
    %2256 = vmatpush.msra.mxu0 %v531
    %2257 = vmatpush.msra.mxu0 %v523
    %2258 = vmatpush.msra.mxu0 %v515
    %2259 = vmatpush.msra.mxu0 %v507
    %2260 = vmatmul.f32.gmra.mxu0 %v1241
    %v2261 = vpop.f32.mrf.mxu0
    %v2262 = vadd.f32 %v2242, %v2261
    %2263 = vdwg.mxu0
    %2264 = vmatpush.msra.mxu0 %v755
    %2265 = vmatpush.msra.mxu0 %v747
    %2266 = vmatpush.msra.mxu0 %v739
    %2267 = vmatpush.msra.mxu0 %v731
    %2268 = vmatpush.msra.mxu0 %v723
    %2269 = vmatpush.msra.mxu0 %v715
    %2270 = vmatpush.msra.mxu0 %v707
    %2271 = vmatpush.msra.mxu0 %v699
    %2272 = vmatpush.msra.mxu0 %v691
    %2273 = vmatpush.msra.mxu0 %v683
    %2274 = vmatpush.msra.mxu0 %v675
    %2275 = vmatpush.msra.mxu0 %v667
    %2276 = vmatpush.msra.mxu0 %v659
    %2277 = vmatpush.msra.mxu0 %v651
    %2278 = vmatpush.msra.mxu0 %v643
    %2279 = vmatpush.msra.mxu0 %v635
    %2280 = vmatmul.f32.gmra.mxu0 %v1242
    %v2281 = vpop.f32.mrf.mxu0
    %v2282 = vadd.f32 %v2262, %v2281
    %2283 = vdwg.mxu0
    %2284 = vmatpush.msra.mxu0 %v883
    %2285 = vmatpush.msra.mxu0 %v875
    %2286 = vmatpush.msra.mxu0 %v867
    %2287 = vmatpush.msra.mxu0 %v859
    %2288 = vmatpush.msra.mxu0 %v851
    %2289 = vmatpush.msra.mxu0 %v843
    %2290 = vmatpush.msra.mxu0 %v835
    %2291 = vmatpush.msra.mxu0 %v827
    %2292 = vmatpush.msra.mxu0 %v819
    %2293 = vmatpush.msra.mxu0 %v811
    %2294 = vmatpush.msra.mxu0 %v803
    %2295 = vmatpush.msra.mxu0 %v795
    %2296 = vmatpush.msra.mxu0 %v787
    %2297 = vmatpush.msra.mxu0 %v779
    %2298 = vmatpush.msra.mxu0 %v771
    %2299 = vmatpush.msra.mxu0 %v763
    %2300 = vmatmul.f32.gmra.mxu0 %v1243
    %v2301 = vpop.f32.mrf.mxu0
    %v2302 = vadd.f32 %v2282, %v2301
    %2303 = vdwg.mxu0
    %2304 = vmatpush.msra.mxu0 %v1011
    %2305 = vmatpush.msra.mxu0 %v1003
    %2306 = vmatpush.msra.mxu0 %v995
    %2307 = vmatpush.msra.mxu0 %v987
    %2308 = vmatpush.msra.mxu0 %v979
    %2309 = vmatpush.msra.mxu0 %v971
    %2310 = vmatpush.msra.mxu0 %v963
    %2311 = vmatpush.msra.mxu0 %v955
    %2312 = vmatpush.msra.mxu0 %v947
    %2313 = vmatpush.msra.mxu0 %v939
    %2314 = vmatpush.msra.mxu0 %v931
    %2315 = vmatpush.msra.mxu0 %v923
    %2316 = vmatpush.msra.mxu0 %v915
    %2317 = vmatpush.msra.mxu0 %v907
    %2318 = vmatpush.msra.mxu0 %v899
    %2319 = vmatpush.msra.mxu0 %v891
    %2320 = vmatmul.f32.gmra.mxu0 %v1244
    %v2321 = vpop.f32.mrf.mxu0
    %v2322 = vadd.f32 %v2302, %v2321
    %2323 = vdwg.mxu0
    %2324 = vmatpush.msra.mxu0 %v1139
    %2325 = vmatpush.msra.mxu0 %v1131
    %2326 = vmatpush.msra.mxu0 %v1123
    %2327 = vmatpush.msra.mxu0 %v1115
    %2328 = vmatpush.msra.mxu0 %v1107
    %2329 = vmatpush.msra.mxu0 %v1099
    %2330 = vmatpush.msra.mxu0 %v1091
    %2331 = vmatpush.msra.mxu0 %v1083
    %2332 = vmatpush.msra.mxu0 %v1075
    %2333 = vmatpush.msra.mxu0 %v1067
    %2334 = vmatpush.msra.mxu0 %v1059
    %2335 = vmatpush.msra.mxu0 %v1051
    %2336 = vmatpush.msra.mxu0 %v1043
    %2337 = vmatpush.msra.mxu0 %v1035
    %2338 = vmatpush.msra.mxu0 %v1027
    %2339 = vmatpush.msra.mxu0 %v1019
    %2340 = vmatmul.f32.gmra.mxu0 %v1245
    %v2341 = vpop.f32.mrf.mxu0
    %v2342 = vadd.f32 %v2322, %v2341
    %2343 = vdwg.mxu0
    %2344 = vmatpush.msra.mxu0 0.0
    %2345 = vmatpush.msra.mxu0 0.0
    %2346 = vmatpush.msra.mxu0 0.0
    %2347 = vmatpush.msra.mxu0 0.0
    %2348 = vmatpush.msra.mxu0 0.0
    %2349 = vmatpush.msra.mxu0 0.0
    %2350 = vmatpush.msra.mxu0 0.0
    %2351 = vmatpush.msra.mxu0 %v1276
    %2352 = vmatpush.msra.mxu0 %v1203
    %2353 = vmatpush.msra.mxu0 %v1195
    %2354 = vmatpush.msra.mxu0 %v1187
    %2355 = vmatpush.msra.mxu0 %v1179
    %2356 = vmatpush.msra.mxu0 %v1171
    %2357 = vmatpush.msra.mxu0 %v1163
    %2358 = vmatpush.msra.mxu0 %v1155
    %2359 = vmatpush.msra.mxu0 %v1147
    %2360 = vmatmul.f32.gmra.mxu0 %v1257
    %v2361 = vpop.f32.mrf.mxu0
    %v2362 = vadd.f32 %v2342, %v2361
    %2363 = vdwg.mxu0
    %2364 = vmatpush.msra.mxu0 %v244
    %2365 = vmatpush.msra.mxu0 %v236
    %2366 = vmatpush.msra.mxu0 %v228
    %2367 = vmatpush.msra.mxu0 %v220
    %2368 = vmatpush.msra.mxu0 %v212
    %2369 = vmatpush.msra.mxu0 %v204
    %2370 = vmatpush.msra.mxu0 %v196
    %2371 = vmatpush.msra.mxu0 %v188
    %2372 = vmatpush.msra.mxu0 %v180
    %2373 = vmatpush.msra.mxu0 %v172
    %2374 = vmatpush.msra.mxu0 %v164
    %2375 = vmatpush.msra.mxu0 %v156
    %2376 = vmatpush.msra.mxu0 %v148
    %2377 = vmatpush.msra.mxu0 %v140
    %2378 = vmatpush.msra.mxu0 %v132
    %2379 = vmatpush.msra.mxu0 %v124
    %2380 = vmatmul.f32.gmra.mxu0 %v1238
    %v2381 = vpop.f32.mrf.mxu0
    %v2382 = vadd.f32 %v1222, %v2381
    %2383 = vdwg.mxu0
    %2384 = vmatpush.msra.mxu0 %v372
    %2385 = vmatpush.msra.mxu0 %v364
    %2386 = vmatpush.msra.mxu0 %v356
    %2387 = vmatpush.msra.mxu0 %v348
    %2388 = vmatpush.msra.mxu0 %v340
    %2389 = vmatpush.msra.mxu0 %v332
    %2390 = vmatpush.msra.mxu0 %v324
    %2391 = vmatpush.msra.mxu0 %v316
    %2392 = vmatpush.msra.mxu0 %v308
    %2393 = vmatpush.msra.mxu0 %v300
    %2394 = vmatpush.msra.mxu0 %v292
    %2395 = vmatpush.msra.mxu0 %v284
    %2396 = vmatpush.msra.mxu0 %v276
    %2397 = vmatpush.msra.mxu0 %v268
    %2398 = vmatpush.msra.mxu0 %v260
    %2399 = vmatpush.msra.mxu0 %v252
    %2400 = vmatmul.f32.gmra.mxu0 %v1239
    %v2401 = vpop.f32.mrf.mxu0
    %v2402 = vadd.f32 %v2382, %v2401
    %2403 = vdwg.mxu0
    %2404 = vmatpush.msra.mxu0 %v500
    %2405 = vmatpush.msra.mxu0 %v492
    %2406 = vmatpush.msra.mxu0 %v484
    %2407 = vmatpush.msra.mxu0 %v476
    %2408 = vmatpush.msra.mxu0 %v468
    %2409 = vmatpush.msra.mxu0 %v460
    %2410 = vmatpush.msra.mxu0 %v452
    %2411 = vmatpush.msra.mxu0 %v444
    %2412 = vmatpush.msra.mxu0 %v436
    %2413 = vmatpush.msra.mxu0 %v428
    %2414 = vmatpush.msra.mxu0 %v420
    %2415 = vmatpush.msra.mxu0 %v412
    %2416 = vmatpush.msra.mxu0 %v404
    %2417 = vmatpush.msra.mxu0 %v396
    %2418 = vmatpush.msra.mxu0 %v388
    %2419 = vmatpush.msra.mxu0 %v380
    %2420 = vmatmul.f32.gmra.mxu0 %v1240
    %v2421 = vpop.f32.mrf.mxu0
    %v2422 = vadd.f32 %v2402, %v2421
    %2423 = vdwg.mxu0
    %2424 = vmatpush.msra.mxu0 %v628
    %2425 = vmatpush.msra.mxu0 %v620
    %2426 = vmatpush.msra.mxu0 %v612
    %2427 = vmatpush.msra.mxu0 %v604
    %2428 = vmatpush.msra.mxu0 %v596
    %2429 = vmatpush.msra.mxu0 %v588
    %2430 = vmatpush.msra.mxu0 %v580
    %2431 = vmatpush.msra.mxu0 %v572
    %2432 = vmatpush.msra.mxu0 %v564
    %2433 = vmatpush.msra.mxu0 %v556
    %2434 = vmatpush.msra.mxu0 %v548
    %2435 = vmatpush.msra.mxu0 %v540
    %2436 = vmatpush.msra.mxu0 %v532
    %2437 = vmatpush.msra.mxu0 %v524
    %2438 = vmatpush.msra.mxu0 %v516
    %2439 = vmatpush.msra.mxu0 %v508
    %2440 = vmatmul.f32.gmra.mxu0 %v1241
    %v2441 = vpop.f32.mrf.mxu0
    %v2442 = vadd.f32 %v2422, %v2441
    %2443 = vdwg.mxu0
    %2444 = vmatpush.msra.mxu0 %v756
    %2445 = vmatpush.msra.mxu0 %v748
    %2446 = vmatpush.msra.mxu0 %v740
    %2447 = vmatpush.msra.mxu0 %v732
    %2448 = vmatpush.msra.mxu0 %v724
    %2449 = vmatpush.msra.mxu0 %v716
    %2450 = vmatpush.msra.mxu0 %v708
    %2451 = vmatpush.msra.mxu0 %v700
    %2452 = vmatpush.msra.mxu0 %v692
    %2453 = vmatpush.msra.mxu0 %v684
    %2454 = vmatpush.msra.mxu0 %v676
    %2455 = vmatpush.msra.mxu0 %v668
    %2456 = vmatpush.msra.mxu0 %v660
    %2457 = vmatpush.msra.mxu0 %v652
    %2458 = vmatpush.msra.mxu0 %v644
    %2459 = vmatpush.msra.mxu0 %v636
    %2460 = vmatmul.f32.gmra.mxu0 %v1242
    %v2461 = vpop.f32.mrf.mxu0
    %v2462 = vadd.f32 %v2442, %v2461
    %2463 = vdwg.mxu0
    %2464 = vmatpush.msra.mxu0 %v884
    %2465 = vmatpush.msra.mxu0 %v876
    %2466 = vmatpush.msra.mxu0 %v868
    %2467 = vmatpush.msra.mxu0 %v860
    %2468 = vmatpush.msra.mxu0 %v852
    %2469 = vmatpush.msra.mxu0 %v844
    %2470 = vmatpush.msra.mxu0 %v836
    %2471 = vmatpush.msra.mxu0 %v828
    %2472 = vmatpush.msra.mxu0 %v820
    %2473 = vmatpush.msra.mxu0 %v812
    %2474 = vmatpush.msra.mxu0 %v804
    %2475 = vmatpush.msra.mxu0 %v796
    %2476 = vmatpush.msra.mxu0 %v788
    %2477 = vmatpush.msra.mxu0 %v780
    %2478 = vmatpush.msra.mxu0 %v772
    %2479 = vmatpush.msra.mxu0 %v764
    %2480 = vmatmul.f32.gmra.mxu0 %v1243
    %v2481 = vpop.f32.mrf.mxu0
    %v2482 = vadd.f32 %v2462, %v2481
    %2483 = vdwg.mxu0
    %2484 = vmatpush.msra.mxu0 %v1012
    %2485 = vmatpush.msra.mxu0 %v1004
    %2486 = vmatpush.msra.mxu0 %v996
    %2487 = vmatpush.msra.mxu0 %v988
    %2488 = vmatpush.msra.mxu0 %v980
    %2489 = vmatpush.msra.mxu0 %v972
    %2490 = vmatpush.msra.mxu0 %v964
    %2491 = vmatpush.msra.mxu0 %v956
    %2492 = vmatpush.msra.mxu0 %v948
    %2493 = vmatpush.msra.mxu0 %v940
    %2494 = vmatpush.msra.mxu0 %v932
    %2495 = vmatpush.msra.mxu0 %v924
    %2496 = vmatpush.msra.mxu0 %v916
    %2497 = vmatpush.msra.mxu0 %v908
    %2498 = vmatpush.msra.mxu0 %v900
    %2499 = vmatpush.msra.mxu0 %v892
    %2500 = vmatmul.f32.gmra.mxu0 %v1244
    %v2501 = vpop.f32.mrf.mxu0
    %v2502 = vadd.f32 %v2482, %v2501
    %2503 = vdwg.mxu0
    %2504 = vmatpush.msra.mxu0 %v1140
    %2505 = vmatpush.msra.mxu0 %v1132
    %2506 = vmatpush.msra.mxu0 %v1124
    %2507 = vmatpush.msra.mxu0 %v1116
    %2508 = vmatpush.msra.mxu0 %v1108
    %2509 = vmatpush.msra.mxu0 %v1100
    %2510 = vmatpush.msra.mxu0 %v1092
    %2511 = vmatpush.msra.mxu0 %v1084
    %2512 = vmatpush.msra.mxu0 %v1076
    %2513 = vmatpush.msra.mxu0 %v1068
    %2514 = vmatpush.msra.mxu0 %v1060
    %2515 = vmatpush.msra.mxu0 %v1052
    %2516 = vmatpush.msra.mxu0 %v1044
    %2517 = vmatpush.msra.mxu0 %v1036
    %2518 = vmatpush.msra.mxu0 %v1028
    %2519 = vmatpush.msra.mxu0 %v1020
    %2520 = vmatmul.f32.gmra.mxu0 %v1245
    %v2521 = vpop.f32.mrf.mxu0
    %v2522 = vadd.f32 %v2502, %v2521
    %2523 = vdwg.mxu0
    %2524 = vmatpush.msra.mxu0 0.0
    %2525 = vmatpush.msra.mxu0 0.0
    %2526 = vmatpush.msra.mxu0 0.0
    %2527 = vmatpush.msra.mxu0 0.0
    %2528 = vmatpush.msra.mxu0 0.0
    %2529 = vmatpush.msra.mxu0 0.0
    %2530 = vmatpush.msra.mxu0 0.0
    %2531 = vmatpush.msra.mxu0 %v1279
    %2532 = vmatpush.msra.mxu0 %v1204
    %2533 = vmatpush.msra.mxu0 %v1196
    %2534 = vmatpush.msra.mxu0 %v1188
    %2535 = vmatpush.msra.mxu0 %v1180
    %2536 = vmatpush.msra.mxu0 %v1172
    %2537 = vmatpush.msra.mxu0 %v1164
    %2538 = vmatpush.msra.mxu0 %v1156
    %2539 = vmatpush.msra.mxu0 %v1148
    %2540 = vmatmul.f32.gmra.mxu0 %v1257
    %v2541 = vpop.f32.mrf.mxu0
    %v2542 = vadd.f32 %v2522, %v2541
    %2543 = vdwg.mxu0
    %2544 = vmatpush.msra.mxu0 %v245
    %2545 = vmatpush.msra.mxu0 %v237
    %2546 = vmatpush.msra.mxu0 %v229
    %2547 = vmatpush.msra.mxu0 %v221
    %2548 = vmatpush.msra.mxu0 %v213
    %2549 = vmatpush.msra.mxu0 %v205
    %2550 = vmatpush.msra.mxu0 %v197
    %2551 = vmatpush.msra.mxu0 %v189
    %2552 = vmatpush.msra.mxu0 %v181
    %2553 = vmatpush.msra.mxu0 %v173
    %2554 = vmatpush.msra.mxu0 %v165
    %2555 = vmatpush.msra.mxu0 %v157
    %2556 = vmatpush.msra.mxu0 %v149
    %2557 = vmatpush.msra.mxu0 %v141
    %2558 = vmatpush.msra.mxu0 %v133
    %2559 = vmatpush.msra.mxu0 %v125
    %2560 = vmatmul.f32.gmra.mxu0 %v1238
    %v2561 = vpop.f32.mrf.mxu0
    %v2562 = vadd.f32 %v1223, %v2561
    %2563 = vdwg.mxu0
    %2564 = vmatpush.msra.mxu0 %v373
    %2565 = vmatpush.msra.mxu0 %v365
    %2566 = vmatpush.msra.mxu0 %v357
    %2567 = vmatpush.msra.mxu0 %v349
    %2568 = vmatpush.msra.mxu0 %v341
    %2569 = vmatpush.msra.mxu0 %v333
    %2570 = vmatpush.msra.mxu0 %v325
    %2571 = vmatpush.msra.mxu0 %v317
    %2572 = vmatpush.msra.mxu0 %v309
    %2573 = vmatpush.msra.mxu0 %v301
    %2574 = vmatpush.msra.mxu0 %v293
    %2575 = vmatpush.msra.mxu0 %v285
    %2576 = vmatpush.msra.mxu0 %v277
    %2577 = vmatpush.msra.mxu0 %v269
    %2578 = vmatpush.msra.mxu0 %v261
    %2579 = vmatpush.msra.mxu0 %v253
    %2580 = vmatmul.f32.gmra.mxu0 %v1239
    %v2581 = vpop.f32.mrf.mxu0
    %v2582 = vadd.f32 %v2562, %v2581
    %2583 = vdwg.mxu0
    %2584 = vmatpush.msra.mxu0 %v501
    %2585 = vmatpush.msra.mxu0 %v493
    %2586 = vmatpush.msra.mxu0 %v485
    %2587 = vmatpush.msra.mxu0 %v477
    %2588 = vmatpush.msra.mxu0 %v469
    %2589 = vmatpush.msra.mxu0 %v461
    %2590 = vmatpush.msra.mxu0 %v453
    %2591 = vmatpush.msra.mxu0 %v445
    %2592 = vmatpush.msra.mxu0 %v437
    %2593 = vmatpush.msra.mxu0 %v429
    %2594 = vmatpush.msra.mxu0 %v421
    %2595 = vmatpush.msra.mxu0 %v413
    %2596 = vmatpush.msra.mxu0 %v405
    %2597 = vmatpush.msra.mxu0 %v397
    %2598 = vmatpush.msra.mxu0 %v389
    %2599 = vmatpush.msra.mxu0 %v381
    %2600 = vmatmul.f32.gmra.mxu0 %v1240
    %v2601 = vpop.f32.mrf.mxu0
    %v2602 = vadd.f32 %v2582, %v2601
    %2603 = vdwg.mxu0
    %2604 = vmatpush.msra.mxu0 %v629
    %2605 = vmatpush.msra.mxu0 %v621
    %2606 = vmatpush.msra.mxu0 %v613
    %2607 = vmatpush.msra.mxu0 %v605
    %2608 = vmatpush.msra.mxu0 %v597
    %2609 = vmatpush.msra.mxu0 %v589
    %2610 = vmatpush.msra.mxu0 %v581
    %2611 = vmatpush.msra.mxu0 %v573
    %2612 = vmatpush.msra.mxu0 %v565
    %2613 = vmatpush.msra.mxu0 %v557
    %2614 = vmatpush.msra.mxu0 %v549
    %2615 = vmatpush.msra.mxu0 %v541
    %2616 = vmatpush.msra.mxu0 %v533
    %2617 = vmatpush.msra.mxu0 %v525
    %2618 = vmatpush.msra.mxu0 %v517
    %2619 = vmatpush.msra.mxu0 %v509
    %2620 = vmatmul.f32.gmra.mxu0 %v1241
    %v2621 = vpop.f32.mrf.mxu0
    %v2622 = vadd.f32 %v2602, %v2621
    %2623 = vdwg.mxu0
    %2624 = vmatpush.msra.mxu0 %v757
    %2625 = vmatpush.msra.mxu0 %v749
    %2626 = vmatpush.msra.mxu0 %v741
    %2627 = vmatpush.msra.mxu0 %v733
    %2628 = vmatpush.msra.mxu0 %v725
    %2629 = vmatpush.msra.mxu0 %v717
    %2630 = vmatpush.msra.mxu0 %v709
    %2631 = vmatpush.msra.mxu0 %v701
    %2632 = vmatpush.msra.mxu0 %v693
    %2633 = vmatpush.msra.mxu0 %v685
    %2634 = vmatpush.msra.mxu0 %v677
    %2635 = vmatpush.msra.mxu0 %v669
    %2636 = vmatpush.msra.mxu0 %v661
    %2637 = vmatpush.msra.mxu0 %v653
    %2638 = vmatpush.msra.mxu0 %v645
    %2639 = vmatpush.msra.mxu0 %v637
    %2640 = vmatmul.f32.gmra.mxu0 %v1242
    %v2641 = vpop.f32.mrf.mxu0
    %v2642 = vadd.f32 %v2622, %v2641
    %2643 = vdwg.mxu0
    %2644 = vmatpush.msra.mxu0 %v885
    %2645 = vmatpush.msra.mxu0 %v877
    %2646 = vmatpush.msra.mxu0 %v869
    %2647 = vmatpush.msra.mxu0 %v861
    %2648 = vmatpush.msra.mxu0 %v853
    %2649 = vmatpush.msra.mxu0 %v845
    %2650 = vmatpush.msra.mxu0 %v837
    %2651 = vmatpush.msra.mxu0 %v829
    %2652 = vmatpush.msra.mxu0 %v821
    %2653 = vmatpush.msra.mxu0 %v813
    %2654 = vmatpush.msra.mxu0 %v805
    %2655 = vmatpush.msra.mxu0 %v797
    %2656 = vmatpush.msra.mxu0 %v789
    %2657 = vmatpush.msra.mxu0 %v781
    %2658 = vmatpush.msra.mxu0 %v773
    %2659 = vmatpush.msra.mxu0 %v765
    %2660 = vmatmul.f32.gmra.mxu0 %v1243
    %v2661 = vpop.f32.mrf.mxu0
    %v2662 = vadd.f32 %v2642, %v2661
    %2663 = vdwg.mxu0
    %2664 = vmatpush.msra.mxu0 %v1013
    %2665 = vmatpush.msra.mxu0 %v1005
    %2666 = vmatpush.msra.mxu0 %v997
    %2667 = vmatpush.msra.mxu0 %v989
    %2668 = vmatpush.msra.mxu0 %v981
    %2669 = vmatpush.msra.mxu0 %v973
    %2670 = vmatpush.msra.mxu0 %v965
    %2671 = vmatpush.msra.mxu0 %v957
    %2672 = vmatpush.msra.mxu0 %v949
    %2673 = vmatpush.msra.mxu0 %v941
    %2674 = vmatpush.msra.mxu0 %v933
    %2675 = vmatpush.msra.mxu0 %v925
    %2676 = vmatpush.msra.mxu0 %v917
    %2677 = vmatpush.msra.mxu0 %v909
    %2678 = vmatpush.msra.mxu0 %v901
    %2679 = vmatpush.msra.mxu0 %v893
    %2680 = vmatmul.f32.gmra.mxu0 %v1244
    %v2681 = vpop.f32.mrf.mxu0
    %v2682 = vadd.f32 %v2662, %v2681
    %2683 = vdwg.mxu0
    %2684 = vmatpush.msra.mxu0 %v1141
    %2685 = vmatpush.msra.mxu0 %v1133
    %2686 = vmatpush.msra.mxu0 %v1125
    %2687 = vmatpush.msra.mxu0 %v1117
    %2688 = vmatpush.msra.mxu0 %v1109
    %2689 = vmatpush.msra.mxu0 %v1101
    %2690 = vmatpush.msra.mxu0 %v1093
    %2691 = vmatpush.msra.mxu0 %v1085
    %2692 = vmatpush.msra.mxu0 %v1077
    %2693 = vmatpush.msra.mxu0 %v1069
    %2694 = vmatpush.msra.mxu0 %v1061
    %2695 = vmatpush.msra.mxu0 %v1053
    %2696 = vmatpush.msra.mxu0 %v1045
    %2697 = vmatpush.msra.mxu0 %v1037
    %2698 = vmatpush.msra.mxu0 %v1029
    %2699 = vmatpush.msra.mxu0 %v1021
    %2700 = vmatmul.f32.gmra.mxu0 %v1245
    %v2701 = vpop.f32.mrf.mxu0
    %v2702 = vadd.f32 %v2682, %v2701
    %2703 = vdwg.mxu0
    %2704 = vmatpush.msra.mxu0 0.0
    %2705 = vmatpush.msra.mxu0 0.0
    %2706 = vmatpush.msra.mxu0 0.0
    %2707 = vmatpush.msra.mxu0 0.0
    %2708 = vmatpush.msra.mxu0 0.0
    %2709 = vmatpush.msra.mxu0 0.0
    %2710 = vmatpush.msra.mxu0 0.0
    %2711 = vmatpush.msra.mxu0 %v1282
    %2712 = vmatpush.msra.mxu0 %v1205
    %2713 = vmatpush.msra.mxu0 %v1197
    %2714 = vmatpush.msra.mxu0 %v1189
    %2715 = vmatpush.msra.mxu0 %v1181
    %2716 = vmatpush.msra.mxu0 %v1173
    %2717 = vmatpush.msra.mxu0 %v1165
    %2718 = vmatpush.msra.mxu0 %v1157
    %2719 = vmatpush.msra.mxu0 %v1149
    %2720 = vmatmul.f32.gmra.mxu0 %v1257
    %v2721 = vpop.f32.mrf.mxu0
    %v2722 = vadd.f32 %v2702, %v2721
    %2723 = vdwg.mxu0
    %vm2724 = vcmp.ge.f32.partialorder %v1462, 0.0
    %vm2725 = vcmp.ge.f32.partialorder %v1642, 0.0
    %vm2726 = vcmp.ge.f32.partialorder %v1822, 0.0
    %vm2727 = vcmp.ge.f32.partialorder %v2002, 0.0
    %vm2728 = vcmp.ge.f32.partialorder %v2182, 0.0
    %vm2729 = vcmp.ge.f32.partialorder %v2362, 0.0
    %vm2730 = vcmp.ge.f32.partialorder %v2542, 0.0
    %vm2731 = vcmp.ge.f32.partialorder %v2722, 0.0
    %v2732 = vmul.f32 %v1462, 0.2
    %v2733 = vmul.f32 %v1642, 0.2
    %v2734 = vmul.f32 %v1822, 0.2
    %v2735 = vmul.f32 %v2002, 0.2
    %v2736 = vmul.f32 %v2182, 0.2
    %v2737 = vmul.f32 %v2362, 0.2
    %v2738 = vmul.f32 %v2542, 0.2
    %v2739 = vmul.f32 %v2722, 0.2
    %v2740 = vsel %vm2724, %v1462, %v2732
    %v2741 = vsel %vm2725, %v1642, %v2733
    %v2742 = vsel %vm2726, %v1822, %v2734
    %v2743 = vsel %vm2727, %v2002, %v2735
    %v2744 = vsel %vm2728, %v2182, %v2736
    %v2745 = vsel %vm2729, %v2362, %v2737
    %v2746 = vsel %vm2730, %v2542, %v2738
    %v2747 = vsel %vm2731, %v2722, %v2739
    %v2748 = vld [vmem:[#allocation7] sm:$0xff]
    %v2749 = vld [vmem:[#allocation7 + $0x8] sm:$0xff]
    %v2750 = vld [vmem:[#allocation7 + $0x10] sm:$0xff]
    %v2751 = vld [vmem:[#allocation7 + $0x18] sm:$0xff]
    %v2752 = vld [vmem:[#allocation7 + $0x20] sm:$0xff]
    %v2753 = vld [vmem:[#allocation7 + $0x28] sm:$0xff]
    %v2754 = vld [vmem:[#allocation7 + $0x30] sm:$0xff]
    %v2755 = vld [vmem:[#allocation7 + $0x38] sm:$0xff]
    %v2756 = vld [vmem:[#allocation7 + $0x40] sm:$0xff]
    %v2757 = vld [vmem:[#allocation7 + $0x48] sm:$0xff]
    %v2758 = vld [vmem:[#allocation7 + $0x50] sm:$0xff]
    %v2759 = vld [vmem:[#allocation7 + $0x58] sm:$0xff]
    %v2760 = vld [vmem:[#allocation7 + $0x60] sm:$0xff]
    %v2761 = vld [vmem:[#allocation7 + $0x68] sm:$0xff]
    %v2762 = vld [vmem:[#allocation7 + $0x70] sm:$0xff]
    %v2763 = vld [vmem:[#allocation7 + $0x78] sm:$0xff]
    %v2764 = vld [vmem:[#allocation7 + $0x80] sm:$0xff]
    %v2765 = vld [vmem:[#allocation7 + $0x88] sm:$0xff]
    %v2766 = vld [vmem:[#allocation7 + $0x90] sm:$0xff]
    %v2767 = vld [vmem:[#allocation7 + $0x98] sm:$0xff]
    %v2768 = vld [vmem:[#allocation7 + $0xa0] sm:$0xff]
    %v2769 = vld [vmem:[#allocation7 + $0xa8] sm:$0xff]
    %v2770 = vld [vmem:[#allocation7 + $0xb0] sm:$0xff]
    %v2771 = vld [vmem:[#allocation7 + $0xb8] sm:$0xff]
    %v2772 = vld [vmem:[#allocation7 + $0xc0] sm:$0xff]
    %v2773 = vld [vmem:[#allocation7 + $0xc8] sm:$0xff]
    %v2774 = vld [vmem:[#allocation7 + $0xd0] sm:$0xff]
    %v2775 = vld [vmem:[#allocation7 + $0xd8] sm:$0xff]
    %v2776 = vld [vmem:[#allocation7 + $0xe0] sm:$0xff]
    %v2777 = vld [vmem:[#allocation7 + $0xe8] sm:$0xff]
    %v2778 = vld [vmem:[#allocation7 + $0xf0] sm:$0xff]
    %v2779 = vld [vmem:[#allocation7 + $0xf8] sm:$0xff]
    %v2780 = vld [vmem:[#allocation7 + $0x100] sm:$0xff]
    %v2781 = vld [vmem:[#allocation7 + $0x108] sm:$0xff]
    %v2782 = vld [vmem:[#allocation7 + $0x110] sm:$0xff]
    %v2783 = vld [vmem:[#allocation7 + $0x118] sm:$0xff]
    %v2784 = vld [vmem:[#allocation7 + $0x120] sm:$0xff]
    %v2785 = vld [vmem:[#allocation7 + $0x128] sm:$0xff]
    %v2786 = vld [vmem:[#allocation7 + $0x130] sm:$0xff]
    %v2787 = vld [vmem:[#allocation7 + $0x138] sm:$0xff]
    %v2788 = vld [vmem:[#allocation7 + $0x140] sm:$0xff]
    %v2789 = vld [vmem:[#allocation7 + $0x148] sm:$0xff]
    %v2790 = vld [vmem:[#allocation7 + $0x150] sm:$0xff]
    %v2791 = vld [vmem:[#allocation7 + $0x158] sm:$0xff]
    %v2792 = vld [vmem:[#allocation7 + $0x160] sm:$0xff]
    %v2793 = vld [vmem:[#allocation7 + $0x168] sm:$0xff]
    %v2794 = vld [vmem:[#allocation7 + $0x170] sm:$0xff]
    %v2795 = vld [vmem:[#allocation7 + $0x178] sm:$0xff]
    %v2796 = vld [vmem:[#allocation7 + $0x180] sm:$0xff]
    %v2797 = vld [vmem:[#allocation7 + $0x188] sm:$0xff]
    %v2798 = vld [vmem:[#allocation7 + $0x190] sm:$0xff]
    %v2799 = vld [vmem:[#allocation7 + $0x198] sm:$0xff]
    %v2800 = vld [vmem:[#allocation7 + $0x1a0] sm:$0xff]
    %v2801 = vld [vmem:[#allocation7 + $0x1a8] sm:$0xff]
    %v2802 = vld [vmem:[#allocation7 + $0x1b0] sm:$0xff]
    %v2803 = vld [vmem:[#allocation7 + $0x1b8] sm:$0xff]
    %v2804 = vld [vmem:[#allocation7 + $0x1c0] sm:$0xff]
    %v2805 = vld [vmem:[#allocation7 + $0x1c8] sm:$0xff]
    %v2806 = vld [vmem:[#allocation7 + $0x1d0] sm:$0xff]
    %v2807 = vld [vmem:[#allocation7 + $0x1d8] sm:$0xff]
    %v2808 = vld [vmem:[#allocation7 + $0x1e0] sm:$0xff]
    %v2809 = vld [vmem:[#allocation7 + $0x1e8] sm:$0xff]
    %v2810 = vld [vmem:[#allocation7 + $0x1f0] sm:$0xff]
    %v2811 = vld [vmem:[#allocation7 + $0x1f8] sm:$0xff]
    %v2812 = vld [vmem:[#allocation7 + $0x200] sm:$0xff]
    %v2813 = vld [vmem:[#allocation7 + $0x208] sm:$0xff]
    %v2814 = vld [vmem:[#allocation7 + $0x210] sm:$0xff]
    %v2815 = vld [vmem:[#allocation7 + $0x218] sm:$0xff]
    %v2816 = vld [vmem:[#allocation7 + $0x220] sm:$0xff]
    %v2817 = vld [vmem:[#allocation7 + $0x228] sm:$0xff]
    %v2818 = vld [vmem:[#allocation7 + $0x230] sm:$0xff]
    %v2819 = vld [vmem:[#allocation7 + $0x238] sm:$0xff]
    %v2820 = vld [vmem:[#allocation7 + $0x240] sm:$0xff]
    %v2821 = vld [vmem:[#allocation7 + $0x248] sm:$0xff]
    %v2822 = vld [vmem:[#allocation7 + $0x250] sm:$0xff]
    %v2823 = vld [vmem:[#allocation7 + $0x258] sm:$0xff]
    %v2824 = vld [vmem:[#allocation7 + $0x260] sm:$0xff]
    %v2825 = vld [vmem:[#allocation7 + $0x268] sm:$0xff]
    %v2826 = vld [vmem:[#allocation7 + $0x270] sm:$0xff]
    %v2827 = vld [vmem:[#allocation7 + $0x278] sm:$0xff]
    %v2828 = vld [vmem:[#allocation7 + $0x280] sm:$0xff]
    %v2829 = vld [vmem:[#allocation7 + $0x288] sm:$0xff]
    %v2830 = vld [vmem:[#allocation7 + $0x290] sm:$0xff]
    %v2831 = vld [vmem:[#allocation7 + $0x298] sm:$0xff]
    %v2832 = vld [vmem:[#allocation7 + $0x2a0] sm:$0xff]
    %v2833 = vld [vmem:[#allocation7 + $0x2a8] sm:$0xff]
    %v2834 = vld [vmem:[#allocation7 + $0x2b0] sm:$0xff]
    %v2835 = vld [vmem:[#allocation7 + $0x2b8] sm:$0xff]
    %v2836 = vld [vmem:[#allocation7 + $0x2c0] sm:$0xff]
    %v2837 = vld [vmem:[#allocation7 + $0x2c8] sm:$0xff]
    %v2838 = vld [vmem:[#allocation7 + $0x2d0] sm:$0xff]
    %v2839 = vld [vmem:[#allocation7 + $0x2d8] sm:$0xff]
    %v2840 = vld [vmem:[#allocation7 + $0x2e0] sm:$0xff]
    %v2841 = vld [vmem:[#allocation7 + $0x2e8] sm:$0xff]
    %v2842 = vld [vmem:[#allocation7 + $0x2f0] sm:$0xff]
    %v2843 = vld [vmem:[#allocation7 + $0x2f8] sm:$0xff]
    %v2844 = vld [vmem:[#allocation7 + $0x300] sm:$0xff]
    %v2845 = vld [vmem:[#allocation7 + $0x308] sm:$0xff]
    %v2846 = vld [vmem:[#allocation7 + $0x310] sm:$0xff]
    %v2847 = vld [vmem:[#allocation7 + $0x318] sm:$0xff]
    %v2848 = vld [vmem:[#allocation7 + $0x320] sm:$0xff]
    %v2849 = vld [vmem:[#allocation7 + $0x328] sm:$0xff]
    %v2850 = vld [vmem:[#allocation7 + $0x330] sm:$0xff]
    %v2851 = vld [vmem:[#allocation7 + $0x338] sm:$0xff]
    %v2852 = vld [vmem:[#allocation7 + $0x340] sm:$0xff]
    %v2853 = vld [vmem:[#allocation7 + $0x348] sm:$0xff]
    %v2854 = vld [vmem:[#allocation7 + $0x350] sm:$0xff]
    %v2855 = vld [vmem:[#allocation7 + $0x358] sm:$0xff]
    %v2856 = vld [vmem:[#allocation7 + $0x360] sm:$0xff]
    %v2857 = vld [vmem:[#allocation7 + $0x368] sm:$0xff]
    %v2858 = vld [vmem:[#allocation7 + $0x370] sm:$0xff]
    %v2859 = vld [vmem:[#allocation7 + $0x378] sm:$0xff]
    %v2860 = vld [vmem:[#allocation7 + $0x380] sm:$0xff]
    %v2861 = vld [vmem:[#allocation7 + $0x388] sm:$0xff]
    %v2862 = vld [vmem:[#allocation7 + $0x390] sm:$0xff]
    %v2863 = vld [vmem:[#allocation7 + $0x398] sm:$0xff]
    %v2864 = vld [vmem:[#allocation7 + $0x3a0] sm:$0xff]
    %v2865 = vld [vmem:[#allocation7 + $0x3a8] sm:$0xff]
    %v2866 = vld [vmem:[#allocation7 + $0x3b0] sm:$0xff]
    %v2867 = vld [vmem:[#allocation7 + $0x3b8] sm:$0xff]
    %v2868 = vld [vmem:[#allocation7 + $0x3c0] sm:$0xff]
    %v2869 = vld [vmem:[#allocation7 + $0x3c8] sm:$0xff]
    %v2870 = vld [vmem:[#allocation7 + $0x3d0] sm:$0xff]
    %v2871 = vld [vmem:[#allocation7 + $0x3d8] sm:$0xff]
    %v2872 = vld [vmem:[#allocation7 + $0x3e0] sm:$0xff]
    %v2873 = vld [vmem:[#allocation7 + $0x3e8] sm:$0xff]
    %v2874 = vld [vmem:[#allocation7 + $0x3f0] sm:$0xff]
    %v2875 = vld [vmem:[#allocation7 + $0x3f8] sm:$0xff]
    %v2876 = vld [vmem:[#allocation7 + $0x400] sm:$0xff]
    %v2877 = vld [vmem:[#allocation7 + $0x408] sm:$0xff]
    %v2878 = vld [vmem:[#allocation7 + $0x410] sm:$0xff]
    %v2879 = vld [vmem:[#allocation7 + $0x418] sm:$0xff]
    %v2880 = vld [vmem:[#allocation7 + $0x420] sm:$0xff]
    %v2881 = vld [vmem:[#allocation7 + $0x428] sm:$0xff]
    %v2882 = vld [vmem:[#allocation7 + $0x430] sm:$0xff]
    %v2883 = vld [vmem:[#allocation7 + $0x438] sm:$0xff]
    %v2884 = vld [vmem:[#allocation7 + $0x440] sm:$0xff]
    %v2885 = vld [vmem:[#allocation7 + $0x448] sm:$0xff]
    %v2886 = vld [vmem:[#allocation7 + $0x450] sm:$0xff]
    %v2887 = vld [vmem:[#allocation7 + $0x458] sm:$0xff]
    %v2888 = vld [vmem:[#allocation7 + $0x460] sm:$0xff]
    %v2889 = vld [vmem:[#allocation7 + $0x468] sm:$0xff]
    %v2890 = vld [vmem:[#allocation7 + $0x470] sm:$0xff]
    %v2891 = vld [vmem:[#allocation7 + $0x478] sm:$0xff]
    %v2892 = vld [vmem:[#allocation7 + $0x480] sm:$0xff]
    %v2893 = vld [vmem:[#allocation7 + $0x488] sm:$0xff]
    %v2894 = vld [vmem:[#allocation7 + $0x490] sm:$0xff]
    %v2895 = vld [vmem:[#allocation7 + $0x498] sm:$0xff]
    %v2896 = vld [vmem:[#allocation7 + $0x4a0] sm:$0xff]
    %v2897 = vld [vmem:[#allocation7 + $0x4a8] sm:$0xff]
    %v2898 = vld [vmem:[#allocation7 + $0x4b0] sm:$0xff]
    %v2899 = vld [vmem:[#allocation7 + $0x4b8] sm:$0xff]
    %v2900 = vld [vmem:[#allocation7 + $0x4c0] sm:$0xff]
    %v2901 = vld [vmem:[#allocation7 + $0x4c8] sm:$0xff]
    %v2902 = vld [vmem:[#allocation7 + $0x4d0] sm:$0xff]
    %v2903 = vld [vmem:[#allocation7 + $0x4d8] sm:$0xff]
    %v2904 = vld [vmem:[#allocation7 + $0x4e0] sm:$0xff]
    %v2905 = vld [vmem:[#allocation7 + $0x4e8] sm:$0xff]
    %v2906 = vld [vmem:[#allocation7 + $0x4f0] sm:$0xff]
    %v2907 = vld [vmem:[#allocation7 + $0x4f8] sm:$0xff]
    %v2908 = vld [vmem:[#allocation7 + $0x500] sm:$0xff]
    %v2909 = vld [vmem:[#allocation7 + $0x508] sm:$0xff]
    %v2910 = vld [vmem:[#allocation7 + $0x510] sm:$0xff]
    %v2911 = vld [vmem:[#allocation7 + $0x518] sm:$0xff]
    %v2912 = vld [vmem:[#allocation7 + $0x520] sm:$0xff]
    %v2913 = vld [vmem:[#allocation7 + $0x528] sm:$0xff]
    %v2914 = vld [vmem:[#allocation7 + $0x530] sm:$0xff]
    %v2915 = vld [vmem:[#allocation7 + $0x538] sm:$0xff]
    %v2916 = vld [vmem:[#allocation7 + $0x540] sm:$0xff]
    %v2917 = vld [vmem:[#allocation7 + $0x548] sm:$0xff]
    %v2918 = vld [vmem:[#allocation7 + $0x550] sm:$0xff]
    %v2919 = vld [vmem:[#allocation7 + $0x558] sm:$0xff]
    %v2920 = vld [vmem:[#allocation7 + $0x560] sm:$0xff]
    %v2921 = vld [vmem:[#allocation7 + $0x568] sm:$0xff]
    %v2922 = vld [vmem:[#allocation7 + $0x570] sm:$0xff]
    %v2923 = vld [vmem:[#allocation7 + $0x578] sm:$0xff]
    %v2924 = vld [vmem:[#allocation7 + $0x580] sm:$0xff]
    %v2925 = vld [vmem:[#allocation7 + $0x588] sm:$0xff]
    %v2926 = vld [vmem:[#allocation7 + $0x590] sm:$0xff]
    %v2927 = vld [vmem:[#allocation7 + $0x598] sm:$0xff]
    %v2928 = vld [vmem:[#allocation7 + $0x5a0] sm:$0xff]
    %v2929 = vld [vmem:[#allocation7 + $0x5a8] sm:$0xff]
    %v2930 = vld [vmem:[#allocation7 + $0x5b0] sm:$0xff]
    %v2931 = vld [vmem:[#allocation7 + $0x5b8] sm:$0xff]
    %v2932 = vld [vmem:[#allocation7 + $0x5c0] sm:$0xff]
    %v2933 = vld [vmem:[#allocation7 + $0x5c8] sm:$0xff]
    %v2934 = vld [vmem:[#allocation7 + $0x5d0] sm:$0xff]
    %v2935 = vld [vmem:[#allocation7 + $0x5d8] sm:$0xff]
    %v2936 = vld [vmem:[#allocation7 + $0x5e0] sm:$0xff]
    %v2937 = vld [vmem:[#allocation7 + $0x5e8] sm:$0xff]
    %v2938 = vld [vmem:[#allocation7 + $0x5f0] sm:$0xff]
    %v2939 = vld [vmem:[#allocation7 + $0x5f8] sm:$0xff]
    %v2940 = vld [vmem:[#allocation7 + $0x600] sm:$0xff]
    %v2941 = vld [vmem:[#allocation7 + $0x608] sm:$0xff]
    %v2942 = vld [vmem:[#allocation7 + $0x610] sm:$0xff]
    %v2943 = vld [vmem:[#allocation7 + $0x618] sm:$0xff]
    %v2944 = vld [vmem:[#allocation7 + $0x620] sm:$0xff]
    %v2945 = vld [vmem:[#allocation7 + $0x628] sm:$0xff]
    %v2946 = vld [vmem:[#allocation7 + $0x630] sm:$0xff]
    %v2947 = vld [vmem:[#allocation7 + $0x638] sm:$0xff]
    %v2948 = vld [vmem:[#allocation7 + $0x640] sm:$0xff]
    %v2949 = vld [vmem:[#allocation7 + $0x648] sm:$0xff]
    %v2950 = vld [vmem:[#allocation7 + $0x650] sm:$0xff]
    %v2951 = vld [vmem:[#allocation7 + $0x658] sm:$0xff]
    %v2952 = vld [vmem:[#allocation7 + $0x660] sm:$0xff]
    %v2953 = vld [vmem:[#allocation7 + $0x668] sm:$0xff]
    %v2954 = vld [vmem:[#allocation7 + $0x670] sm:$0xff]
    %v2955 = vld [vmem:[#allocation7 + $0x678] sm:$0xff]
    %v2956 = vld [vmem:[#allocation7 + $0x680] sm:$0xff]
    %v2957 = vld [vmem:[#allocation7 + $0x688] sm:$0xff]
    %v2958 = vld [vmem:[#allocation7 + $0x690] sm:$0xff]
    %v2959 = vld [vmem:[#allocation7 + $0x698] sm:$0xff]
    %v2960 = vld [vmem:[#allocation7 + $0x6a0] sm:$0xff]
    %v2961 = vld [vmem:[#allocation7 + $0x6a8] sm:$0xff]
    %v2962 = vld [vmem:[#allocation7 + $0x6b0] sm:$0xff]
    %v2963 = vld [vmem:[#allocation7 + $0x6b8] sm:$0xff]
    %v2964 = vld [vmem:[#allocation7 + $0x6c0] sm:$0xff]
    %v2965 = vld [vmem:[#allocation7 + $0x6c8] sm:$0xff]
    %v2966 = vld [vmem:[#allocation7 + $0x6d0] sm:$0xff]
    %v2967 = vld [vmem:[#allocation7 + $0x6d8] sm:$0xff]
    %v2968 = vld [vmem:[#allocation7 + $0x6e0] sm:$0xff]
    %v2969 = vld [vmem:[#allocation7 + $0x6e8] sm:$0xff]
    %v2970 = vld [vmem:[#allocation7 + $0x6f0] sm:$0xff]
    %v2971 = vld [vmem:[#allocation7 + $0x6f8] sm:$0xff]
    %v2972 = vld [vmem:[#allocation7 + $0x700] sm:$0xff]
    %v2973 = vld [vmem:[#allocation7 + $0x708] sm:$0xff]
    %v2974 = vld [vmem:[#allocation7 + $0x710] sm:$0xff]
    %v2975 = vld [vmem:[#allocation7 + $0x718] sm:$0xff]
    %v2976 = vld [vmem:[#allocation7 + $0x720] sm:$0xff]
    %v2977 = vld [vmem:[#allocation7 + $0x728] sm:$0xff]
    %v2978 = vld [vmem:[#allocation7 + $0x730] sm:$0xff]
    %v2979 = vld [vmem:[#allocation7 + $0x738] sm:$0xff]
    %v2980 = vld [vmem:[#allocation7 + $0x740] sm:$0xff]
    %v2981 = vld [vmem:[#allocation7 + $0x748] sm:$0xff]
    %v2982 = vld [vmem:[#allocation7 + $0x750] sm:$0xff]
    %v2983 = vld [vmem:[#allocation7 + $0x758] sm:$0xff]
    %v2984 = vld [vmem:[#allocation7 + $0x760] sm:$0xff]
    %v2985 = vld [vmem:[#allocation7 + $0x768] sm:$0xff]
    %v2986 = vld [vmem:[#allocation7 + $0x770] sm:$0xff]
    %v2987 = vld [vmem:[#allocation7 + $0x778] sm:$0xff]
    %v2988 = vld [vmem:[#allocation7 + $0x780] sm:$0xff]
    %v2989 = vld [vmem:[#allocation7 + $0x788] sm:$0xff]
    %v2990 = vld [vmem:[#allocation7 + $0x790] sm:$0xff]
    %v2991 = vld [vmem:[#allocation7 + $0x798] sm:$0xff]
    %v2992 = vld [vmem:[#allocation7 + $0x7a0] sm:$0xff]
    %v2993 = vld [vmem:[#allocation7 + $0x7a8] sm:$0xff]
    %v2994 = vld [vmem:[#allocation7 + $0x7b0] sm:$0xff]
    %v2995 = vld [vmem:[#allocation7 + $0x7b8] sm:$0xff]
    %v2996 = vld [vmem:[#allocation7 + $0x7c0] sm:$0xff]
    %v2997 = vld [vmem:[#allocation7 + $0x7c8] sm:$0xff]
    %v2998 = vld [vmem:[#allocation7 + $0x7d0] sm:$0xff]
    %v2999 = vld [vmem:[#allocation7 + $0x7d8] sm:$0xff]
    %v3000 = vld [vmem:[#allocation7 + $0x7e0] sm:$0xff]
    %v3001 = vld [vmem:[#allocation7 + $0x7e8] sm:$0xff]
    %v3002 = vld [vmem:[#allocation7 + $0x7f0] sm:$0xff]
    %v3003 = vld [vmem:[#allocation7 + $0x7f8] sm:$0xff]
    %v3004 = vld [vmem:[#allocation9] sm:$0x3]
    %v3006 = vperm.slane %v3004, 0
    %v3007 = vperm.slane %v3004, 1
    %3010 = vmatpush.msra.mxu0 %v2778
    %3011 = vmatpush.msra.mxu0 %v2776
    %3012 = vmatpush.msra.mxu0 %v2774
    %3013 = vmatpush.msra.mxu0 %v2772
    %3014 = vmatpush.msra.mxu0 %v2770
    %3015 = vmatpush.msra.mxu0 %v2768
    %3016 = vmatpush.msra.mxu0 %v2766
    %3017 = vmatpush.msra.mxu0 %v2764
    %3018 = vmatpush.msra.mxu0 %v2762
    %3019 = vmatpush.msra.mxu0 %v2760
    %3020 = vmatpush.msra.mxu0 %v2758
    %3021 = vmatpush.msra.mxu0 %v2756
    %3022 = vmatpush.msra.mxu0 %v2754
    %3023 = vmatpush.msra.mxu0 %v2752
    %3024 = vmatpush.msra.mxu0 %v2750
    %3025 = vmatpush.msra.mxu0 %v2748
    %3026 = vmatmul.f32.gmra.mxu0 %v2740
    %v3027 = vpop.f32.mrf.mxu0
    %v3028 = vadd.f32 %v3006, %v3027
    %3029 = vdwg.mxu0
    %3030 = vmatpush.msra.mxu0 %v2810
    %3031 = vmatpush.msra.mxu0 %v2808
    %3032 = vmatpush.msra.mxu0 %v2806
    %3033 = vmatpush.msra.mxu0 %v2804
    %3034 = vmatpush.msra.mxu0 %v2802
    %3035 = vmatpush.msra.mxu0 %v2800
    %3036 = vmatpush.msra.mxu0 %v2798
    %3037 = vmatpush.msra.mxu0 %v2796
    %3038 = vmatpush.msra.mxu0 %v2794
    %3039 = vmatpush.msra.mxu0 %v2792
    %3040 = vmatpush.msra.mxu0 %v2790
    %3041 = vmatpush.msra.mxu0 %v2788
    %3042 = vmatpush.msra.mxu0 %v2786
    %3043 = vmatpush.msra.mxu0 %v2784
    %3044 = vmatpush.msra.mxu0 %v2782
    %3045 = vmatpush.msra.mxu0 %v2780
    %3046 = vmatmul.f32.gmra.mxu0 %v2741
    %v3047 = vpop.f32.mrf.mxu0
    %v3048 = vadd.f32 %v3028, %v3047
    %3049 = vdwg.mxu0
    %3050 = vmatpush.msra.mxu0 %v2842
    %3051 = vmatpush.msra.mxu0 %v2840
    %3052 = vmatpush.msra.mxu0 %v2838
    %3053 = vmatpush.msra.mxu0 %v2836
    %3054 = vmatpush.msra.mxu0 %v2834
    %3055 = vmatpush.msra.mxu0 %v2832
    %3056 = vmatpush.msra.mxu0 %v2830
    %3057 = vmatpush.msra.mxu0 %v2828
    %3058 = vmatpush.msra.mxu0 %v2826
    %3059 = vmatpush.msra.mxu0 %v2824
    %3060 = vmatpush.msra.mxu0 %v2822
    %3061 = vmatpush.msra.mxu0 %v2820
    %3062 = vmatpush.msra.mxu0 %v2818
    %3063 = vmatpush.msra.mxu0 %v2816
    %3064 = vmatpush.msra.mxu0 %v2814
    %3065 = vmatpush.msra.mxu0 %v2812
    %3066 = vmatmul.f32.gmra.mxu0 %v2742
    %v3067 = vpop.f32.mrf.mxu0
    %v3068 = vadd.f32 %v3048, %v3067
    %3069 = vdwg.mxu0
    %3070 = vmatpush.msra.mxu0 %v2874
    %3071 = vmatpush.msra.mxu0 %v2872
    %3072 = vmatpush.msra.mxu0 %v2870
    %3073 = vmatpush.msra.mxu0 %v2868
    %3074 = vmatpush.msra.mxu0 %v2866
    %3075 = vmatpush.msra.mxu0 %v2864
    %3076 = vmatpush.msra.mxu0 %v2862
    %3077 = vmatpush.msra.mxu0 %v2860
    %3078 = vmatpush.msra.mxu0 %v2858
    %3079 = vmatpush.msra.mxu0 %v2856
    %3080 = vmatpush.msra.mxu0 %v2854
    %3081 = vmatpush.msra.mxu0 %v2852
    %3082 = vmatpush.msra.mxu0 %v2850
    %3083 = vmatpush.msra.mxu0 %v2848
    %3084 = vmatpush.msra.mxu0 %v2846
    %3085 = vmatpush.msra.mxu0 %v2844
    %3086 = vmatmul.f32.gmra.mxu0 %v2743
    %v3087 = vpop.f32.mrf.mxu0
    %v3088 = vadd.f32 %v3068, %v3087
    %3089 = vdwg.mxu0
    %3090 = vmatpush.msra.mxu0 %v2906
    %3091 = vmatpush.msra.mxu0 %v2904
    %3092 = vmatpush.msra.mxu0 %v2902
    %3093 = vmatpush.msra.mxu0 %v2900
    %3094 = vmatpush.msra.mxu0 %v2898
    %3095 = vmatpush.msra.mxu0 %v2896
    %3096 = vmatpush.msra.mxu0 %v2894
    %3097 = vmatpush.msra.mxu0 %v2892
    %3098 = vmatpush.msra.mxu0 %v2890
    %3099 = vmatpush.msra.mxu0 %v2888
    %3100 = vmatpush.msra.mxu0 %v2886
    %3101 = vmatpush.msra.mxu0 %v2884
    %3102 = vmatpush.msra.mxu0 %v2882
    %3103 = vmatpush.msra.mxu0 %v2880
    %3104 = vmatpush.msra.mxu0 %v2878
    %3105 = vmatpush.msra.mxu0 %v2876
    %3106 = vmatmul.f32.gmra.mxu0 %v2744
    %v3107 = vpop.f32.mrf.mxu0
    %v3108 = vadd.f32 %v3088, %v3107
    %3109 = vdwg.mxu0
    %3110 = vmatpush.msra.mxu0 %v2938
    %3111 = vmatpush.msra.mxu0 %v2936
    %3112 = vmatpush.msra.mxu0 %v2934
    %3113 = vmatpush.msra.mxu0 %v2932
    %3114 = vmatpush.msra.mxu0 %v2930
    %3115 = vmatpush.msra.mxu0 %v2928
    %3116 = vmatpush.msra.mxu0 %v2926
    %3117 = vmatpush.msra.mxu0 %v2924
    %3118 = vmatpush.msra.mxu0 %v2922
    %3119 = vmatpush.msra.mxu0 %v2920
    %3120 = vmatpush.msra.mxu0 %v2918
    %3121 = vmatpush.msra.mxu0 %v2916
    %3122 = vmatpush.msra.mxu0 %v2914
    %3123 = vmatpush.msra.mxu0 %v2912
    %3124 = vmatpush.msra.mxu0 %v2910
    %3125 = vmatpush.msra.mxu0 %v2908
    %3126 = vmatmul.f32.gmra.mxu0 %v2745
    %v3127 = vpop.f32.mrf.mxu0
    %v3128 = vadd.f32 %v3108, %v3127
    %3129 = vdwg.mxu0
    %3130 = vmatpush.msra.mxu0 %v2970
    %3131 = vmatpush.msra.mxu0 %v2968
    %3132 = vmatpush.msra.mxu0 %v2966
    %3133 = vmatpush.msra.mxu0 %v2964
    %3134 = vmatpush.msra.mxu0 %v2962
    %3135 = vmatpush.msra.mxu0 %v2960
    %3136 = vmatpush.msra.mxu0 %v2958
    %3137 = vmatpush.msra.mxu0 %v2956
    %3138 = vmatpush.msra.mxu0 %v2954
    %3139 = vmatpush.msra.mxu0 %v2952
    %3140 = vmatpush.msra.mxu0 %v2950
    %3141 = vmatpush.msra.mxu0 %v2948
    %3142 = vmatpush.msra.mxu0 %v2946
    %3143 = vmatpush.msra.mxu0 %v2944
    %3144 = vmatpush.msra.mxu0 %v2942
    %3145 = vmatpush.msra.mxu0 %v2940
    %3146 = vmatmul.f32.gmra.mxu0 %v2746
    %v3147 = vpop.f32.mrf.mxu0
    %v3148 = vadd.f32 %v3128, %v3147
    %3149 = vdwg.mxu0
    %3150 = vmatpush.msra.mxu0 %v3002
    %3151 = vmatpush.msra.mxu0 %v3000
    %3152 = vmatpush.msra.mxu0 %v2998
    %3153 = vmatpush.msra.mxu0 %v2996
    %3154 = vmatpush.msra.mxu0 %v2994
    %3155 = vmatpush.msra.mxu0 %v2992
    %3156 = vmatpush.msra.mxu0 %v2990
    %3157 = vmatpush.msra.mxu0 %v2988
    %3158 = vmatpush.msra.mxu0 %v2986
    %3159 = vmatpush.msra.mxu0 %v2984
    %3160 = vmatpush.msra.mxu0 %v2982
    %3161 = vmatpush.msra.mxu0 %v2980
    %3162 = vmatpush.msra.mxu0 %v2978
    %3163 = vmatpush.msra.mxu0 %v2976
    %3164 = vmatpush.msra.mxu0 %v2974
    %3165 = vmatpush.msra.mxu0 %v2972
    %3166 = vmatmul.f32.gmra.mxu0 %v2747
    %v3167 = vpop.f32.mrf.mxu0
    %v3168 = vadd.f32 %v3148, %v3167
    %3169 = vdwg.mxu0
    %3170 = vmatpush.msra.mxu0 %v2779
    %3171 = vmatpush.msra.mxu0 %v2777
    %3172 = vmatpush.msra.mxu0 %v2775
    %3173 = vmatpush.msra.mxu0 %v2773
    %3174 = vmatpush.msra.mxu0 %v2771
    %3175 = vmatpush.msra.mxu0 %v2769
    %3176 = vmatpush.msra.mxu0 %v2767
    %3177 = vmatpush.msra.mxu0 %v2765
    %3178 = vmatpush.msra.mxu0 %v2763
    %3179 = vmatpush.msra.mxu0 %v2761
    %3180 = vmatpush.msra.mxu0 %v2759
    %3181 = vmatpush.msra.mxu0 %v2757
    %3182 = vmatpush.msra.mxu0 %v2755
    %3183 = vmatpush.msra.mxu0 %v2753
    %3184 = vmatpush.msra.mxu0 %v2751
    %3185 = vmatpush.msra.mxu0 %v2749
    %3186 = vmatmul.f32.gmra.mxu0 %v2740
    %v3187 = vpop.f32.mrf.mxu0
    %v3188 = vadd.f32 %v3007, %v3187
    %3189 = vdwg.mxu0
    %3190 = vmatpush.msra.mxu0 %v2811
    %3191 = vmatpush.msra.mxu0 %v2809
    %3192 = vmatpush.msra.mxu0 %v2807
    %3193 = vmatpush.msra.mxu0 %v2805
    %3194 = vmatpush.msra.mxu0 %v2803
    %3195 = vmatpush.msra.mxu0 %v2801
    %3196 = vmatpush.msra.mxu0 %v2799
    %3197 = vmatpush.msra.mxu0 %v2797
    %3198 = vmatpush.msra.mxu0 %v2795
    %3199 = vmatpush.msra.mxu0 %v2793
    %3200 = vmatpush.msra.mxu0 %v2791
    %3201 = vmatpush.msra.mxu0 %v2789
    %3202 = vmatpush.msra.mxu0 %v2787
    %3203 = vmatpush.msra.mxu0 %v2785
    %3204 = vmatpush.msra.mxu0 %v2783
    %3205 = vmatpush.msra.mxu0 %v2781
    %3206 = vmatmul.f32.gmra.mxu0 %v2741
    %v3207 = vpop.f32.mrf.mxu0
    %v3208 = vadd.f32 %v3188, %v3207
    %3209 = vdwg.mxu0
    %3210 = vmatpush.msra.mxu0 %v2843
    %3211 = vmatpush.msra.mxu0 %v2841
    %3212 = vmatpush.msra.mxu0 %v2839
    %3213 = vmatpush.msra.mxu0 %v2837
    %3214 = vmatpush.msra.mxu0 %v2835
    %3215 = vmatpush.msra.mxu0 %v2833
    %3216 = vmatpush.msra.mxu0 %v2831
    %3217 = vmatpush.msra.mxu0 %v2829
    %3218 = vmatpush.msra.mxu0 %v2827
    %3219 = vmatpush.msra.mxu0 %v2825
    %3220 = vmatpush.msra.mxu0 %v2823
    %3221 = vmatpush.msra.mxu0 %v2821
    %3222 = vmatpush.msra.mxu0 %v2819
    %3223 = vmatpush.msra.mxu0 %v2817
    %3224 = vmatpush.msra.mxu0 %v2815
    %3225 = vmatpush.msra.mxu0 %v2813
    %3226 = vmatmul.f32.gmra.mxu0 %v2742
    %v3227 = vpop.f32.mrf.mxu0
    %v3228 = vadd.f32 %v3208, %v3227
    %3229 = vdwg.mxu0
    %3230 = vmatpush.msra.mxu0 %v2875
    %3231 = vmatpush.msra.mxu0 %v2873
    %3232 = vmatpush.msra.mxu0 %v2871
    %3233 = vmatpush.msra.mxu0 %v2869
    %3234 = vmatpush.msra.mxu0 %v2867
    %3235 = vmatpush.msra.mxu0 %v2865
    %3236 = vmatpush.msra.mxu0 %v2863
    %3237 = vmatpush.msra.mxu0 %v2861
    %3238 = vmatpush.msra.mxu0 %v2859
    %3239 = vmatpush.msra.mxu0 %v2857
    %3240 = vmatpush.msra.mxu0 %v2855
    %3241 = vmatpush.msra.mxu0 %v2853
    %3242 = vmatpush.msra.mxu0 %v2851
    %3243 = vmatpush.msra.mxu0 %v2849
    %3244 = vmatpush.msra.mxu0 %v2847
    %3245 = vmatpush.msra.mxu0 %v2845
    %3246 = vmatmul.f32.gmra.mxu0 %v2743
    %v3247 = vpop.f32.mrf.mxu0
    %v3248 = vadd.f32 %v3228, %v3247
    %3249 = vdwg.mxu0
    %3250 = vmatpush.msra.mxu0 %v2907
    %3251 = vmatpush.msra.mxu0 %v2905
    %3252 = vmatpush.msra.mxu0 %v2903
    %3253 = vmatpush.msra.mxu0 %v2901
    %3254 = vmatpush.msra.mxu0 %v2899
    %3255 = vmatpush.msra.mxu0 %v2897
    %3256 = vmatpush.msra.mxu0 %v2895
    %3257 = vmatpush.msra.mxu0 %v2893
    %3258 = vmatpush.msra.mxu0 %v2891
    %3259 = vmatpush.msra.mxu0 %v2889
    %3260 = vmatpush.msra.mxu0 %v2887
    %3261 = vmatpush.msra.mxu0 %v2885
    %3262 = vmatpush.msra.mxu0 %v2883
    %3263 = vmatpush.msra.mxu0 %v2881
    %3264 = vmatpush.msra.mxu0 %v2879
    %3265 = vmatpush.msra.mxu0 %v2877
    %3266 = vmatmul.f32.gmra.mxu0 %v2744
    %v3267 = vpop.f32.mrf.mxu0
    %v3268 = vadd.f32 %v3248, %v3267
    %3269 = vdwg.mxu0
    %3270 = vmatpush.msra.mxu0 %v2939
    %3271 = vmatpush.msra.mxu0 %v2937
    %3272 = vmatpush.msra.mxu0 %v2935
    %3273 = vmatpush.msra.mxu0 %v2933
    %3274 = vmatpush.msra.mxu0 %v2931
    %3275 = vmatpush.msra.mxu0 %v2929
    %3276 = vmatpush.msra.mxu0 %v2927
    %3277 = vmatpush.msra.mxu0 %v2925
    %3278 = vmatpush.msra.mxu0 %v2923
    %3279 = vmatpush.msra.mxu0 %v2921
    %3280 = vmatpush.msra.mxu0 %v2919
    %3281 = vmatpush.msra.mxu0 %v2917
    %3282 = vmatpush.msra.mxu0 %v2915
    %3283 = vmatpush.msra.mxu0 %v2913
    %3284 = vmatpush.msra.mxu0 %v2911
    %3285 = vmatpush.msra.mxu0 %v2909
    %3286 = vmatmul.f32.gmra.mxu0 %v2745
    %v3287 = vpop.f32.mrf.mxu0
    %v3288 = vadd.f32 %v3268, %v3287
    %3289 = vdwg.mxu0
    %3290 = vmatpush.msra.mxu0 %v2971
    %3291 = vmatpush.msra.mxu0 %v2969
    %3292 = vmatpush.msra.mxu0 %v2967
    %3293 = vmatpush.msra.mxu0 %v2965
    %3294 = vmatpush.msra.mxu0 %v2963
    %3295 = vmatpush.msra.mxu0 %v2961
    %3296 = vmatpush.msra.mxu0 %v2959
    %3297 = vmatpush.msra.mxu0 %v2957
    %3298 = vmatpush.msra.mxu0 %v2955
    %3299 = vmatpush.msra.mxu0 %v2953
    %3300 = vmatpush.msra.mxu0 %v2951
    %3301 = vmatpush.msra.mxu0 %v2949
    %3302 = vmatpush.msra.mxu0 %v2947
    %3303 = vmatpush.msra.mxu0 %v2945
    %3304 = vmatpush.msra.mxu0 %v2943
    %3305 = vmatpush.msra.mxu0 %v2941
    %3306 = vmatmul.f32.gmra.mxu0 %v2746
    %v3307 = vpop.f32.mrf.mxu0
    %v3308 = vadd.f32 %v3288, %v3307
    %3309 = vdwg.mxu0
    %3310 = vmatpush.msra.mxu0 %v3003
    %3311 = vmatpush.msra.mxu0 %v3001
    %3312 = vmatpush.msra.mxu0 %v2999
    %3313 = vmatpush.msra.mxu0 %v2997
    %3314 = vmatpush.msra.mxu0 %v2995
    %3315 = vmatpush.msra.mxu0 %v2993
    %3316 = vmatpush.msra.mxu0 %v2991
    %3317 = vmatpush.msra.mxu0 %v2989
    %3318 = vmatpush.msra.mxu0 %v2987
    %3319 = vmatpush.msra.mxu0 %v2985
    %3320 = vmatpush.msra.mxu0 %v2983
    %3321 = vmatpush.msra.mxu0 %v2981
    %3322 = vmatpush.msra.mxu0 %v2979
    %3323 = vmatpush.msra.mxu0 %v2977
    %3324 = vmatpush.msra.mxu0 %v2975
    %3325 = vmatpush.msra.mxu0 %v2973
    %3326 = vmatmul.f32.gmra.mxu0 %v2747
    %v3327 = vpop.f32.mrf.mxu0
    %v3328 = vadd.f32 %v3308, %v3327
    %3329 = vdwg.mxu0
    %vm3330 = vcmp.ge.f32.partialorder %v3168, 0.0
    %vm3331 = vcmp.ge.f32.partialorder %v3328, 0.0
    %v3332 = vmul.f32 %v3168, 0.2
    %v3333 = vmul.f32 %v3328, 0.2
    %v3334 = vsel %vm3330, %v3168, %v3332
    %v3335 = vsel %vm3331, %v3328, %v3333
    %v3336 = vld [vmem:[%s5] sm:$0xff]
    %v3337 = vld [vmem:[%s5 + $0x8] sm:$0xff]
    %v3338 = vld [vmem:[%s5 + $0x10] sm:$0xff]
    %v3339 = vld [vmem:[%s5 + $0x18] sm:$0xff]
    %v3340 = vld [vmem:[%s5 + $0x20] sm:$0xff]
    %v3341 = vld [vmem:[%s5 + $0x28] sm:$0xff]
    %v3342 = vld [vmem:[%s5 + $0x30] sm:$0xff]
    %v3343 = vld [vmem:[%s5 + $0x38] sm:$0xff]
    %v3344 = vld [vmem:[%s5 + $0x40] sm:$0xff]
    %v3345 = vld [vmem:[%s5 + $0x48] sm:$0xff]
    %v3346 = vld [vmem:[%s5 + $0x50] sm:$0xff]
    %v3347 = vld [vmem:[%s5 + $0x58] sm:$0xff]
    %v3348 = vld [vmem:[%s5 + $0x60] sm:$0xff]
    %v3349 = vld [vmem:[%s5 + $0x68] sm:$0xff]
    %v3350 = vld [vmem:[%s5 + $0x70] sm:$0xff]
    %v3351 = vld [vmem:[%s5 + $0x78] sm:$0xff]
    %v3352 = vld [vmem:[%s5 + $0x80] sm:$0xff]
    %v3353 = vld [vmem:[%s5 + $0x88] sm:$0xff]
    %v3354 = vld [vmem:[%s5 + $0x90] sm:$0xff]
    %v3355 = vld [vmem:[%s5 + $0x98] sm:$0xff]
    %v3356 = vld [vmem:[%s5 + $0xa0] sm:$0xff]
    %v3357 = vld [vmem:[%s5 + $0xa8] sm:$0xff]
    %v3358 = vld [vmem:[%s5 + $0xb0] sm:$0xff]
    %v3359 = vld [vmem:[%s5 + $0xb8] sm:$0xff]
    %v3360 = vld [vmem:[%s5 + $0xc0] sm:$0xff]
    %v3361 = vld [vmem:[%s5 + $0xc8] sm:$0xff]
    %v3362 = vld [vmem:[%s5 + $0xd0] sm:$0xff]
    %v3363 = vld [vmem:[%s5 + $0xd8] sm:$0xff]
    %v3364 = vld [vmem:[%s5 + $0xe0] sm:$0xff]
    %v3365 = vld [vmem:[%s5 + $0xe8] sm:$0xff]
    %v3366 = vld [vmem:[%s5 + $0xf0] sm:$0xff]
    %v3367 = vld [vmem:[%s5 + $0xf8] sm:$0xff]
    %v3368 = vld [vmem:[#allocation10] sm:$0x1]
    %v3370 = vperm.slane %v3368, 0
    %3372 = vmatpush.msra.mxu0 %v3351
    %3373 = vmatpush.msra.mxu0 %v3350
    %3374 = vmatpush.msra.mxu0 %v3349
    %3375 = vmatpush.msra.mxu0 %v3348
    %3376 = vmatpush.msra.mxu0 %v3347
    %3377 = vmatpush.msra.mxu0 %v3346
    %3378 = vmatpush.msra.mxu0 %v3345
    %3379 = vmatpush.msra.mxu0 %v3344
    %3380 = vmatpush.msra.mxu0 %v3343
    %3381 = vmatpush.msra.mxu0 %v3342
    %3382 = vmatpush.msra.mxu0 %v3341
    %3383 = vmatpush.msra.mxu0 %v3340
    %3384 = vmatpush.msra.mxu0 %v3339
    %3385 = vmatpush.msra.mxu0 %v3338
    %3386 = vmatpush.msra.mxu0 %v3337
    %3387 = vmatpush.msra.mxu0 %v3336
    %3388 = vmatmul.f32.gmra.mxu0 %v3334
    %v3389 = vpop.f32.mrf.mxu0
    %v3390 = vadd.f32 %v3370, %v3389
    %3391 = vdwg.mxu0
    %3392 = vmatpush.msra.mxu0 %v3367
    %3393 = vmatpush.msra.mxu0 %v3366
    %3394 = vmatpush.msra.mxu0 %v3365
    %3395 = vmatpush.msra.mxu0 %v3364
    %3396 = vmatpush.msra.mxu0 %v3363
    %3397 = vmatpush.msra.mxu0 %v3362
    %3398 = vmatpush.msra.mxu0 %v3361
    %3399 = vmatpush.msra.mxu0 %v3360
    %3400 = vmatpush.msra.mxu0 %v3359
    %3401 = vmatpush.msra.mxu0 %v3358
    %3402 = vmatpush.msra.mxu0 %v3357
    %3403 = vmatpush.msra.mxu0 %v3356
    %3404 = vmatpush.msra.mxu0 %v3355
    %3405 = vmatpush.msra.mxu0 %v3354
    %3406 = vmatpush.msra.mxu0 %v3353
    %3407 = vmatpush.msra.mxu0 %v3352
    %3408 = vmatmul.f32.gmra.mxu0 %v3335
    %v3409 = vpop.f32.mrf.mxu0
    %v3410 = vadd.f32 %v3390, %v3409
    %3411 = vdwg.mxu0
    %vm3412 = vcmp.ge.f32.partialorder %v3410, 0.0
    %v3413 = vmul.f32 %v3410, 0.2
    %v3414 = vsel %vm3412, %v3410, %v3413
    %v3415 = vld [vmem:[%s7] sm:$0xff]
    %v3416 = vld [vmem:[%s7 + $0x8] sm:$0xff]
    %v3417 = vld [vmem:[%s7 + $0x10] sm:$0xff]
    %v3418 = vld [vmem:[%s7 + $0x18] sm:$0xff]
    %v3419 = vld [vmem:[%s7 + $0x20] sm:$0xff]
    %v3420 = vld [vmem:[%s7 + $0x28] sm:$0xff]
    %v3421 = vld [vmem:[%s7 + $0x30] sm:$0xff]
    %v3422 = vld [vmem:[%s7 + $0x38] sm:$0xff]
    %vm3423 = vcmask 523264
    %v3425 = vsel %vm3423, %v3414, 0
    %3427 = vmatpush.msra.mxu0 0.0
    %3428 = vmatpush.msra.mxu0 0.0
    %3429 = vmatpush.msra.mxu0 0.0
    %3430 = vmatpush.msra.mxu0 0.0
    %3431 = vmatpush.msra.mxu0 0.0
    %3432 = vmatpush.msra.mxu0 0.0
    %3433 = vmatpush.msra.mxu0 0.0
    %3434 = vmatpush.msra.mxu0 0.0
    %3435 = vmatpush.msra.mxu0 %v3422
    %3436 = vmatpush.msra.mxu0 %v3421
    %3437 = vmatpush.msra.mxu0 %v3420
    %3438 = vmatpush.msra.mxu0 %v3419
    %3439 = vmatpush.msra.mxu0 %v3418
    %3440 = vmatpush.msra.mxu0 %v3417
    %3441 = vmatpush.msra.mxu0 %v3416
    %3442 = vmatpush.msra.mxu0 %v3415
    %3443 = vmatmul.f32.gmra.mxu0 %v3425
    %v3444 = vpop.f32.mrf.mxu0
    %v3445 = vadd.f32 0.0, %v3444
    %3446 = vdwg.mxu0
    %v3447 = vsub.f32 0.0, %v3445
    %v3448 = vmul.f32 %v3447, 1.442695
    %v3449 = vpow.pop %v3448
    %v3450 = vadd.f32 %v3449, 1.0
    %v3451 = vrcp.pop %v3450
    %v3452 = vmul.f32 %v3450, %v3451
    %v3453 = vsub.f32 1.0, %v3452
    %v3454 = vmul.f32 %v3451, %v3453
    %v3455 = vadd.f32 %v3451, %v3454
    %vm3456 = vweird.f32 %v3450
    %vm3457 = vweird.f32 %v3451
    %vm3458 = vmor %vm3456, %vm3457
    %v3459 = vsel %vm3458, %v3451, %v3455
    %v3460 = vand.u32 2147483647, %v3450
    %vm3461 = vcmp.eq.f32.partialorder %v3460, 8.507059e+37
    %v3462 = vand.u32 %v3450, 2147483648
    %v3463 = vor.u32 1.1754944e-38, %v3462
    %v3464 = vsel %vm3461, %v3463, %v3459
    %vm3465 = vcmask 1024
    %3466 = vst.msk [vmem:[%s8] sm:$0x3] %vm3465, %v3464
    // Predicated region
    $region58: #{discr_forward.1} parent=1 // pred_check
      _
    $region59: #{discr_forward.1} parent=1 // pred_check_branch
      %3468 = sbr.rel (0) target = $region61
    $region60: #{discr_forward.1} parent=1 // pred_region
      _
    $region61: #{discr_forward.1} parent=1 // pred_fallthru
      _
    // Predicated region
    $region62: #{discr_forward.1} parent=1 // pred_check
      _
    $region63: #{discr_forward.1} parent=1 // pred_check_branch
      %3470 = sbr.rel (0) target = $region65
    $region64: #{discr_forward.1} parent=1 // pred_region
      _
    $region65: #{discr_forward.1} parent=1 // pred_fallthru
      _
    %3471 = vsyncpa [#allocation3], 1
    %3472 = vsyncpa [#allocation5], 1
    %3473 = vsyncpa [#allocation8], 1
    %3474 = vsyncpa [#allocation11], 1

</llo_original>
